<compile_context>
chip_gen: v7x
topology: tpu7x:2x2x1
jax: 0.10.0
libtpu: 0.0.40
codegen_flags: <defaults>
</compile_context>

<pallas_src>
import functools
import math

import jax
import jax.numpy as jnp
from jax.experimental import pallas as pl
from jax.experimental.pallas import tpu as pltpu


_LN_EPS = 1e-5
_NEG_INF = -1e30


def _bf16(x):
    return x.astype(jnp.bfloat16)


def _layer_norm(x, gamma, beta, eps=_LN_EPS):
    mu = jnp.mean(x, axis=-1, keepdims=True)
    var = jnp.mean(jnp.square(x - mu), axis=-1, keepdims=True)
    return (x - mu) * jax.lax.rsqrt(var + eps) * gamma + beta


def _gelu_new(x):
    # GPT-2 "gelu_new" (tanh approximation); tanh runs on the EUP slot.
    c = 0.7978845608028654  # sqrt(2/pi)
    return 0.5 * x * (1.0 + jnp.tanh(c * (x + 0.044715 * x * x * x)))


def _vmem_limit_bytes():
    # Re-derive the scoped-VMEM budget from the part we are actually running
    # on (v7x: 64 MiB/TC physical, v5e/v6e: 128 MiB).
    try:
        cap = pltpu.get_tpu_info().vmem_capacity_bytes
    except Exception:
        cap = 128 * 1024 * 1024
    return int(min(cap * 3 // 4, 96 * 1024 * 1024))


# ----------------------------------------------------------------------------
# Pallas kernels
# ----------------------------------------------------------------------------
def _patch_embed_kernel(p_ref, w_ref, b_ref, pos_ref, o_ref):
    """(patchified pixels) @ W_patch + conv bias + positional embedding."""
    acc = jnp.dot(_bf16(p_ref[...]), w_ref[...],
                  preferred_element_type=jnp.float32)
    o_ref[...] = (acc + b_ref[...] + pos_ref[...]).astype(o_ref.dtype)


def _gpt2_stack_kernel(x_ref, bias_ref,
                       ln1g, ln1b, wqkv, bqkv, wo, bo,
                       ln2g, ln2b, wfc, bfc, wpr, bpr,
                       lnfg, lnfb,
                       o_ref,
                       h_scr, q_scr, k_scr, v_scr,
                       *, n_head):
    """One GPT-2 block for one batch element; grid = (batch, layer).

    The residual stream stays resident in `h_scr` (VMEM) across the whole
    layer axis; the final model LayerNorm is applied and the output written
    only at the last layer.
    """
    l = pl.program_id(1)
    n_layers = pl.num_programs(1)

    @pl.when(l == 0)
    def _():
        h_scr[...] = x_ref[0]          # load initial embeddings into residual

    x = h_scr[...]                                     # (S, D) f32 residual
    S, D = x.shape
    hd = D // n_head
    scale = 1.0 / math.sqrt(hd)

    # ---- causal multi-head self-attention ----------------------------------
    h = _bf16(_layer_norm(x, ln1g[0], ln1b[0]))        # (S, D) bf16

    # One wide, lane-dense QKV matmul; f32 accumulate on the MXU.
    qkv = jnp.dot(h, wqkv[0], preferred_element_type=jnp.float32) + bqkv[0]

    # Split into head-major (n_head, S, hd) bf16 operands.  Static lane
    # slices written to VMEM scratch -> bounded live ranges for the head loop.
    for hi in range(n_head):
        lo = hi * hd
        q_scr[hi] = _bf16(qkv[:, lo:lo + hd] * scale)
        k_scr[hi] = _bf16(qkv[:, D + lo:D + lo + hd])
        v_scr[hi] = _bf16(qkv[:, 2 * D + lo:2 * D + lo + hd])

    q = q_scr[...]
    k = k_scr[...]
    v = v_scr[...]

    s = jnp.einsum('hqd,hkd->hqk', q, k,
                   preferred_element_type=jnp.float32)          # (nh, S, S)
    s = s + bias_ref[...]                        # precomputed additive causal mask
    m = jnp.max(s, axis=-1, keepdims=True)
    e = jnp.exp(s - m)
    p = e * pl.reciprocal(jnp.sum(e, axis=-1, keepdims=True), approx=True)
    ctx = jnp.einsum('hqk,hkd->hqd', _bf16(p), v,
                     preferred_element_type=jnp.float32)        # (nh, S, hd)

    # Concatenate heads on lanes -> ONE (S, D) @ (D, D) output projection.
    ctx2 = jnp.concatenate([ctx[hi] for hi in range(n_head)], axis=-1)
    attn = jnp.dot(_bf16(ctx2), wo[0],
                   preferred_element_type=jnp.float32) + bo[0]
    x = x + attn                                                # residual add

    # ---- MLP ----------------------------------------------------------------
    h2 = _bf16(_layer_norm(x, ln2g[0], ln2b[0]))
    f = jnp.dot(h2, wfc[0], preferred_element_type=jnp.float32) + bfc[0]
    f = _gelu_new(f)
    x = x + jnp.dot(_bf16(f), wpr[0],
                    preferred_element_type=jnp.float32) + bpr[0]

    h_scr[...] = x

    @pl.when(l == n_layers - 1)
    def _():
        o_ref[0] = _layer_norm(x, lnfg[...], lnfb[...]).astype(o_ref.dtype)


# ----------------------------------------------------------------------------
# pallas_call wrappers
# ----------------------------------------------------------------------------
def patch_embed(pixel_values, patch_params, patch_size, pos_emb):
    """ViTPatchEmbeddings: stride==kernel conv -> patchify + fused matmul."""
    N, C, H, W = pixel_values.shape
    ph, pw = patch_size
    Hp, Wp = H // ph, W // pw
    P = Hp * Wp
    K = C * ph * pw
    D = patch_params["w"].shape[1]
    assert P % 8 == 0, "patches per image must be a multiple of 8"

    # TODO(synk): the patchify transpose is a pure layout op left to XLA; for
    # large OCR images it should be folded into the kernel's index_map.
    x = pixel_values.reshape(N, C, Hp, ph, Wp, pw)
    x = x.transpose(0, 2, 4, 1, 3, 5)                  # N, Hp, Wp, C, ph, pw
    patches = x.reshape(N * P, K)

    pos_patch = pos_emb[:P]                            # (P, D) f32

    def rep(shape):
        zeros = (0,) * len(shape)
        return pl.BlockSpec(shape, lambda *_: zeros)

    out = pl.pallas_call(
        _patch_embed_kernel,
        out_shape=jax.ShapeDtypeStruct((N * P, D), jnp.float32),
        grid=(N,),
        in_specs=[
            pl.BlockSpec((P, K), lambda i: (i, 0)),
            rep((K, D)),
            rep((1, D)),
            rep((P, D)),
        ],
        out_specs=pl.BlockSpec((P, D), lambda i: (i, 0)),
        compiler_params=pltpu.CompilerParams(
            dimension_semantics=("parallel",),
            vmem_limit_bytes=_vmem_limit_bytes()),
    )(patches, patch_params["w"], patch_params["b"], pos_patch)
    return out.reshape(N, P, D)


def gpt2_stack(x, blocks, lnf_g, lnf_b, *, n_head):
    """All GPT-2 blocks + final LayerNorm in ONE pallas_call, grid (B, L)."""
    B, S, D = x.shape
    L = blocks["w_qkv"].shape[0]
    assert D % n_head == 0
    hd = D // n_head

    rows = jnp.arange(S, dtype=jnp.int32)[:, None]
    cols = jnp.arange(S, dtype=jnp.int32)[None, :]
    causal_bias = jnp.where(cols <= rows, 0.0, _NEG_INF).astype(jnp.float32)

    layer_names = ("ln1_g", "ln1_b", "w_qkv", "b_qkv", "w_o", "b_o",
                   "ln2_g", "ln2_b", "w_fc", "b_fc", "w_pr", "b_pr")
    layer_args = [blocks[n] for n in layer_names]

    def const_spec(shape):
        zeros = (0,) * len(shape)
        return pl.BlockSpec(shape, lambda *_: zeros)

    in_specs = [pl.BlockSpec((1, S, D), lambda b, l: (b, 0, 0)),   # embeddings
                const_spec((S, S))]                                # causal bias
    # Per-layer stacked weights: a new block every layer step, so the
    # pipeline's double buffer prefetches layer l+1 weights under layer l.
    in_specs += [pl.BlockSpec((1,) + a.shape[1:], lambda b, l: (l, 0, 0))
                 for a in layer_args]
    in_specs += [const_spec(lnf_g.shape), const_spec(lnf_b.shape)]

    kernel = functools.partial(_gpt2_stack_kernel, n_head=n_head)
    return pl.pallas_call(
        kernel,
        out_shape=jax.ShapeDtypeStruct((B, S, D), jnp.float32),
        grid=(B, L),
        in_specs=in_specs,
        out_specs=pl.BlockSpec((1, S, D), lambda b, l: (b, 0, 0)),
        scratch_shapes=[
            pltpu.VMEM((S, D), jnp.float32),            # residual stream
            pltpu.VMEM((n_head, S, hd), jnp.bfloat16),  # Q (head-major)
            pltpu.VMEM((n_head, S, hd), jnp.bfloat16),  # K
            pltpu.VMEM((n_head, S, hd), jnp.bfloat16),  # V
        ],
        compiler_params=pltpu.CompilerParams(
            dimension_semantics=("parallel", "arbitrary"),
            vmem_limit_bytes=_vmem_limit_bytes()),
    )(x, causal_bias, *layer_args, lnf_g, lnf_b)


# ----------------------------------------------------------------------------
# Parameter init (deterministic, synthetic) & forward pass
# ----------------------------------------------------------------------------
def init_dtrocr_params(key, config):
    D = config["hidden_size"]
    V = config["vocab_size"]
    maxpos = config["max_position_embeddings"]
    C = config["num_channels"]
    ph, pw = config["patch_size"]
    L = config["num_hidden_layers"]

    k_wte, k_wpe, k_patch, k_qkv, k_o, k_fc, k_pr = jax.random.split(key, 7)

    def dense(k, shape, scale=0.02):
        # Weights streamed to the MXU in bf16 (halves HBM weight traffic);
        # accumulation stays f32 in-kernel.
        return (scale * jax.random.normal(k, shape, jnp.float32)).astype(jnp.bfloat16)

    return {
        "wte": 0.02 * jax.random.normal(k_wte, (V, D), jnp.float32),
        "wpe": 0.01 * jax.random.normal(k_wpe, (maxpos, D), jnp.float32),
        "patch": {
            "w": dense(k_patch, (C * ph * pw, D)),
            "b": jnp.zeros((1, D), jnp.float32),
        },
        "lnf_g": jnp.ones((1, D), jnp.float32),
        "lnf_b": jnp.zeros((1, D), jnp.float32),
        # Per-layer weights stacked on a leading L axis (streamed by BlockSpec).
        "blocks": {
            "ln1_g": jnp.ones((L, 1, D), jnp.float32),
            "ln1_b": jnp.zeros((L, 1, D), jnp.float32),
            "w_qkv": dense(k_qkv, (L, D, 3 * D)),
            "b_qkv": jnp.zeros((L, 1, 3 * D), jnp.float32),
            "w_o": dense(k_o, (L, D, D)),
            "b_o": jnp.zeros((L, 1, D), jnp.float32),
            "ln2_g": jnp.ones((L, 1, D), jnp.float32),
            "ln2_b": jnp.zeros((L, 1, D), jnp.float32),
            "w_fc": dense(k_fc, (L, D, 4 * D)),
            "b_fc": jnp.zeros((L, 1, 4 * D), jnp.float32),
            "w_pr": dense(k_pr, (L, 4 * D, D)),
            "b_pr": jnp.zeros((L, 1, D), jnp.float32),
        },
    }


def dtrocr_forward(params, config, pixel_values, input_ids):
    n_head = config["num_attention_heads"]
    patch_size = config["patch_size"]
    pos_emb = params["wpe"]                                    # (max_pos, D)

    # patch embeddings (+ conv bias + positional embedding fused in kernel)
    patch_emb = patch_embed(pixel_values, params["patch"], patch_size, pos_emb)
    _, P, D = patch_emb.shape

    # token embeddings (+ positional embedding for token positions [P, P+T))
    B, T = input_ids.shape
    # TODO(synk): the token-embedding gather is data-dependent; left to XLA.
    tok = jnp.take(params["wte"], input_ids, axis=0)           # (B, T, D)
    tok = tok + pos_emb[P:P + T][None, :, :]

    hidden = jnp.concatenate([patch_emb, tok], axis=1)         # (B, P+T, D)
    # TODO(synk): dropout (attn_pdrop / resid_pdrop) is eval-mode identity;
    # KV-cache / attention_mask branches are not implemented.

    return gpt2_stack(hidden, params["blocks"], params["lnf_g"],
                      params["lnf_b"], n_head=n_head)          # hidden_states


if __name__ == "__main__":
    key = jax.random.PRNGKey(0)
    k_pix, k_ids, k_par = jax.random.split(key, 3)

    config = dict(
        vocab_size=100,
        hidden_size=32,
        num_hidden_layers=2,
        num_attention_heads=4,
        max_position_embeddings=64,
        num_channels=3,
        patch_size=(4, 4),
    )

    # pixel_values: (B, C, H, W); input_ids: (B, T)
    pixel_values = jax.random.normal(k_pix, (2, 3, 16, 16), jnp.float32)
    input_ids = jax.random.randint(k_ids, (2, 8), 0, config["vocab_size"])

    params = init_dtrocr_params(k_par, config)
    fwd = jax.jit(functools.partial(dtrocr_forward, params, config))
    hidden_states = fwd(pixel_values, input_ids)
    jax.block_until_ready(hidden_states)

    num_patches = (16 // 4) * (16 // 4)                        # 16
    expected = (2, num_patches + 8, config["hidden_size"])
    assert hidden_states.shape == expected, hidden_states.shape
    assert bool(jnp.all(jnp.isfinite(hidden_states)))
    print("KERNEL_OK")
</pallas_src>

<mosaic_0001>
module attributes {stable_mosaic.version = 11 : i64} {
  func.func @_patch_embed_kernel(%arg0: i32, %arg1: memref<16x48xf32, #tpu.memory_space<vmem>>, %arg2: memref<48x32xbf16, #tpu.memory_space<vmem>>, %arg3: memref<1x32xf32, #tpu.memory_space<vmem>>, %arg4: memref<16x32xf32, #tpu.memory_space<vmem>>, %arg5: memref<16x32xf32, #tpu.memory_space<vmem>>) attributes {dimension_semantics = [#tpu.dimension_semantics<parallel>], iteration_bounds = array<i64: 2>, scalar_prefetch = 0 : i64, scratch_operands = 0 : i64, tpu.core_type = #tpu.core_type<tc>, window_params = [{transform_indices = @transform_0, window_bounds = array<i64: 16, 48>}, {pipeline_mode = #tpu.pipeline_mode<synchronous>, transform_indices = @transform_1, window_bounds = array<i64: 48, 32>}, {pipeline_mode = #tpu.pipeline_mode<synchronous>, transform_indices = @transform_2, window_bounds = array<i64: 1, 32>}, {pipeline_mode = #tpu.pipeline_mode<synchronous>, transform_indices = @transform_3, window_bounds = array<i64: 16, 32>}, {transform_indices = @transform_4, window_bounds = array<i64: 16, 32>}]} {
    %c0 = arith.constant 0 : index
    %c0_0 = arith.constant 0 : index
    %0 = vector.load %arg1[%c0, %c0_0] : memref<16x48xf32, #tpu.memory_space<vmem>>, vector<16x48xf32>
    %1 = arith.truncf %0 : vector<16x48xf32> to vector<16x48xbf16>
    %c0_1 = arith.constant 0 : index
    %c0_2 = arith.constant 0 : index
    %2 = vector.load %arg2[%c0_1, %c0_2] : memref<48x32xbf16, #tpu.memory_space<vmem>>, vector<48x32xbf16>
    %cst = arith.constant dense<0.000000e+00> : vector<16x32xf32>
    %3 = tpu.matmul %1, %2, %cst {dimension_numbers = #tpu.dot_dimension_numbers<[1], [0], [0], [1], [0, 0, 1, 1], [], []>} : vector<16x48xbf16>, vector<48x32xbf16>, vector<16x32xf32> -> vector<16x32xf32>
    %c0_3 = arith.constant 0 : index
    %c0_4 = arith.constant 0 : index
    %4 = vector.load %arg3[%c0_3, %c0_4] : memref<1x32xf32, #tpu.memory_space<vmem>>, vector<1x32xf32>
    %5 = vector.broadcast %4 : vector<1x32xf32> to vector<16x32xf32>
    %6 = arith.addf %3, %5 : vector<16x32xf32>
    %c0_5 = arith.constant 0 : index
    %c0_6 = arith.constant 0 : index
    %7 = vector.load %arg4[%c0_5, %c0_6] : memref<16x32xf32, #tpu.memory_space<vmem>>, vector<16x32xf32>
    %8 = arith.addf %6, %7 : vector<16x32xf32>
    %c0_7 = arith.constant 0 : index
    %c0_8 = arith.constant 0 : index
    %9 = vector.load %arg5[%c0_7, %c0_8] : memref<16x32xf32, #tpu.memory_space<vmem>>, vector<16x32xf32>
    tpu.vector_store %arg5[%c0_7, %c0_8], %8 {strides = array<i32>} : memref<16x32xf32, #tpu.memory_space<vmem>>, vector<16x32xf32>,
    return
  }
  func.func @transform_0(%arg0: i32) -> (i32, i32) {
    %c0_i32 = arith.constant 0 : i32
    %c0_i32_0 = arith.constant 0 : i32
    return %arg0, %c0_i32 : i32, i32
  }
  func.func @transform_1(%arg0: i32) -> (i32, i32) {
    %c0_i32 = arith.constant 0 : i32
    %c0_i32_0 = arith.constant 0 : i32
    %c0_i32_1 = arith.constant 0 : i32
    return %c0_i32, %c0_i32_0 : i32, i32
  }
  func.func @transform_2(%arg0: i32) -> (i32, i32) {
    %c0_i32 = arith.constant 0 : i32
    %c0_i32_0 = arith.constant 0 : i32
    %c0_i32_1 = arith.constant 0 : i32
    return %c0_i32, %c0_i32_0 : i32, i32
  }
  func.func @transform_3(%arg0: i32) -> (i32, i32) {
    %c0_i32 = arith.constant 0 : i32
    %c0_i32_0 = arith.constant 0 : i32
    %c0_i32_1 = arith.constant 0 : i32
    return %c0_i32, %c0_i32_0 : i32, i32
  }
  func.func @transform_4(%arg0: i32) -> (i32, i32) {
    %c0_i32 = arith.constant 0 : i32
    %c0_i32_0 = arith.constant 0 : i32
    return %arg0, %c0_i32 : i32, i32
  }
}

module attributes {stable_mosaic.version = 11 : i64} {
  func.func @_gpt2_stack_kernel(%arg0: i32, %arg1: i32, %arg2: memref<1x24x32xf32, #tpu.memory_space<vmem>>, %arg3: memref<24x24xf32, #tpu.memory_space<vmem>>, %arg4: memref<1x1x32xf32, #tpu.memory_space<vmem>>, %arg5: memref<1x1x32xf32, #tpu.memory_space<vmem>>, %arg6: memref<1x32x96xbf16, #tpu.memory_space<vmem>>, %arg7: memref<1x1x96xf32, #tpu.memory_space<vmem>>, %arg8: memref<1x32x32xbf16, #tpu.memory_space<vmem>>, %arg9: memref<1x1x32xf32, #tpu.memory_space<vmem>>, %arg10: memref<1x1x32xf32, #tpu.memory_space<vmem>>, %arg11: memref<1x1x32xf32, #tpu.memory_space<vmem>>, %arg12: memref<1x32x128xbf16, #tpu.memory_space<vmem>>, %arg13: memref<1x1x128xf32, #tpu.memory_space<vmem>>, %arg14: memref<1x128x32xbf16, #tpu.memory_space<vmem>>, %arg15: memref<1x1x32xf32, #tpu.memory_space<vmem>>, %arg16: memref<1x32xf32, #tpu.memory_space<vmem>>, %arg17: memref<1x32xf32, #tpu.memory_space<vmem>>, %arg18: memref<1x24x32xf32, #tpu.memory_space<vmem>>, %arg19: memref<24x32xf32, #tpu.memory_space<vmem>>, %arg20: memref<4x24x8xbf16, #tpu.memory_space<vmem>>, %arg21: memref<4x24x8xbf16, #tpu.memory_space<vmem>>, %arg22: memref<4x24x8xbf16, #tpu.memory_space<vmem>>) attributes {dimension_semantics = [#tpu.dimension_semantics<parallel>, #tpu.dimension_semantics<arbitrary>], iteration_bounds = array<i64: 2, 2>, scalar_prefetch = 0 : i64, scratch_operands = 4 : i64, tpu.core_type = #tpu.core_type<tc>, window_params = [{transform_indices = @transform_0, window_bounds = array<i64: 1, 24, 32>}, {pipeline_mode = #tpu.pipeline_mode<synchronous>, transform_indices = @transform_1, window_bounds = array<i64: 24, 24>}, {transform_indices = @transform_2, window_bounds = array<i64: 1, 1, 32>}, {transform_indices = @transform_3, window_bounds = array<i64: 1, 1, 32>}, {transform_indices = @transform_4, window_bounds = array<i64: 1, 32, 96>}, {transform_indices = @transform_5, window_bounds = array<i64: 1, 1, 96>}, {transform_indices = @transform_6, window_bounds = array<i64: 1, 32, 32>}, {transform_indices = @transform_7, window_bounds = array<i64: 1, 1, 32>}, {transform_indices = @transform_8, window_bounds = array<i64: 1, 1, 32>}, {transform_indices = @transform_9, window_bounds = array<i64: 1, 1, 32>}, {transform_indices = @transform_10, window_bounds = array<i64: 1, 32, 128>}, {transform_indices = @transform_11, window_bounds = array<i64: 1, 1, 128>}, {transform_indices = @transform_12, window_bounds = array<i64: 1, 128, 32>}, {transform_indices = @transform_13, window_bounds = array<i64: 1, 1, 32>}, {pipeline_mode = #tpu.pipeline_mode<synchronous>, transform_indices = @transform_14, window_bounds = array<i64: 1, 32>}, {pipeline_mode = #tpu.pipeline_mode<synchronous>, transform_indices = @transform_15, window_bounds = array<i64: 1, 32>}, {transform_indices = @transform_16, window_bounds = array<i64: 1, 24, 32>}]} {
    %c0_i32 = arith.constant 0 : i32
    %0 = arith.cmpi eq, %arg1, %c0_i32 : i32
    %1 = arith.extui %0 : i1 to i32
    %c0_i32_0 = arith.constant 0 : i32
    %2 = arith.cmpi ne, %1, %c0_i32_0 : i32
    scf.if %2 {
      %c0_110 = arith.constant 0 : index
      %c0_111 = arith.constant 0 : index
      %c0_112 = arith.constant 0 : index
      %204 = vector.load %arg2[%c0_110, %c0_111, %c0_112] : memref<1x24x32xf32, #tpu.memory_space<vmem>>, vector<1x24x32xf32>
      %205 = vector.shape_cast %204 : vector<1x24x32xf32> to vector<24x32xf32>
      %c0_113 = arith.constant 0 : index
      %c0_114 = arith.constant 0 : index
      %206 = vector.load %arg19[%c0_113, %c0_114] : memref<24x32xf32, #tpu.memory_space<vmem>>, vector<24x32xf32>
      tpu.vector_store %arg19[%c0_113, %c0_114], %205 {strides = array<i32>} : memref<24x32xf32, #tpu.memory_space<vmem>>, vector<24x32xf32>,
    } else {
    }
    %c0 = arith.constant 0 : index
    %c0_1 = arith.constant 0 : index
    %3 = vector.load %arg19[%c0, %c0_1] : memref<24x32xf32, #tpu.memory_space<vmem>>, vector<24x32xf32>
    %c0_2 = arith.constant 0 : index
    %c0_3 = arith.constant 0 : index
    %c0_4 = arith.constant 0 : index
    %4 = vector.load %arg4[%c0_2, %c0_3, %c0_4] : memref<1x1x32xf32, #tpu.memory_space<vmem>>, vector<1x1x32xf32>
    %5 = vector.shape_cast %4 : vector<1x1x32xf32> to vector<1x32xf32>
    %c0_5 = arith.constant 0 : index
    %c0_6 = arith.constant 0 : index
    %c0_7 = arith.constant 0 : index
    %6 = vector.load %arg5[%c0_5, %c0_6, %c0_7] : memref<1x1x32xf32, #tpu.memory_space<vmem>>, vector<1x1x32xf32>
    %7 = vector.shape_cast %6 : vector<1x1x32xf32> to vector<1x32xf32>
    %cst = arith.constant dense<0.000000e+00> : vector<24xf32>
    %8 = vector.multi_reduction <add>, %3, %cst [1] : vector<24x32xf32> to vector<24xf32>
    %9 = vector.shape_cast %8 : vector<24xf32> to vector<24x1xf32>
    %cst_8 = arith.constant 3.200000e+01 : f32
    %10 = vector.broadcast %cst_8 : f32 to vector<24x1xf32>
    %11 = arith.divf %9, %10 : vector<24x1xf32>
    %12 = vector.broadcast %11 : vector<24x1xf32> to vector<24x32xf32>
    %13 = arith.subf %3, %12 : vector<24x32xf32>
    %14 = arith.mulf %13, %13 : vector<24x32xf32>
    %cst_9 = arith.constant dense<0.000000e+00> : vector<24xf32>
    %15 = vector.multi_reduction <add>, %14, %cst_9 [1] : vector<24x32xf32> to vector<24xf32>
    %16 = vector.shape_cast %15 : vector<24xf32> to vector<24x1xf32>
    %cst_10 = arith.constant 3.200000e+01 : f32
    %17 = vector.broadcast %cst_10 : f32 to vector<24x1xf32>
    %18 = arith.divf %16, %17 : vector<24x1xf32>
    %19 = vector.broadcast %11 : vector<24x1xf32> to vector<24x32xf32>
    %20 = arith.subf %3, %19 : vector<24x32xf32>
    %cst_11 = arith.constant 9.99999974E-6 : f32
    %21 = vector.broadcast %cst_11 : f32 to vector<24x1xf32>
    %22 = arith.addf %18, %21 : vector<24x1xf32>
    %23 = math.rsqrt %22 : vector<24x1xf32>
    %24 = vector.broadcast %23 : vector<24x1xf32> to vector<24x32xf32>
    %25 = arith.mulf %20, %24 : vector<24x32xf32>
    %26 = vector.broadcast %5 : vector<1x32xf32> to vector<24x32xf32>
    %27 = arith.mulf %25, %26 : vector<24x32xf32>
    %28 = vector.broadcast %7 : vector<1x32xf32> to vector<24x32xf32>
    %29 = arith.addf %27, %28 : vector<24x32xf32>
    %30 = arith.truncf %29 : vector<24x32xf32> to vector<24x32xbf16>
    %c0_12 = arith.constant 0 : index
    %c0_13 = arith.constant 0 : index
    %c0_14 = arith.constant 0 : index
    %31 = vector.load %arg6[%c0_12, %c0_13, %c0_14] : memref<1x32x96xbf16, #tpu.memory_space<vmem>>, vector<1x32x96xbf16>
    %32 = vector.shape_cast %31 : vector<1x32x96xbf16> to vector<32x96xbf16>
    %cst_15 = arith.constant dense<0.000000e+00> : vector<24x96xf32>
    %33 = tpu.matmul %30, %32, %cst_15 {dimension_numbers = #tpu.dot_dimension_numbers<[1], [0], [0], [1], [0, 0, 1, 1], [], []>} : vector<24x32xbf16>, vector<32x96xbf16>, vector<24x96xf32> -> vector<24x96xf32>
    %c0_16 = arith.constant 0 : index
    %c0_17 = arith.constant 0 : index
    %c0_18 = arith.constant 0 : index
    %34 = vector.load %arg7[%c0_16, %c0_17, %c0_18] : memref<1x1x96xf32, #tpu.memory_space<vmem>>, vector<1x1x96xf32>
    %35 = vector.shape_cast %34 : vector<1x1x96xf32> to vector<1x96xf32>
    %36 = vector.broadcast %35 : vector<1x96xf32> to vector<24x96xf32>
    %37 = arith.addf %33, %36 : vector<24x96xf32>
    %38 = vector.extract_strided_slice %37 {offsets = [0, 0], sizes = [24, 8], strides = [1, 1]} : vector<24x96xf32> to vector<24x8xf32>
    %cst_19 = arith.constant 0.353553385 : f32
    %39 = vector.broadcast %cst_19 : f32 to vector<24x8xf32>
    %40 = arith.mulf %38, %39 : vector<24x8xf32>
    %41 = arith.truncf %40 : vector<24x8xf32> to vector<24x8xbf16>
    %c0_20 = arith.constant 0 : index
    %c0_21 = arith.constant 0 : index
    %c0_22 = arith.constant 0 : index
    %42 = vector.load %arg20[%c0_20, %c0_21, %c0_22] : memref<4x24x8xbf16, #tpu.memory_space<vmem>>, vector<1x24x8xbf16>
    %43 = vector.shape_cast %42 : vector<1x24x8xbf16> to vector<24x8xbf16>
    %44 = vector.shape_cast %41 : vector<24x8xbf16> to vector<1x24x8xbf16>
    tpu.vector_store %arg20[%c0_20, %c0_21, %c0_22], %44 {strides = array<i32>} : memref<4x24x8xbf16, #tpu.memory_space<vmem>>, vector<1x24x8xbf16>,
    %45 = vector.extract_strided_slice %37 {offsets = [0, 32], sizes = [24, 8], strides = [1, 1]} : vector<24x96xf32> to vector<24x8xf32>
    %46 = arith.truncf %45 : vector<24x8xf32> to vector<24x8xbf16>
    %c0_23 = arith.constant 0 : index
    %c0_24 = arith.constant 0 : index
    %c0_25 = arith.constant 0 : index
    %47 = vector.load %arg21[%c0_23, %c0_24, %c0_25] : memref<4x24x8xbf16, #tpu.memory_space<vmem>>, vector<1x24x8xbf16>
    %48 = vector.shape_cast %47 : vector<1x24x8xbf16> to vector<24x8xbf16>
    %49 = vector.shape_cast %46 : vector<24x8xbf16> to vector<1x24x8xbf16>
    tpu.vector_store %arg21[%c0_23, %c0_24, %c0_25], %49 {strides = array<i32>} : memref<4x24x8xbf16, #tpu.memory_space<vmem>>, vector<1x24x8xbf16>,
    %50 = vector.extract_strided_slice %37 {offsets = [0, 64], sizes = [24, 8], strides = [1, 1]} : vector<24x96xf32> to vector<24x8xf32>
    %51 = arith.truncf %50 : vector<24x8xf32> to vector<24x8xbf16>
    %c0_26 = arith.constant 0 : index
    %c0_27 = arith.constant 0 : index
    %c0_28 = arith.constant 0 : index
    %52 = vector.load %arg22[%c0_26, %c0_27, %c0_28] : memref<4x24x8xbf16, #tpu.memory_space<vmem>>, vector<1x24x8xbf16>
    %53 = vector.shape_cast %52 : vector<1x24x8xbf16> to vector<24x8xbf16>
    %54 = vector.shape_cast %51 : vector<24x8xbf16> to vector<1x24x8xbf16>
    tpu.vector_store %arg22[%c0_26, %c0_27, %c0_28], %54 {strides = array<i32>} : memref<4x24x8xbf16, #tpu.memory_space<vmem>>, vector<1x24x8xbf16>,
    %55 = vector.extract_strided_slice %37 {offsets = [0, 8], sizes = [24, 8], strides = [1, 1]} : vector<24x96xf32> to vector<24x8xf32>
    %cst_29 = arith.constant 0.353553385 : f32
    %56 = vector.broadcast %cst_29 : f32 to vector<24x8xf32>
    %57 = arith.mulf %55, %56 : vector<24x8xf32>
    %58 = arith.truncf %57 : vector<24x8xf32> to vector<24x8xbf16>
    %c1 = arith.constant 1 : index
    %c0_30 = arith.constant 0 : index
    %c0_31 = arith.constant 0 : index
    %59 = vector.load %arg20[%c1, %c0_30, %c0_31] : memref<4x24x8xbf16, #tpu.memory_space<vmem>>, vector<1x24x8xbf16>
    %60 = vector.shape_cast %59 : vector<1x24x8xbf16> to vector<24x8xbf16>
    %61 = vector.shape_cast %58 : vector<24x8xbf16> to vector<1x24x8xbf16>
    tpu.vector_store %arg20[%c1, %c0_30, %c0_31], %61 {strides = array<i32>} : memref<4x24x8xbf16, #tpu.memory_space<vmem>>, vector<1x24x8xbf16>,
    %62 = vector.extract_strided_slice %37 {offsets = [0, 40], sizes = [24, 8], strides = [1, 1]} : vector<24x96xf32> to vector<24x8xf32>
    %63 = arith.truncf %62 : vector<24x8xf32> to vector<24x8xbf16>
    %c1_32 = arith.constant 1 : index
    %c0_33 = arith.constant 0 : index
    %c0_34 = arith.constant 0 : index
    %64 = vector.load %arg21[%c1_32, %c0_33, %c0_34] : memref<4x24x8xbf16, #tpu.memory_space<vmem>>, vector<1x24x8xbf16>
    %65 = vector.shape_cast %64 : vector<1x24x8xbf16> to vector<24x8xbf16>
    %66 = vector.shape_cast %63 : vector<24x8xbf16> to vector<1x24x8xbf16>
    tpu.vector_store %arg21[%c1_32, %c0_33, %c0_34], %66 {strides = array<i32>} : memref<4x24x8xbf16, #tpu.memory_space<vmem>>, vector<1x24x8xbf16>,
    %67 = vector.extract_strided_slice %37 {offsets = [0, 72], sizes = [24, 8], strides = [1, 1]} : vector<24x96xf32> to vector<24x8xf32>
    %68 = arith.truncf %67 : vector<24x8xf32> to vector<24x8xbf16>
    %c1_35 = arith.constant 1 : index
    %c0_36 = arith.constant 0 : index
    %c0_37 = arith.constant 0 : index
    %69 = vector.load %arg22[%c1_35, %c0_36, %c0_37] : memref<4x24x8xbf16, #tpu.memory_space<vmem>>, vector<1x24x8xbf16>
    %70 = vector.shape_cast %69 : vector<1x24x8xbf16> to vector<24x8xbf16>
    %71 = vector.shape_cast %68 : vector<24x8xbf16> to vector<1x24x8xbf16>
    tpu.vector_store %arg22[%c1_35, %c0_36, %c0_37], %71 {strides = array<i32>} : memref<4x24x8xbf16, #tpu.memory_space<vmem>>, vector<1x24x8xbf16>,
    %72 = vector.extract_strided_slice %37 {offsets = [0, 16], sizes = [24, 8], strides = [1, 1]} : vector<24x96xf32> to vector<24x8xf32>
    %cst_38 = arith.constant 0.353553385 : f32
    %73 = vector.broadcast %cst_38 : f32 to vector<24x8xf32>
    %74 = arith.mulf %72, %73 : vector<24x8xf32>
    %75 = arith.truncf %74 : vector<24x8xf32> to vector<24x8xbf16>
    %c2 = arith.constant 2 : index
    %c0_39 = arith.constant 0 : index
    %c0_40 = arith.constant 0 : index
    %76 = vector.load %arg20[%c2, %c0_39, %c0_40] : memref<4x24x8xbf16, #tpu.memory_space<vmem>>, vector<1x24x8xbf16>
    %77 = vector.shape_cast %76 : vector<1x24x8xbf16> to vector<24x8xbf16>
    %78 = vector.shape_cast %75 : vector<24x8xbf16> to vector<1x24x8xbf16>
    tpu.vector_store %arg20[%c2, %c0_39, %c0_40], %78 {strides = array<i32>} : memref<4x24x8xbf16, #tpu.memory_space<vmem>>, vector<1x24x8xbf16>,
    %79 = vector.extract_strided_slice %37 {offsets = [0, 48], sizes = [24, 8], strides = [1, 1]} : vector<24x96xf32> to vector<24x8xf32>
    %80 = arith.truncf %79 : vector<24x8xf32> to vector<24x8xbf16>
    %c2_41 = arith.constant 2 : index
    %c0_42 = arith.constant 0 : index
    %c0_43 = arith.constant 0 : index
    %81 = vector.load %arg21[%c2_41, %c0_42, %c0_43] : memref<4x24x8xbf16, #tpu.memory_space<vmem>>, vector<1x24x8xbf16>
    %82 = vector.shape_cast %81 : vector<1x24x8xbf16> to vector<24x8xbf16>
    %83 = vector.shape_cast %80 : vector<24x8xbf16> to vector<1x24x8xbf16>
    tpu.vector_store %arg21[%c2_41, %c0_42, %c0_43], %83 {strides = array<i32>} : memref<4x24x8xbf16, #tpu.memory_space<vmem>>, vector<1x24x8xbf16>,
    %84 = vector.extract_strided_slice %37 {offsets = [0, 80], sizes = [24, 8], strides = [1, 1]} : vector<24x96xf32> to vector<24x8xf32>
    %85 = arith.truncf %84 : vector<24x8xf32> to vector<24x8xbf16>
    %c2_44 = arith.constant 2 : index
    %c0_45 = arith.constant 0 : index
    %c0_46 = arith.constant 0 : index
    %86 = vector.load %arg22[%c2_44, %c0_45, %c0_46] : memref<4x24x8xbf16, #tpu.memory_space<vmem>>, vector<1x24x8xbf16>
    %87 = vector.shape_cast %86 : vector<1x24x8xbf16> to vector<24x8xbf16>
    %88 = vector.shape_cast %85 : vector<24x8xbf16> to vector<1x24x8xbf16>
    tpu.vector_store %arg22[%c2_44, %c0_45, %c0_46], %88 {strides = array<i32>} : memref<4x24x8xbf16, #tpu.memory_space<vmem>>, vector<1x24x8xbf16>,
    %89 = vector.extract_strided_slice %37 {offsets = [0, 24], sizes = [24, 8], strides = [1, 1]} : vector<24x96xf32> to vector<24x8xf32>
    %cst_47 = arith.constant 0.353553385 : f32
    %90 = vector.broadcast %cst_47 : f32 to vector<24x8xf32>
    %91 = arith.mulf %89, %90 : vector<24x8xf32>
    %92 = arith.truncf %91 : vector<24x8xf32> to vector<24x8xbf16>
    %c3 = arith.constant 3 : index
    %c0_48 = arith.constant 0 : index
    %c0_49 = arith.constant 0 : index
    %93 = vector.load %arg20[%c3, %c0_48, %c0_49] : memref<4x24x8xbf16, #tpu.memory_space<vmem>>, vector<1x24x8xbf16>
    %94 = vector.shape_cast %93 : vector<1x24x8xbf16> to vector<24x8xbf16>
    %95 = vector.shape_cast %92 : vector<24x8xbf16> to vector<1x24x8xbf16>
    tpu.vector_store %arg20[%c3, %c0_48, %c0_49], %95 {strides = array<i32>} : memref<4x24x8xbf16, #tpu.memory_space<vmem>>, vector<1x24x8xbf16>,
    %96 = vector.extract_strided_slice %37 {offsets = [0, 56], sizes = [24, 8], strides = [1, 1]} : vector<24x96xf32> to vector<24x8xf32>
    %97 = arith.truncf %96 : vector<24x8xf32> to vector<24x8xbf16>
    %c3_50 = arith.constant 3 : index
    %c0_51 = arith.constant 0 : index
    %c0_52 = arith.constant 0 : index
    %98 = vector.load %arg21[%c3_50, %c0_51, %c0_52] : memref<4x24x8xbf16, #tpu.memory_space<vmem>>, vector<1x24x8xbf16>
    %99 = vector.shape_cast %98 : vector<1x24x8xbf16> to vector<24x8xbf16>
    %100 = vector.shape_cast %97 : vector<24x8xbf16> to vector<1x24x8xbf16>
    tpu.vector_store %arg21[%c3_50, %c0_51, %c0_52], %100 {strides = array<i32>} : memref<4x24x8xbf16, #tpu.memory_space<vmem>>, vector<1x24x8xbf16>,
    %101 = vector.extract_strided_slice %37 {offsets = [0, 88], sizes = [24, 8], strides = [1, 1]} : vector<24x96xf32> to vector<24x8xf32>
    %102 = arith.truncf %101 : vector<24x8xf32> to vector<24x8xbf16>
    %c3_53 = arith.constant 3 : index
    %c0_54 = arith.constant 0 : index
    %c0_55 = arith.constant 0 : index
    %103 = vector.load %arg22[%c3_53, %c0_54, %c0_55] : memref<4x24x8xbf16, #tpu.memory_space<vmem>>, vector<1x24x8xbf16>
    %104 = vector.shape_cast %103 : vector<1x24x8xbf16> to vector<24x8xbf16>
    %105 = vector.shape_cast %102 : vector<24x8xbf16> to vector<1x24x8xbf16>
    tpu.vector_store %arg22[%c3_53, %c0_54, %c0_55], %105 {strides = array<i32>} : memref<4x24x8xbf16, #tpu.memory_space<vmem>>, vector<1x24x8xbf16>,
    %c0_56 = arith.constant 0 : index
    %c0_57 = arith.constant 0 : index
    %c0_58 = arith.constant 0 : index
    %106 = vector.load %arg20[%c0_56, %c0_57, %c0_58] : memref<4x24x8xbf16, #tpu.memory_space<vmem>>, vector<4x24x8xbf16>
    %c0_59 = arith.constant 0 : index
    %c0_60 = arith.constant 0 : index
    %c0_61 = arith.constant 0 : index
    %107 = vector.load %arg21[%c0_59, %c0_60, %c0_61] : memref<4x24x8xbf16, #tpu.memory_space<vmem>>, vector<4x24x8xbf16>
    %c0_62 = arith.constant 0 : index
    %c0_63 = arith.constant 0 : index
    %c0_64 = arith.constant 0 : index
    %108 = vector.load %arg22[%c0_62, %c0_63, %c0_64] : memref<4x24x8xbf16, #tpu.memory_space<vmem>>, vector<4x24x8xbf16>
    "tpu.trace_start"() <{level = 10 : i32, message = "hqd,hkd->hqk"}> : () -> ()
    %cst_65 = arith.constant dense<0.000000e+00> : vector<4x24x24xf32>
    %109 = tpu.matmul %106, %107, %cst_65 {dimension_numbers = #tpu.dot_dimension_numbers<[2], [2], [1], [1], [0, 0, 0, 1, 1, 1], [0], [0]>} : vector<4x24x8xbf16>, vector<4x24x8xbf16>, vector<4x24x24xf32> -> vector<4x24x24xf32>
    "tpu.trace_stop"() : () -> ()
    %c0_66 = arith.constant 0 : index
    %c0_67 = arith.constant 0 : index
    %110 = vector.load %arg3[%c0_66, %c0_67] : memref<24x24xf32, #tpu.memory_space<vmem>>, vector<24x24xf32>
    %111 = vector.shape_cast %110 : vector<24x24xf32> to vector<1x24x24xf32>
    %112 = vector.broadcast %111 : vector<1x24x24xf32> to vector<4x24x24xf32>
    %113 = arith.addf %109, %112 : vector<4x24x24xf32>
    %cst_68 = arith.constant dense<0xFF800000> : vector<4x24xf32>
    %114 = vector.multi_reduction <maximumf>, %113, %cst_68 [2] : vector<4x24x24xf32> to vector<4x24xf32>
    %115 = vector.shape_cast %114 : vector<4x24xf32> to vector<4x24x1xf32>
    %116 = vector.broadcast %115 : vector<4x24x1xf32> to vector<4x24x24xf32>
    %117 = arith.subf %113, %116 : vector<4x24x24xf32>
    %118 = math.exp %117 : vector<4x24x24xf32>
    %cst_69 = arith.constant dense<0.000000e+00> : vector<4x24xf32>
    %119 = vector.multi_reduction <add>, %118, %cst_69 [2] : vector<4x24x24xf32> to vector<4x24xf32>
    %120 = vector.shape_cast %119 : vector<4x24xf32> to vector<4x24x1xf32>
    %121 = tpu.reciprocal %120 {approx = true} : vector<4x24x1xf32> -> vector<4x24x1xf32>
    %122 = vector.broadcast %121 : vector<4x24x1xf32> to vector<4x24x24xf32>
    %123 = arith.mulf %118, %122 : vector<4x24x24xf32>
    %124 = arith.truncf %123 : vector<4x24x24xf32> to vector<4x24x24xbf16>
    "tpu.trace_start"() <{level = 10 : i32, message = "hqk,hkd->hqd"}> : () -> ()
    %cst_70 = arith.constant dense<0.000000e+00> : vector<4x24x8xf32>
    %125 = tpu.matmul %124, %108, %cst_70 {dimension_numbers = #tpu.dot_dimension_numbers<[2], [1], [1], [2], [0, 0, 0, 1, 1, 2], [0], [0]>} : vector<4x24x24xbf16>, vector<4x24x8xbf16>, vector<4x24x8xf32> -> vector<4x24x8xf32>
    "tpu.trace_stop"() : () -> ()
    %126 = vector.extract_strided_slice %125 {offsets = [0, 0, 0], sizes = [1, 24, 8], strides = [1, 1, 1]} : vector<4x24x8xf32> to vector<1x24x8xf32>
    %127 = vector.shape_cast %126 : vector<1x24x8xf32> to vector<24x8xf32>
    %128 = vector.extract_strided_slice %125 {offsets = [1, 0, 0], sizes = [1, 24, 8], strides = [1, 1, 1]} : vector<4x24x8xf32> to vector<1x24x8xf32>
    %129 = vector.shape_cast %128 : vector<1x24x8xf32> to vector<24x8xf32>
    %130 = vector.extract_strided_slice %125 {offsets = [2, 0, 0], sizes = [1, 24, 8], strides = [1, 1, 1]} : vector<4x24x8xf32> to vector<1x24x8xf32>
    %131 = vector.shape_cast %130 : vector<1x24x8xf32> to vector<24x8xf32>
    %132 = vector.extract_strided_slice %125 {offsets = [3, 0, 0], sizes = [1, 24, 8], strides = [1, 1, 1]} : vector<4x24x8xf32> to vector<1x24x8xf32>
    %133 = vector.shape_cast %132 : vector<1x24x8xf32> to vector<24x8xf32>
    %134 = tpu.concatenate %127, %129, %131, %133 in 1 : vector<24x8xf32>, vector<24x8xf32>, vector<24x8xf32>, vector<24x8xf32> -> vector<24x32xf32>
    %135 = arith.truncf %134 : vector<24x32xf32> to vector<24x32xbf16>
    %c0_71 = arith.constant 0 : index
    %c0_72 = arith.constant 0 : index
    %c0_73 = arith.constant 0 : index
    %136 = vector.load %arg8[%c0_71, %c0_72, %c0_73] : memref<1x32x32xbf16, #tpu.memory_space<vmem>>, vector<1x32x32xbf16>
    %137 = vector.shape_cast %136 : vector<1x32x32xbf16> to vector<32x32xbf16>
    %cst_74 = arith.constant dense<0.000000e+00> : vector<24x32xf32>
    %138 = tpu.matmul %135, %137, %cst_74 {dimension_numbers = #tpu.dot_dimension_numbers<[1], [0], [0], [1], [0, 0, 1, 1], [], []>} : vector<24x32xbf16>, vector<32x32xbf16>, vector<24x32xf32> -> vector<24x32xf32>
    %c0_75 = arith.constant 0 : index
    %c0_76 = arith.constant 0 : index
    %c0_77 = arith.constant 0 : index
    %139 = vector.load %arg9[%c0_75, %c0_76, %c0_77] : memref<1x1x32xf32, #tpu.memory_space<vmem>>, vector<1x1x32xf32>
    %140 = vector.shape_cast %139 : vector<1x1x32xf32> to vector<1x32xf32>
    %141 = vector.broadcast %140 : vector<1x32xf32> to vector<24x32xf32>
    %142 = arith.addf %138, %141 : vector<24x32xf32>
    %143 = arith.addf %3, %142 : vector<24x32xf32>
    %c0_78 = arith.constant 0 : index
    %c0_79 = arith.constant 0 : index
    %c0_80 = arith.constant 0 : index
    %144 = vector.load %arg10[%c0_78, %c0_79, %c0_80] : memref<1x1x32xf32, #tpu.memory_space<vmem>>, vector<1x1x32xf32>
    %145 = vector.shape_cast %144 : vector<1x1x32xf32> to vector<1x32xf32>
    %c0_81 = arith.constant 0 : index
    %c0_82 = arith.constant 0 : index
    %c0_83 = arith.constant 0 : index
    %146 = vector.load %arg11[%c0_81, %c0_82, %c0_83] : memref<1x1x32xf32, #tpu.memory_space<vmem>>, vector<1x1x32xf32>
    %147 = vector.shape_cast %146 : vector<1x1x32xf32> to vector<1x32xf32>
    %cst_84 = arith.constant dense<0.000000e+00> : vector<24xf32>
    %148 = vector.multi_reduction <add>, %143, %cst_84 [1] : vector<24x32xf32> to vector<24xf32>
    %149 = vector.shape_cast %148 : vector<24xf32> to vector<24x1xf32>
    %cst_85 = arith.constant 3.200000e+01 : f32
    %150 = vector.broadcast %cst_85 : f32 to vector<24x1xf32>
    %151 = arith.divf %149, %150 : vector<24x1xf32>
    %152 = vector.broadcast %151 : vector<24x1xf32> to vector<24x32xf32>
    %153 = arith.subf %143, %152 : vector<24x32xf32>
    %154 = arith.mulf %153, %153 : vector<24x32xf32>
    %cst_86 = arith.constant dense<0.000000e+00> : vector<24xf32>
    %155 = vector.multi_reduction <add>, %154, %cst_86 [1] : vector<24x32xf32> to vector<24xf32>
    %156 = vector.shape_cast %155 : vector<24xf32> to vector<24x1xf32>
    %cst_87 = arith.constant 3.200000e+01 : f32
    %157 = vector.broadcast %cst_87 : f32 to vector<24x1xf32>
    %158 = arith.divf %156, %157 : vector<24x1xf32>
    %159 = vector.broadcast %151 : vector<24x1xf32> to vector<24x32xf32>
    %160 = arith.subf %143, %159 : vector<24x32xf32>
    %cst_88 = arith.constant 9.99999974E-6 : f32
    %161 = vector.broadcast %cst_88 : f32 to vector<24x1xf32>
    %162 = arith.addf %158, %161 : vector<24x1xf32>
    %163 = math.rsqrt %162 : vector<24x1xf32>
    %164 = vector.broadcast %163 : vector<24x1xf32> to vector<24x32xf32>
    %165 = arith.mulf %160, %164 : vector<24x32xf32>
    %166 = vector.broadcast %145 : vector<1x32xf32> to vector<24x32xf32>
    %167 = arith.mulf %165, %166 : vector<24x32xf32>
    %168 = vector.broadcast %147 : vector<1x32xf32> to vector<24x32xf32>
    %169 = arith.addf %167, %168 : vector<24x32xf32>
    %170 = arith.truncf %169 : vector<24x32xf32> to vector<24x32xbf16>
    %c0_89 = arith.constant 0 : index
    %c0_90 = arith.constant 0 : index
    %c0_91 = arith.constant 0 : index
    %171 = vector.load %arg12[%c0_89, %c0_90, %c0_91] : memref<1x32x128xbf16, #tpu.memory_space<vmem>>, vector<1x32x128xbf16>
    %172 = vector.shape_cast %171 : vector<1x32x128xbf16> to vector<32x128xbf16>
    %cst_92 = arith.constant dense<0.000000e+00> : vector<24x128xf32>
    %173 = tpu.matmul %170, %172, %cst_92 {dimension_numbers = #tpu.dot_dimension_numbers<[1], [0], [0], [1], [0, 0, 1, 1], [], []>} : vector<24x32xbf16>, vector<32x128xbf16>, vector<24x128xf32> -> vector<24x128xf32>
    %c0_93 = arith.constant 0 : index
    %c0_94 = arith.constant 0 : index
    %c0_95 = arith.constant 0 : index
    %174 = vector.load %arg13[%c0_93, %c0_94, %c0_95] : memref<1x1x128xf32, #tpu.memory_space<vmem>>, vector<1x1x128xf32>
    %175 = vector.shape_cast %174 : vector<1x1x128xf32> to vector<1x128xf32>
    %176 = vector.broadcast %175 : vector<1x128xf32> to vector<24x128xf32>
    %177 = arith.addf %173, %176 : vector<24x128xf32>
    %cst_96 = arith.constant 5.000000e-01 : f32
    %178 = vector.broadcast %cst_96 : f32 to vector<24x128xf32>
    %179 = arith.mulf %178, %177 : vector<24x128xf32>
    %cst_97 = arith.constant 4.471500e-02 : f32
    %180 = vector.broadcast %cst_97 : f32 to vector<24x128xf32>
    %181 = arith.mulf %180, %177 : vector<24x128xf32>
    %182 = arith.mulf %181, %177 : vector<24x128xf32>
    %183 = arith.mulf %182, %177 : vector<24x128xf32>
    %184 = arith.addf %177, %183 : vector<24x128xf32>
    %cst_98 = arith.constant 0.797884583 : f32
    %185 = vector.broadcast %cst_98 : f32 to vector<24x128xf32>
    %186 = arith.mulf %185, %184 : vector<24x128xf32>
    %187 = math.tanh %186 : vector<24x128xf32>
    %cst_99 = arith.constant 1.000000e+00 : f32
    %188 = vector.broadcast %cst_99 : f32 to vector<24x128xf32>
    %189 = arith.addf %188, %187 : vector<24x128xf32>
    %190 = arith.mulf %179, %189 : vector<24x128xf32>
    %191 = arith.truncf %190 : vector<24x128xf32> to vector<24x128xbf16>
    %c0_100 = arith.constant 0 : index
    %c0_101 = arith.constant 0 : index
    %c0_102 = arith.constant 0 : index
    %192 = vector.load %arg14[%c0_100, %c0_101, %c0_102] : memref<1x128x32xbf16, #tpu.memory_space<vmem>>, vector<1x128x32xbf16>
    %193 = vector.shape_cast %192 : vector<1x128x32xbf16> to vector<128x32xbf16>
    %cst_103 = arith.constant dense<0.000000e+00> : vector<24x32xf32>
    %194 = tpu.matmul %191, %193, %cst_103 {dimension_numbers = #tpu.dot_dimension_numbers<[1], [0], [0], [1], [0, 0, 1, 1], [], []>} : vector<24x128xbf16>, vector<128x32xbf16>, vector<24x32xf32> -> vector<24x32xf32>
    %195 = arith.addf %143, %194 : vector<24x32xf32>
    %c0_104 = arith.constant 0 : index
    %c0_105 = arith.constant 0 : index
    %c0_106 = arith.constant 0 : index
    %196 = vector.load %arg15[%c0_104, %c0_105, %c0_106] : memref<1x1x32xf32, #tpu.memory_space<vmem>>, vector<1x1x32xf32>
    %197 = vector.shape_cast %196 : vector<1x1x32xf32> to vector<1x32xf32>
    %198 = vector.broadcast %197 : vector<1x32xf32> to vector<24x32xf32>
    %199 = arith.addf %195, %198 : vector<24x32xf32>
    %c0_107 = arith.constant 0 : index
    %c0_108 = arith.constant 0 : index
    %200 = vector.load %arg19[%c0_107, %c0_108] : memref<24x32xf32, #tpu.memory_space<vmem>>, vector<24x32xf32>
    tpu.vector_store %arg19[%c0_107, %c0_108], %199 {strides = array<i32>} : memref<24x32xf32, #tpu.memory_space<vmem>>, vector<24x32xf32>,
    %c1_i32 = arith.constant 1 : i32
    %201 = arith.cmpi eq, %arg1, %c1_i32 : i32
    %202 = arith.extui %201 : i1 to i32
    %c0_i32_109 = arith.constant 0 : i32
    %203 = arith.cmpi ne, %202, %c0_i32_109 : i32
    scf.if %203 {
      %c0_110 = arith.constant 0 : index
      %c0_111 = arith.constant 0 : index
      %204 = vector.load %arg16[%c0_110, %c0_111] : memref<1x32xf32, #tpu.memory_space<vmem>>, vector<1x32xf32>
      %c0_112 = arith.constant 0 : index
      %c0_113 = arith.constant 0 : index
      %205 = vector.load %arg17[%c0_112, %c0_113] : memref<1x32xf32, #tpu.memory_space<vmem>>, vector<1x32xf32>
      %cst_114 = arith.constant dense<0.000000e+00> : vector<24xf32>
      %206 = vector.multi_reduction <add>, %199, %cst_114 [1] : vector<24x32xf32> to vector<24xf32>
      %207 = vector.shape_cast %206 : vector<24xf32> to vector<24x1xf32>
      %cst_115 = arith.constant 3.200000e+01 : f32
      %208 = vector.broadcast %cst_115 : f32 to vector<24x1xf32>
      %209 = arith.divf %207, %208 : vector<24x1xf32>
      %210 = vector.broadcast %209 : vector<24x1xf32> to vector<24x32xf32>
      %211 = arith.subf %199, %210 : vector<24x32xf32>
      %212 = arith.mulf %211, %211 : vector<24x32xf32>
      %cst_116 = arith.constant dense<0.000000e+00> : vector<24xf32>
      %213 = vector.multi_reduction <add>, %212, %cst_116 [1] : vector<24x32xf32> to vector<24xf32>
      %214 = vector.shape_cast %213 : vector<24xf32> to vector<24x1xf32>
      %cst_117 = arith.constant 3.200000e+01 : f32
      %215 = vector.broadcast %cst_117 : f32 to vector<24x1xf32>
      %216 = arith.divf %214, %215 : vector<24x1xf32>
      %217 = vector.broadcast %209 : vector<24x1xf32> to vector<24x32xf32>
      %218 = arith.subf %199, %217 : vector<24x32xf32>
      %cst_118 = arith.constant 9.99999974E-6 : f32
      %219 = vector.broadcast %cst_118 : f32 to vector<24x1xf32>
      %220 = arith.addf %216, %219 : vector<24x1xf32>
      %221 = math.rsqrt %220 : vector<24x1xf32>
      %222 = vector.broadcast %221 : vector<24x1xf32> to vector<24x32xf32>
      %223 = arith.mulf %218, %222 : vector<24x32xf32>
      %224 = vector.broadcast %204 : vector<1x32xf32> to vector<24x32xf32>
      %225 = arith.mulf %223, %224 : vector<24x32xf32>
      %226 = vector.broadcast %205 : vector<1x32xf32> to vector<24x32xf32>
      %227 = arith.addf %225, %226 : vector<24x32xf32>
      %c0_119 = arith.constant 0 : index
      %c0_120 = arith.constant 0 : index
      %c0_121 = arith.constant 0 : index
      %228 = vector.load %arg18[%c0_119, %c0_120, %c0_121] : memref<1x24x32xf32, #tpu.memory_space<vmem>>, vector<1x24x32xf32>
      %229 = vector.shape_cast %228 : vector<1x24x32xf32> to vector<24x32xf32>
      %230 = vector.shape_cast %227 : vector<24x32xf32> to vector<1x24x32xf32>
      tpu.vector_store %arg18[%c0_119, %c0_120, %c0_121], %230 {strides = array<i32>} : memref<1x24x32xf32, #tpu.memory_space<vmem>>, vector<1x24x32xf32>,
    } else {
    }
    return
  }
  func.func @transform_0(%arg0: i32, %arg1: i32) -> (i32, i32, i32) {
    %c0_i32 = arith.constant 0 : i32
    %c0_i32_0 = arith.constant 0 : i32
    %c0_i32_1 = arith.constant 0 : i32
    return %arg0, %c0_i32, %c0_i32_0 : i32, i32, i32
  }
  func.func @transform_1(%arg0: i32, %arg1: i32) -> (i32, i32) {
    %c0_i32 = arith.constant 0 : i32
    %c0_i32_0 = arith.constant 0 : i32
    %c0_i32_1 = arith.constant 0 : i32
    return %c0_i32, %c0_i32_0 : i32, i32
  }
  func.func @transform_2(%arg0: i32, %arg1: i32) -> (i32, i32, i32) {
    %c0_i32 = arith.constant 0 : i32
    %c0_i32_0 = arith.constant 0 : i32
    %c0_i32_1 = arith.constant 0 : i32
    return %arg1, %c0_i32, %c0_i32_0 : i32, i32, i32
  }
  func.func @transform_3(%arg0: i32, %arg1: i32) -> (i32, i32, i32) {
    %c0_i32 = arith.constant 0 : i32
    %c0_i32_0 = arith.constant 0 : i32
    %c0_i32_1 = arith.constant 0 : i32
    return %arg1, %c0_i32, %c0_i32_0 : i32, i32, i32
  }
  func.func @transform_4(%arg0: i32, %arg1: i32) -> (i32, i32, i32) {
    %c0_i32 = arith.constant 0 : i32
    %c0_i32_0 = arith.constant 0 : i32
    %c0_i32_1 = arith.constant 0 : i32
    return %arg1, %c0_i32, %c0_i32_0 : i32, i32, i32
  }
  func.func @transform_5(%arg0: i32, %arg1: i32) -> (i32, i32, i32) {
    %c0_i32 = arith.constant 0 : i32
    %c0_i32_0 = arith.constant 0 : i32
    %c0_i32_1 = arith.constant 0 : i32
    return %arg1, %c0_i32, %c0_i32_0 : i32, i32, i32
  }
  func.func @transform_6(%arg0: i32, %arg1: i32) -> (i32, i32, i32) {
    %c0_i32 = arith.constant 0 : i32
    %c0_i32_0 = arith.constant 0 : i32
    %c0_i32_1 = arith.constant 0 : i32
    return %arg1, %c0_i32, %c0_i32_0 : i32, i32, i32
  }
  func.func @transform_7(%arg0: i32, %arg1: i32) -> (i32, i32, i32) {
    %c0_i32 = arith.constant 0 : i32
    %c0_i32_0 = arith.constant 0 : i32
    %c0_i32_1 = arith.constant 0 : i32
    return %arg1, %c0_i32, %c0_i32_0 : i32, i32, i32
  }
  func.func @transform_8(%arg0: i32, %arg1: i32) -> (i32, i32, i32) {
    %c0_i32 = arith.constant 0 : i32
    %c0_i32_0 = arith.constant 0 : i32
    %c0_i32_1 = arith.constant 0 : i32
    return %arg1, %c0_i32, %c0_i32_0 : i32, i32, i32
  }
  func.func @transform_9(%arg0: i32, %arg1: i32) -> (i32, i32, i32) {
    %c0_i32 = arith.constant 0 : i32
    %c0_i32_0 = arith.constant 0 : i32
    %c0_i32_1 = arith.constant 0 : i32
    return %arg1, %c0_i32, %c0_i32_0 : i32, i32, i32
  }
  func.func @transform_10(%arg0: i32, %arg1: i32) -> (i32, i32, i32) {
    %c0_i32 = arith.constant 0 : i32
    %c0_i32_0 = arith.constant 0 : i32
    %c0_i32_1 = arith.constant 0 : i32
    return %arg1, %c0_i32, %c0_i32_0 : i32, i32, i32
  }
  func.func @transform_11(%arg0: i32, %arg1: i32) -> (i32, i32, i32) {
    %c0_i32 = arith.constant 0 : i32
    %c0_i32_0 = arith.constant 0 : i32
    %c0_i32_1 = arith.constant 0 : i32
    return %arg1, %c0_i32, %c0_i32_0 : i32, i32, i32
  }
  func.func @transform_12(%arg0: i32, %arg1: i32) -> (i32, i32, i32) {
    %c0_i32 = arith.constant 0 : i32
    %c0_i32_0 = arith.constant 0 : i32
    %c0_i32_1 = arith.constant 0 : i32
    return %arg1, %c0_i32, %c0_i32_0 : i32, i32, i32
  }
  func.func @transform_13(%arg0: i32, %arg1: i32) -> (i32, i32, i32) {
    %c0_i32 = arith.constant 0 : i32
    %c0_i32_0 = arith.constant 0 : i32
    %c0_i32_1 = arith.constant 0 : i32
    return %arg1, %c0_i32, %c0_i32_0 : i32, i32, i32
  }
  func.func @transform_14(%arg0: i32, %arg1: i32) -> (i32, i32) {
    %c0_i32 = arith.constant 0 : i32
    %c0_i32_0 = arith.constant 0 : i32
    %c0_i32_1 = arith.constant 0 : i32
    return %c0_i32, %c0_i32_0 : i32, i32
  }
  func.func @transform_15(%arg0: i32, %arg1: i32) -> (i32, i32) {
    %c0_i32 = arith.constant 0 : i32
    %c0_i32_0 = arith.constant 0 : i32
    %c0_i32_1 = arith.constant 0 : i32
    return %c0_i32, %c0_i32_0 : i32, i32
  }
  func.func @transform_16(%arg0: i32, %arg1: i32) -> (i32, i32, i32) {
    %c0_i32 = arith.constant 0 : i32
    %c0_i32_0 = arith.constant 0 : i32
    %c0_i32_1 = arith.constant 0 : i32
    return %arg0, %c0_i32, %c0_i32_0 : i32, i32, i32
  }
}

</mosaic_0001>

<llo_original>
// kernel: dtrocr_forward.2
$region0: #{dtrocr_forward.2}
  #allocation0 [shape = 'u32[]', space=smem, size = 0x4, offset = 0x4, fixed_abs, tag = 'smem constant byte address 0x4 - core index']
  #allocation1 [shape = 'u32[144,128]{1,0:T(1,128)}', space=vmem, size = 0x12000, scoped, tag = 'internal scratch']
  %s0 = inlined_call_operand.hbm [shape: f32[32,48], index: 0, kind: input, shape index: {}]
  %s1 = inlined_call_operand.hbm [shape: bf16[48,32], index: 1, kind: input, shape index: {}]
  %s2 = inlined_call_operand.hbm [shape: f32[1,32], index: 2, kind: input, shape index: {}]
  %s3 = inlined_call_operand.hbm [shape: f32[16,32], index: 3, kind: input, shape index: {}]
  %s4 = inlined_call_operand.hbm [shape: f32[32,32], index: 4, kind: output, shape index: {}]
  %s5 = sld [smem:[#allocation0]]
  $region65: #{dtrocr_forward.2} parent=0
    _
  %s7 = ssub.s32 1, %s5
  %s8 = scalar_select 0, %s7, %s5
  $region1: #{dtrocr_forward.2} parent=0
    #allocation2 [shape = 'u8[16384]{0}', space=vmem, size = 0x4000, scoped, tag = 'input window, operand 0']
    #allocation3 [shape = 's32[2]{0}', space=sflag, size = 0x8, scoped, tag = 'scoped memory for dtrocr_forward.2']
    #allocation4 [shape = 's32[2]{0}', space=sflag, size = 0x8, scoped, tag = 'scoped memory for dtrocr_forward.2']
    #allocation5 [shape = 'u8[12288]{0}', space=vmem, size = 0x3000, scoped, tag = 'input window, operand 1, single buffered']
    #allocation6 [shape = 's32[1]{0}', space=sflag, size = 0x4, scoped, tag = 'scoped memory for dtrocr_forward.2']
    #allocation7 [shape = 'u8[512]{0}', space=vmem, size = 0x400, scoped, tag = 'input window, operand 2, single buffered']
    #allocation8 [shape = 'u8[8192]{0}', space=vmem, size = 0x2000, scoped, tag = 'input window, operand 3, single buffered']
    #allocation9 [shape = 's32[1]{0}', space=sflag, size = 0x4, scoped, tag = 'scoped memory for dtrocr_forward.2']
    #allocation10 [shape = 'u8[16384]{0}', space=vmem, size = 0x4000, scoped, tag = 'output window, operand 0']
    %9 = vsyncpa [#allocation3], 0
    %s10 = scalar_lea.sflag [#allocation3], 1
    %11 = vsyncpa %s10, 0
    %12 = vsyncpa [#allocation6], 0
    %13 = vsyncpa [#allocation9], 0
    %14 = vsyncpa [#allocation4], 0
    %s15 = scalar_lea.sflag [#allocation4], 1
    %16 = vsyncpa %s15, 0
    loop: start=0, step=1, limit=4
    $region2: #{dtrocr_forward.2} parent=1 // loop_pre_header
      _
    $region3: #{dtrocr_forward.2} parent=1 // loop_header
      %s18 = sphi 0, %s22
      %p19 = scmp.ge.s32.totalorder %s18, 4
      %s28 = sphi 0, %s30
      %s31 = sphi 0, %s28
      %s32 = sphi 0, %s31
      %s48 = sphi 0, %s32
      %s52 = sphi 0, %s52
      %s54 = sphi 0, %s52
      %s55 = sphi 0, %s54
      %s69 = sphi 0, %s55
      %s73 = sphi 0, %s73
      %s75 = sphi 0, %s73
      %s76 = sphi 0, %s75
      %s90 = sphi 0, %s76
      %s94 = sphi 0, %s94
      %s96 = sphi 0, %s94
      %s97 = sphi 0, %s96
      %s111 = sphi 0, %s97
      %s117 = sphi 0, %s119
      %s120 = sphi 0, %s117
      %s121 = sphi 0, %s120
      %s137 = sphi 0, %s121
    $region4: #{dtrocr_forward.2} parent=1 // loop_header_branch
      %21 = sbr.rel (%p19) target = $region8
    $region5: #{dtrocr_forward.2} parent=1 // loop_body
      %s23 = ssub.s32 %s18, 1
      %s24 = ssub.s32 %s18, 2
      %s25 = sadd.s32 %s18, 1
      %s26 = ssub.s32 %s18, %s25
      %p27 = scmp.eq.s32.totalorder %s26, 0
      %s29 = sadd.s32 %s28, 1
      %s30 = scalar_select %p27, %s28, %s29
      %p33 = pneg %p27
      %p34 = scmp.eq.s32.totalorder %s18, 1
      %p35 = por %p33, %p34
      %p36 = scmp.ne.s32.totalorder %s28, %s31
      %p37 = scmp.eq.s32.totalorder %s18, 0
      %p38 = por %p36, %p37
      %p39 = scmp.ne.s32.totalorder %s28, %s31
      %p40 = scmp.eq.s32.totalorder %s23, 1
      %p41 = por %p39, %p40
      %p42 = scmp.ne.s32.totalorder %s31, %s32
      %p43 = scmp.eq.s32.totalorder %s23, 0
      %p44 = por %p42, %p43
      %p45 = scmp.ne.s32.totalorder %s31, %s32
      %p46 = scmp.eq.s32.totalorder %s24, 1
      %p47 = por %p45, %p46
      %p49 = scmp.ne.s32.totalorder %s32, %s48
      %p50 = scmp.eq.s32.totalorder %s24, 0
      %p51 = por %p49, %p50
      %s53 = sadd.s32 %s52, 1
      %p56 = scmp.eq.s32.totalorder %s18, 1
      %p57 = scmp.ne.s32.totalorder %s52, %s54
      %p58 = scmp.eq.s32.totalorder %s18, 0
      %p59 = por %p57, %p58
      %p60 = scmp.ne.s32.totalorder %s52, %s54
      %p61 = scmp.eq.s32.totalorder %s23, 1
      %p62 = por %p60, %p61
      %p63 = scmp.ne.s32.totalorder %s54, %s55
      %p64 = scmp.eq.s32.totalorder %s23, 0
      %p65 = por %p63, %p64
      %p66 = scmp.ne.s32.totalorder %s54, %s55
      %p67 = scmp.eq.s32.totalorder %s24, 1
      %p68 = por %p66, %p67
      %p70 = scmp.ne.s32.totalorder %s55, %s69
      %p71 = scmp.eq.s32.totalorder %s24, 0
      %p72 = por %p70, %p71
      %s74 = sadd.s32 %s73, 1
      %p77 = scmp.eq.s32.totalorder %s18, 1
      %p78 = scmp.ne.s32.totalorder %s73, %s75
      %p79 = scmp.eq.s32.totalorder %s18, 0
      %p80 = por %p78, %p79
      %p81 = scmp.ne.s32.totalorder %s73, %s75
      %p82 = scmp.eq.s32.totalorder %s23, 1
      %p83 = por %p81, %p82
      %p84 = scmp.ne.s32.totalorder %s75, %s76
      %p85 = scmp.eq.s32.totalorder %s23, 0
      %p86 = por %p84, %p85
      %p87 = scmp.ne.s32.totalorder %s75, %s76
      %p88 = scmp.eq.s32.totalorder %s24, 1
      %p89 = por %p87, %p88
      %p91 = scmp.ne.s32.totalorder %s76, %s90
      %p92 = scmp.eq.s32.totalorder %s24, 0
      %p93 = por %p91, %p92
      %s95 = sadd.s32 %s94, 1
      %p98 = scmp.eq.s32.totalorder %s18, 1
      %p99 = scmp.ne.s32.totalorder %s94, %s96
      %p100 = scmp.eq.s32.totalorder %s18, 0
      %p101 = por %p99, %p100
      %p102 = scmp.ne.s32.totalorder %s94, %s96
      %p103 = scmp.eq.s32.totalorder %s23, 1
      %p104 = por %p102, %p103
      %p105 = scmp.ne.s32.totalorder %s96, %s97
      %p106 = scmp.eq.s32.totalorder %s23, 0
      %p107 = por %p105, %p106
      %p108 = scmp.ne.s32.totalorder %s96, %s97
      %p109 = scmp.eq.s32.totalorder %s24, 1
      %p110 = por %p108, %p109
      %p112 = scmp.ne.s32.totalorder %s97, %s111
      %p113 = scmp.eq.s32.totalorder %s24, 0
      %p114 = por %p112, %p113
      %s115 = ssub.s32 %s18, %s25
      %p116 = scmp.eq.s32.totalorder %s115, 0
      %s118 = sadd.s32 %s117, 1
      %s119 = scalar_select %p116, %s117, %s118
      %p122 = pneg %p116
      %p123 = scmp.eq.s32.totalorder %s18, 1
      %p124 = por %p122, %p123
      %p125 = scmp.ne.s32.totalorder %s117, %s120
      %p126 = scmp.eq.s32.totalorder %s18, 0
      %p127 = por %p125, %p126
      %p128 = scmp.ne.s32.totalorder %s117, %s120
      %p129 = scmp.eq.s32.totalorder %s23, 1
      %p130 = por %p128, %p129
      %p131 = scmp.ne.s32.totalorder %s120, %s121
      %p132 = scmp.eq.s32.totalorder %s23, 0
      %p133 = por %p131, %p132
      %p134 = scmp.ne.s32.totalorder %s120, %s121
      %p135 = scmp.eq.s32.totalorder %s24, 1
      %p136 = por %p134, %p135
      %p138 = scmp.ne.s32.totalorder %s121, %s137
      %p139 = scmp.eq.s32.totalorder %s24, 0
      %p140 = por %p138, %p139
      %p141 = scmp.le.s32.totalorder 1, %s18
      %p142 = scmp.lt.s32.totalorder %s18, 3
      %p143 = pnand %p141, %p142
      %p144 = pneg %p143
      // Predicated region
      $region9: #{dtrocr_forward.2} parent=5 // pred_check
        _
      $region10: #{dtrocr_forward.2} parent=5 // pred_check_branch
        %146 = sbr.rel (%p143) target = $region12
      $region11: #{dtrocr_forward.2} parent=5 // pred_region
        %s147 = ssub.s32 %s18, 1
        // Predicated region
        $region13: #{dtrocr_forward.2} parent=11 // pred_check
          %p148 = pneg %p65
        $region14: #{dtrocr_forward.2} parent=11 // pred_check_branch
          %150 = sbr.rel (%p148) target = $region16
        $region15: #{dtrocr_forward.2} parent=11 // pred_region
          %s152 = ssub.s32 384, 384
          %153 = vsyncadd [#allocation6], %s152
          %s154 = sshll.u32 [#allocation5], 4
          %s155 = int_to_ptr.vmem [resolvable:$true] %s154
          %160 = dma.hbm_to_vmem [thread:$0]  %s1, 384, %s155, [#allocation6], 64, 64, 4
        $region16: #{dtrocr_forward.2} parent=11 // pred_fallthru
          _
        // Predicated region
        $region17: #{dtrocr_forward.2} parent=11 // pred_check
          %p161 = pneg %p86
        $region18: #{dtrocr_forward.2} parent=11 // pred_check_branch
          %163 = sbr.rel (%p161) target = $region20
        $region19: #{dtrocr_forward.2} parent=11 // pred_region
          %s165 = ssub.s32 16, 16
          %166 = vsyncadd [#allocation6], %s165
          %s168 = sshll.u32 [#allocation7], 4
          %s169 = int_to_ptr.vmem [resolvable:$true] %s168
          %171 = dma.hbm_to_vmem [thread:$0]  %s2, 16, %s169, [#allocation6]
        $region20: #{dtrocr_forward.2} parent=11 // pred_fallthru
          _
        // Predicated region
        $region21: #{dtrocr_forward.2} parent=11 // pred_check
          %p172 = pneg %p107
        $region22: #{dtrocr_forward.2} parent=11 // pred_check_branch
          %174 = sbr.rel (%p172) target = $region24
        $region23: #{dtrocr_forward.2} parent=11 // pred_region
          %s176 = ssub.s32 256, 256
          %177 = vsyncadd [#allocation9], %s176
          %s178 = sshll.u32 [#allocation8], 4
          %s179 = int_to_ptr.vmem [resolvable:$true] %s178
          %184 = dma.hbm_to_vmem [thread:$0]  %s3, 256, %s179, [#allocation9], 128, 128, 8
        $region24: #{dtrocr_forward.2} parent=11 // pred_fallthru
          _
      $region12: #{dtrocr_forward.2} parent=5 // pred_fallthru
        _
      %p185 = scmp.lt.s32.totalorder %s18, 2
      // Predicated region
      $region25: #{dtrocr_forward.2} parent=5 // pred_check
        %p186 = pneg %p185
      $region26: #{dtrocr_forward.2} parent=5 // pred_check_branch
        %188 = sbr.rel (%p186) target = $region28
      $region27: #{dtrocr_forward.2} parent=5 // pred_region
        // Predicated region
        $region29: #{dtrocr_forward.2} parent=27 // pred_check
          %p189 = pneg %p38
        $region30: #{dtrocr_forward.2} parent=27 // pred_check_branch
          %191 = sbr.rel (%p189) target = $region32
        $region31: #{dtrocr_forward.2} parent=27 // pred_region
          %s192 = sand.u32 %s28, 1
          %s193 = scalar_lea.sflag [#allocation3], %s192
          %s194 = sand.u32 %s28, 1
          %s195 = smul.addr %s194, 16
          %s196 = scalar_lea.vmem [#allocation2], %s195
          %s197 = smul.u32 2, %s18
          %s199 = ssub.s32 256, 256
          %200 = vsyncadd %s193, %s199
          %s201 = smul.addr %s197, 128
          %s202 = scalar_lea.hbm %s0, %s201
          %s203 = sshll.u32 %s196, 4
          %s204 = int_to_ptr.vmem [resolvable:$true] %s203
          %209 = dma.hbm_to_vmem [thread:$0]  %s202, 256, %s204, %s193, 128, 128, 8
        $region32: #{dtrocr_forward.2} parent=27 // pred_fallthru
          _
      $region28: #{dtrocr_forward.2} parent=5 // pred_fallthru
        _
      %p210 = scmp.le.s32.totalorder 1, %s18
      %p211 = scmp.lt.s32.totalorder %s18, 3
      %p212 = pnand %p210, %p211
      %p213 = pneg %p212
      // Predicated region
      $region33: #{dtrocr_forward.2} parent=5 // pred_check
        _
      $region34: #{dtrocr_forward.2} parent=5 // pred_check_branch
        %215 = sbr.rel (%p212) target = $region36
      $region35: #{dtrocr_forward.2} parent=5 // pred_region
        %s216 = ssub.s32 %s18, 1
        %s217 = sand.u32 %s31, 1
        %s218 = scalar_lea.sflag [#allocation3], %s217
        %s219 = sand.u32 %s31, 1
        %s220 = smul.addr %s219, 16
        %s221 = scalar_lea.vmem [#allocation2], %s220
        // Predicated region
        $region37: #{dtrocr_forward.2} parent=35 // pred_check
          %p222 = pneg %p44
        $region38: #{dtrocr_forward.2} parent=35 // pred_check_branch
          %224 = sbr.rel (%p222) target = $region40
        $region39: #{dtrocr_forward.2} parent=35 // pred_region
          %225 = dma.done %s218, 256
        $region40: #{dtrocr_forward.2} parent=35 // pred_fallthru
          _
        // Predicated region
        $region41: #{dtrocr_forward.2} parent=35 // pred_check
          %p226 = pneg %p65
        $region42: #{dtrocr_forward.2} parent=35 // pred_check_branch
          %228 = sbr.rel (%p226) target = $region44
        $region43: #{dtrocr_forward.2} parent=35 // pred_region
          %229 = dma.done [#allocation6], 384
        $region44: #{dtrocr_forward.2} parent=35 // pred_fallthru
          _
        // Predicated region
        $region45: #{dtrocr_forward.2} parent=35 // pred_check
          %p230 = pneg %p86
        $region46: #{dtrocr_forward.2} parent=35 // pred_check_branch
          %232 = sbr.rel (%p230) target = $region48
        $region47: #{dtrocr_forward.2} parent=35 // pred_region
          %233 = dma.done [#allocation6], 16
        $region48: #{dtrocr_forward.2} parent=35 // pred_fallthru
          _
        // Predicated region
        $region49: #{dtrocr_forward.2} parent=35 // pred_check
          %p234 = pneg %p107
        $region50: #{dtrocr_forward.2} parent=35 // pred_check_branch
          %236 = sbr.rel (%p234) target = $region52
        $region51: #{dtrocr_forward.2} parent=35 // pred_region
          %237 = dma.done [#allocation9], 256
        $region52: #{dtrocr_forward.2} parent=35 // pred_fallthru
          _
        %s238 = sand.u32 %s31, 1
        %s239 = scalar_lea.sflag [#allocation3], %s238
        %s240 = sand.u32 %s31, 1
        %s241 = smul.addr %s240, 16
        %s242 = scalar_lea.vmem [#allocation2], %s241
        %p243 = pneg %p44
        %p244 = pneg %p41
        %p245 = pneg %p65
        %p246 = pneg %p62
        %p247 = pneg %p86
        %p248 = pneg %p83
        %p249 = pneg %p107
        %p250 = pneg %p104
        %p251 = pneg %p133
        %p252 = pneg %p130
        %s253 = sand.u32 %s120, 1
        %s254 = scalar_lea.sflag [#allocation4], %s253
        %s255 = sand.u32 %s120, 1
        %s256 = smul.addr %s255, 16
        %s257 = scalar_lea.vmem [#allocation10], %s256
        %s258 = smul.u32 2, %s23
        %s259 = smul.u32 2, %s23
        %v261 = vld [vmem:[%s221] sm:$0xff]
        %v262 = vld [vmem:[%s221 + $0x8] sm:$0xff]
        %v263 = vpack.c.bf16 %v262, %v261
        %v264 = vld [vmem:[#allocation5] sm:$0xf]
        %v265 = vld [vmem:[#allocation5 + $0x4] sm:$0xf]
        %v266 = vld [vmem:[#allocation5 + $0x8] sm:$0xf]
        %v267 = vld [vmem:[#allocation5 + $0xc] sm:$0xf]
        %v268 = vld [vmem:[#allocation5 + $0x10] sm:$0xf]
        %v269 = vld [vmem:[#allocation5 + $0x14] sm:$0xf]
        %v270 = vld [vmem:[#allocation7] sm:$0x1]
        %v272 = vlaneseq
        %v273 = vshrl.u32 %v272, 7
        %v274 = vsub.s32 0, %v273
        %v275 = vrot.slane %v270, %v274
        %v283 = vunpack.c.l.b16 %v264
        %v284 = vunpack.c.l.b16 %v265
        %v285 = vunpack.c.l.b16 %v266
        %v286 = vunpack.c.l.b16 %v267
        %v287 = vunpack.c.l.b16 %v268
        %v288 = vunpack.c.l.b16 %v269
        %v289 = vpack.c.b16 %v284, %v283
        %v290 = vpack.c.b16 %v286, %v285
        %v291 = vpack.c.b16 %v288, %v287
        %vm295 = vcmask 392192
        %v297 = vsel %vm295, %v263, 0
        %299 = vmatprep.subr.bf16.mxu0 0
        %300 = vmatpush1.bf16.msra.mxu0 %v289
        %301 = vmatprep.subr.bf16.mxu0 0
        %302 = vmatpush1.bf16.msra.mxu0 %v290
        %303 = vmatprep.subr.bf16.mxu0 0
        %304 = vmatpush1.bf16.msra.mxu0 %v291
        %305 = vmatprep.subr.bf16.mxu0 0
        %306 = vmatpush1.bf16.msra.mxu0 0
        %307 = vmatprep.subr.bf16.mxu0 0
        %308 = vmatpush1.bf16.msra.mxu0 0
        %309 = vmatprep.subr.bf16.mxu0 0
        %310 = vmatpush1.bf16.msra.mxu0 0
        %311 = vmatprep.subr.bf16.mxu0 0
        %312 = vmatpush1.bf16.msra.mxu0 0
        %313 = vmatprep.subr.bf16.mxu0 0
        %314 = vmatpush1.bf16.msra.mxu0 0
        %315 = vmatprep.subr.bf16.mxu0 0
        %316 = vmatpush1.bf16.msra.mxu0 0
        %317 = vmatprep.subr.bf16.mxu0 0
        %318 = vmatpush1.bf16.msra.mxu0 0
        %319 = vmatprep.subr.bf16.mxu0 0
        %320 = vmatpush1.bf16.msra.mxu0 0
        %321 = vmatprep.subr.bf16.mxu0 0
        %322 = vmatpush1.bf16.msra.mxu0 0
        %323 = vmatprep.subr.bf16.mxu0 0
        %324 = vmatpush1.bf16.msra.mxu0 0
        %325 = vmatprep.subr.bf16.mxu0 0
        %326 = vmatpush1.bf16.msra.mxu0 0
        %327 = vmatprep.subr.bf16.mxu0 0
        %328 = vmatpush1.bf16.msra.mxu0 0
        %329 = vmatprep.subr.bf16.mxu0 0
        %330 = vmatpush1.bf16.msra.mxu0 0
        %331 = vmatprep.mubr.bf16.mxu0 0
        %332 = vmatmul.mubr.bf16.gmra.mrb[0].mxu0 %v297
        %v333 = vpop.f32.mrb[0].mxu0
        %v334 = vadd.f32 %v275, %v333
        %v335 = vpop.f32.mrb[0].mxu0
        %v336 = vpop.f32.mrb[0].mxu0
        %v337 = vadd.f32 %v275, %v336
        %v338 = vpop.f32.mrb[0].mxu0
        %339 = vdwg.mxu0
        %v340 = vld [vmem:[#allocation8] sm:$0xff]
        %v341 = vld [vmem:[#allocation8 + $0x8] sm:$0xff]
        %v342 = vadd.f32 %v334, %v340
        %v343 = vadd.f32 %v337, %v341
        %vm344 = vcmask 261120
        %345 = vst.msk [vmem:[%s257] sm:$0xff] %vm344, %v342
        %346 = vst.msk [vmem:[%s257 + $0x8] sm:$0xff] %vm344, %v343
        %s347 = sand.u32 %s120, 1
        %s348 = scalar_lea.sflag [#allocation4], %s347
        %s349 = sand.u32 %s120, 1
        %s350 = smul.addr %s349, 16
        %s351 = scalar_lea.vmem [#allocation10], %s350
        // Predicated region
        $region53: #{dtrocr_forward.2} parent=35 // pred_check
          %p352 = pneg %p130
        $region54: #{dtrocr_forward.2} parent=35 // pred_check_branch
          %354 = sbr.rel (%p352) target = $region56
        $region55: #{dtrocr_forward.2} parent=35 // pred_region
          %s355 = smul.u32 2, %s23
          %s357 = ssub.s32 256, 256
          %358 = vsyncadd %s348, %s357
          %s359 = smul.addr %s355, 128
          %s360 = scalar_lea.hbm %s4, %s359
          %s361 = sshll.u32 %s351, 4
          %s362 = int_to_ptr.vmem [resolvable:$true] %s361
          %367 = dma.vmem_to_hbm [thread:$0]  %s362, 256, %s360, %s348, 128, 128, 8
        $region56: #{dtrocr_forward.2} parent=35 // pred_fallthru
          _
      $region36: #{dtrocr_forward.2} parent=5 // pred_fallthru
        _
      %p368 = scmp.le.s32.totalorder 2, %s18
      // Predicated region
      $region57: #{dtrocr_forward.2} parent=5 // pred_check
        %p369 = pneg %p368
      $region58: #{dtrocr_forward.2} parent=5 // pred_check_branch
        %371 = sbr.rel (%p369) target = $region60
      $region59: #{dtrocr_forward.2} parent=5 // pred_region
        %s372 = ssub.s32 %s18, 2
        // Predicated region
        $region61: #{dtrocr_forward.2} parent=59 // pred_check
          %p373 = pneg %p136
        $region62: #{dtrocr_forward.2} parent=59 // pred_check_branch
          %375 = sbr.rel (%p373) target = $region64
        $region63: #{dtrocr_forward.2} parent=59 // pred_region
          %s376 = sand.u32 %s121, 1
          %s377 = scalar_lea.sflag [#allocation4], %s376
          %s378 = sand.u32 %s121, 1
          %s379 = smul.addr %s378, 16
          %s380 = scalar_lea.vmem [#allocation10], %s379
          %381 = dma.done %s377, 256
        $region64: #{dtrocr_forward.2} parent=59 // pred_fallthru
          _
      $region60: #{dtrocr_forward.2} parent=5 // pred_fallthru
        _
    $region6: #{dtrocr_forward.2} parent=1 // loop_footer
      %s22 = sadd.s32 1, %s18
    $region7: #{dtrocr_forward.2} parent=1 // loop_footer_branch
      %17 = sbr.rel target = $region3
    $region8: #{dtrocr_forward.2} parent=1 // loop_exit
      _
    %382 = vsyncpa [#allocation3], 1
    %s383 = scalar_lea.sflag [#allocation3], 1
    %384 = vsyncpa %s383, 1
    %385 = vsyncpa [#allocation6], 1
    %386 = vsyncpa [#allocation9], 1
    %387 = vsyncpa [#allocation4], 1
    %s388 = scalar_lea.sflag [#allocation4], 1
    %389 = vsyncpa %s388, 1

// kernel: dtrocr_forward.3
$region0: #{dtrocr_forward.3}
  #allocation0 [shape = 'u32[]', space=smem, size = 0x4, offset = 0x4, fixed_abs, tag = 'smem constant byte address 0x4 - core index']
  #allocation1 [shape = 'u32[144,128]{1,0:T(1,128)}', space=vmem, size = 0x12000, scoped, tag = 'internal scratch']
  #allocation2 [shape = 'f32[24,32]{1,0:T(8,128)}', space=vmem, size = 0x3000, scoped, tag = 'scratch operand']
  #allocation3 [shape = 'bf16[4,24,8]{2,1,0:T(8,128)(2,1)}', space=vmem, size = 0x6000, scoped, tag = 'scratch operand']
  #allocation4 [shape = 'bf16[4,24,8]{2,1,0:T(8,128)(2,1)}', space=vmem, size = 0x6000, scoped, tag = 'scratch operand']
  #allocation5 [shape = 'bf16[4,24,8]{2,1,0:T(8,128)(2,1)}', space=vmem, size = 0x6000, scoped, tag = 'scratch operand']
  %s0 = inlined_call_operand.hbm [shape: f32[2,24,32], index: 0, kind: input, shape index: {}]
  %s1 = inlined_call_operand.hbm [shape: f32[24,24], index: 1, kind: input, shape index: {}]
  %s2 = inlined_call_operand.hbm [shape: f32[2,1,32], index: 2, kind: input, shape index: {}, may-alias: {2,8}]
  %s3 = inlined_call_operand.hbm [shape: f32[2,1,32], index: 3, kind: input, shape index: {}, may-alias: {3,7,9,13}]
  %s4 = inlined_call_operand.hbm [shape: bf16[2,32,96], index: 4, kind: input, shape index: {}]
  %s5 = inlined_call_operand.hbm [shape: f32[2,1,96], index: 5, kind: input, shape index: {}]
  %s6 = inlined_call_operand.hbm [shape: bf16[2,32,32], index: 6, kind: input, shape index: {}]
  %s7 = inlined_call_operand.hbm [shape: f32[2,1,32], index: 7, kind: input, shape index: {}, may-alias: {3,7,9,13}]
  %s8 = inlined_call_operand.hbm [shape: f32[2,1,32], index: 8, kind: input, shape index: {}, may-alias: {2,8}]
  %s9 = inlined_call_operand.hbm [shape: f32[2,1,32], index: 9, kind: input, shape index: {}, may-alias: {3,7,9,13}]
  %s10 = inlined_call_operand.hbm [shape: bf16[2,32,128], index: 10, kind: input, shape index: {}]
  %s11 = inlined_call_operand.hbm [shape: f32[2,1,128], index: 11, kind: input, shape index: {}]
  %s12 = inlined_call_operand.hbm [shape: bf16[2,128,32], index: 12, kind: input, shape index: {}]
  %s13 = inlined_call_operand.hbm [shape: f32[2,1,32], index: 13, kind: input, shape index: {}, may-alias: {3,7,9,13}]
  %s14 = inlined_call_operand.hbm [shape: f32[1,32], index: 14, kind: input, shape index: {}]
  %s15 = inlined_call_operand.hbm [shape: f32[1,32], index: 15, kind: input, shape index: {}]
  %s16 = inlined_call_operand.hbm [shape: f32[2,24,32], index: 16, kind: output, shape index: {}]
  %s17 = sld [smem:[#allocation0]]
  $region169: #{dtrocr_forward.3} parent=0
    _
  %s19 = ssub.s32 1, %s17
  %s20 = scalar_select 0, %s19, %s17
  $region1: #{dtrocr_forward.3} parent=0
    #allocation6 [shape = 'u8[24576]{0}', space=vmem, size = 0x6000, scoped, tag = 'input window, operand 0']
    #allocation7 [shape = 's32[2]{0}', space=sflag, size = 0x8, scoped, tag = 'scoped memory for dtrocr_forward.3']
    #allocation8 [shape = 's32[2]{0}', space=sflag, size = 0x8, scoped, tag = 'scoped memory for dtrocr_forward.3']
    #allocation9 [shape = 'u8[12288]{0}', space=vmem, size = 0x3000, scoped, tag = 'input window, operand 1, single buffered']
    #allocation10 [shape = 's32[1]{0}', space=sflag, size = 0x4, scoped, tag = 'scoped memory for dtrocr_forward.3']
    #allocation11 [shape = 'u8[1024]{0}', space=vmem, size = 0x400, scoped, tag = 'input window, operand 2']
    #allocation12 [shape = 'u8[1024]{0}', space=vmem, size = 0x400, scoped, tag = 'input window, operand 3']
    #allocation13 [shape = 'u8[16384]{0}', space=vmem, size = 0x4000, scoped, tag = 'input window, operand 4']
    #allocation14 [shape = 'u8[1024]{0}', space=vmem, size = 0x400, scoped, tag = 'input window, operand 5']
    #allocation15 [shape = 'u8[16384]{0}', space=vmem, size = 0x4000, scoped, tag = 'input window, operand 6']
    #allocation16 [shape = 'u8[1024]{0}', space=vmem, size = 0x400, scoped, tag = 'input window, operand 7']
    #allocation17 [shape = 'u8[1024]{0}', space=vmem, size = 0x400, scoped, tag = 'input window, operand 8']
    #allocation18 [shape = 'u8[1024]{0}', space=vmem, size = 0x400, scoped, tag = 'input window, operand 9']
    #allocation19 [shape = 'u8[16384]{0}', space=vmem, size = 0x4000, scoped, tag = 'input window, operand 10']
    #allocation20 [shape = 'u8[1024]{0}', space=vmem, size = 0x400, scoped, tag = 'input window, operand 11']
    #allocation21 [shape = 'u8[65536]{0}', space=vmem, size = 0x10000, scoped, tag = 'input window, operand 12']
    #allocation22 [shape = 'u8[1024]{0}', space=vmem, size = 0x400, scoped, tag = 'input window, operand 13']
    #allocation23 [shape = 'u8[512]{0}', space=vmem, size = 0x400, scoped, tag = 'input window, operand 14, single buffered']
    #allocation24 [shape = 'u8[512]{0}', space=vmem, size = 0x400, scoped, tag = 'input window, operand 15, single buffered']
    #allocation25 [shape = 's32[1]{0}', space=sflag, size = 0x4, scoped, tag = 'scoped memory for dtrocr_forward.3']
    #allocation26 [shape = 'u8[24576]{0}', space=vmem, size = 0x6000, scoped, tag = 'output window, operand 0']
    %21 = vsyncpa [#allocation7], 0
    %s22 = scalar_lea.sflag [#allocation7], 1
    %23 = vsyncpa %s22, 0
    %24 = vsyncpa [#allocation10], 0
    %25 = vsyncpa [#allocation25], 0
    %26 = vsyncpa [#allocation8], 0
    %s27 = scalar_lea.sflag [#allocation8], 1
    %28 = vsyncpa %s27, 0
    loop: start=0, step=1, limit=6
    $region2: #{dtrocr_forward.3} parent=1 // loop_pre_header
      _
    $region3: #{dtrocr_forward.3} parent=1 // loop_header
      %s30 = sphi 0, %s34
      %p31 = scmp.ge.s32.totalorder %s30, 6
      %s37 = sphi 0, %s49
      %s38 = sphi 0, %s45
      %s39 = sphi 0, %s37
      %s40 = sphi 0, %s38
      %s41 = sphi 0, %s39
      %s42 = sphi 0, %s40
      %s52 = sphi 0, %s54
      %s55 = sphi 0, %s52
      %s56 = sphi 0, %s55
      %s72 = sphi 0, %s56
      %s76 = sphi 0, %s76
      %s78 = sphi 0, %s76
      %s79 = sphi 0, %s78
      %s93 = sphi 0, %s79
      %s99 = sphi 0, %s101
      %s102 = sphi 0, %s99
      %s103 = sphi 0, %s102
      %s119 = sphi 0, %s103
      %s125 = sphi 0, %s127
      %s128 = sphi 0, %s125
      %s129 = sphi 0, %s128
      %s145 = sphi 0, %s129
      %s151 = sphi 0, %s153
      %s154 = sphi 0, %s151
      %s155 = sphi 0, %s154
      %s171 = sphi 0, %s155
      %s177 = sphi 0, %s179
      %s180 = sphi 0, %s177
      %s181 = sphi 0, %s180
      %s197 = sphi 0, %s181
      %s203 = sphi 0, %s205
      %s206 = sphi 0, %s203
      %s207 = sphi 0, %s206
      %s223 = sphi 0, %s207
      %s229 = sphi 0, %s231
      %s232 = sphi 0, %s229
      %s233 = sphi 0, %s232
      %s249 = sphi 0, %s233
      %s255 = sphi 0, %s257
      %s258 = sphi 0, %s255
      %s259 = sphi 0, %s258
      %s275 = sphi 0, %s259
      %s281 = sphi 0, %s283
      %s284 = sphi 0, %s281
      %s285 = sphi 0, %s284
      %s301 = sphi 0, %s285
      %s307 = sphi 0, %s309
      %s310 = sphi 0, %s307
      %s311 = sphi 0, %s310
      %s327 = sphi 0, %s311
      %s333 = sphi 0, %s335
      %s336 = sphi 0, %s333
      %s337 = sphi 0, %s336
      %s353 = sphi 0, %s337
      %s359 = sphi 0, %s361
      %s362 = sphi 0, %s359
      %s363 = sphi 0, %s362
      %s379 = sphi 0, %s363
      %s385 = sphi 0, %s387
      %s388 = sphi 0, %s385
      %s389 = sphi 0, %s388
      %s405 = sphi 0, %s389
      %s409 = sphi 0, %s409
      %s411 = sphi 0, %s409
      %s412 = sphi 0, %s411
      %s426 = sphi 0, %s412
      %s430 = sphi 0, %s430
      %s432 = sphi 0, %s430
      %s433 = sphi 0, %s432
      %s447 = sphi 0, %s433
      %s453 = sphi 0, %s455
      %s456 = sphi 0, %s453
      %s457 = sphi 0, %s456
      %s473 = sphi 0, %s457
    $region4: #{dtrocr_forward.3} parent=1 // loop_header_branch
      %33 = sbr.rel (%p31) target = $region8
    $region5: #{dtrocr_forward.3} parent=1 // loop_body
      %s35 = ssub.s32 %s30, 1
      %s36 = ssub.s32 %s30, 2
      %s43 = sadd.s32 1, %s38
      %p44 = scmp.ge.s32.totalorder %s43, 2
      %s45 = scalar_select %p44, 0, %s43
      %s46 = sadd.s32 1, %s37
      %s47 = scalar_select %p44, %s46, %s37
      %p48 = scmp.ge.s32.totalorder %s47, 2
      %s49 = scalar_select %p48, 0, %s47
      %s50 = ssub.s32 %s37, %s49
      %p51 = scmp.eq.s32.totalorder %s50, 0
      %s53 = sadd.s32 %s52, 1
      %s54 = scalar_select %p51, %s52, %s53
      %p57 = pneg %p51
      %p58 = scmp.eq.s32.totalorder %s30, 3
      %p59 = por %p57, %p58
      %p60 = scmp.ne.s32.totalorder %s52, %s55
      %p61 = scmp.eq.s32.totalorder %s30, 0
      %p62 = por %p60, %p61
      %p63 = scmp.ne.s32.totalorder %s52, %s55
      %p64 = scmp.eq.s32.totalorder %s35, 3
      %p65 = por %p63, %p64
      %p66 = scmp.ne.s32.totalorder %s55, %s56
      %p67 = scmp.eq.s32.totalorder %s35, 0
      %p68 = por %p66, %p67
      %p69 = scmp.ne.s32.totalorder %s55, %s56
      %p70 = scmp.eq.s32.totalorder %s36, 3
      %p71 = por %p69, %p70
      %p73 = scmp.ne.s32.totalorder %s56, %s72
      %p74 = scmp.eq.s32.totalorder %s36, 0
      %p75 = por %p73, %p74
      %s77 = sadd.s32 %s76, 1
      %p80 = scmp.eq.s32.totalorder %s30, 3
      %p81 = scmp.ne.s32.totalorder %s76, %s78
      %p82 = scmp.eq.s32.totalorder %s30, 0
      %p83 = por %p81, %p82
      %p84 = scmp.ne.s32.totalorder %s76, %s78
      %p85 = scmp.eq.s32.totalorder %s35, 3
      %p86 = por %p84, %p85
      %p87 = scmp.ne.s32.totalorder %s78, %s79
      %p88 = scmp.eq.s32.totalorder %s35, 0
      %p89 = por %p87, %p88
      %p90 = scmp.ne.s32.totalorder %s78, %s79
      %p91 = scmp.eq.s32.totalorder %s36, 3
      %p92 = por %p90, %p91
      %p94 = scmp.ne.s32.totalorder %s79, %s93
      %p95 = scmp.eq.s32.totalorder %s36, 0
      %p96 = por %p94, %p95
      %s97 = ssub.s32 %s38, %s45
      %p98 = scmp.eq.s32.totalorder %s97, 0
      %s100 = sadd.s32 %s99, 1
      %s101 = scalar_select %p98, %s99, %s100
      %p104 = pneg %p98
      %p105 = scmp.eq.s32.totalorder %s30, 3
      %p106 = por %p104, %p105
      %p107 = scmp.ne.s32.totalorder %s99, %s102
      %p108 = scmp.eq.s32.totalorder %s30, 0
      %p109 = por %p107, %p108
      %p110 = scmp.ne.s32.totalorder %s99, %s102
      %p111 = scmp.eq.s32.totalorder %s35, 3
      %p112 = por %p110, %p111
      %p113 = scmp.ne.s32.totalorder %s102, %s103
      %p114 = scmp.eq.s32.totalorder %s35, 0
      %p115 = por %p113, %p114
      %p116 = scmp.ne.s32.totalorder %s102, %s103
      %p117 = scmp.eq.s32.totalorder %s36, 3
      %p118 = por %p116, %p117
      %p120 = scmp.ne.s32.totalorder %s103, %s119
      %p121 = scmp.eq.s32.totalorder %s36, 0
      %p122 = por %p120, %p121
      %s123 = ssub.s32 %s38, %s45
      %p124 = scmp.eq.s32.totalorder %s123, 0
      %s126 = sadd.s32 %s125, 1
      %s127 = scalar_select %p124, %s125, %s126
      %p130 = pneg %p124
      %p131 = scmp.eq.s32.totalorder %s30, 3
      %p132 = por %p130, %p131
      %p133 = scmp.ne.s32.totalorder %s125, %s128
      %p134 = scmp.eq.s32.totalorder %s30, 0
      %p135 = por %p133, %p134
      %p136 = scmp.ne.s32.totalorder %s125, %s128
      %p137 = scmp.eq.s32.totalorder %s35, 3
      %p138 = por %p136, %p137
      %p139 = scmp.ne.s32.totalorder %s128, %s129
      %p140 = scmp.eq.s32.totalorder %s35, 0
      %p141 = por %p139, %p140
      %p142 = scmp.ne.s32.totalorder %s128, %s129
      %p143 = scmp.eq.s32.totalorder %s36, 3
      %p144 = por %p142, %p143
      %p146 = scmp.ne.s32.totalorder %s129, %s145
      %p147 = scmp.eq.s32.totalorder %s36, 0
      %p148 = por %p146, %p147
      %s149 = ssub.s32 %s38, %s45
      %p150 = scmp.eq.s32.totalorder %s149, 0
      %s152 = sadd.s32 %s151, 1
      %s153 = scalar_select %p150, %s151, %s152
      %p156 = pneg %p150
      %p157 = scmp.eq.s32.totalorder %s30, 3
      %p158 = por %p156, %p157
      %p159 = scmp.ne.s32.totalorder %s151, %s154
      %p160 = scmp.eq.s32.totalorder %s30, 0
      %p161 = por %p159, %p160
      %p162 = scmp.ne.s32.totalorder %s151, %s154
      %p163 = scmp.eq.s32.totalorder %s35, 3
      %p164 = por %p162, %p163
      %p165 = scmp.ne.s32.totalorder %s154, %s155
      %p166 = scmp.eq.s32.totalorder %s35, 0
      %p167 = por %p165, %p166
      %p168 = scmp.ne.s32.totalorder %s154, %s155
      %p169 = scmp.eq.s32.totalorder %s36, 3
      %p170 = por %p168, %p169
      %p172 = scmp.ne.s32.totalorder %s155, %s171
      %p173 = scmp.eq.s32.totalorder %s36, 0
      %p174 = por %p172, %p173
      %s175 = ssub.s32 %s38, %s45
      %p176 = scmp.eq.s32.totalorder %s175, 0
      %s178 = sadd.s32 %s177, 1
      %s179 = scalar_select %p176, %s177, %s178
      %p182 = pneg %p176
      %p183 = scmp.eq.s32.totalorder %s30, 3
      %p184 = por %p182, %p183
      %p185 = scmp.ne.s32.totalorder %s177, %s180
      %p186 = scmp.eq.s32.totalorder %s30, 0
      %p187 = por %p185, %p186
      %p188 = scmp.ne.s32.totalorder %s177, %s180
      %p189 = scmp.eq.s32.totalorder %s35, 3
      %p190 = por %p188, %p189
      %p191 = scmp.ne.s32.totalorder %s180, %s181
      %p192 = scmp.eq.s32.totalorder %s35, 0
      %p193 = por %p191, %p192
      %p194 = scmp.ne.s32.totalorder %s180, %s181
      %p195 = scmp.eq.s32.totalorder %s36, 3
      %p196 = por %p194, %p195
      %p198 = scmp.ne.s32.totalorder %s181, %s197
      %p199 = scmp.eq.s32.totalorder %s36, 0
      %p200 = por %p198, %p199
      %s201 = ssub.s32 %s38, %s45
      %p202 = scmp.eq.s32.totalorder %s201, 0
      %s204 = sadd.s32 %s203, 1
      %s205 = scalar_select %p202, %s203, %s204
      %p208 = pneg %p202
      %p209 = scmp.eq.s32.totalorder %s30, 3
      %p210 = por %p208, %p209
      %p211 = scmp.ne.s32.totalorder %s203, %s206
      %p212 = scmp.eq.s32.totalorder %s30, 0
      %p213 = por %p211, %p212
      %p214 = scmp.ne.s32.totalorder %s203, %s206
      %p215 = scmp.eq.s32.totalorder %s35, 3
      %p216 = por %p214, %p215
      %p217 = scmp.ne.s32.totalorder %s206, %s207
      %p218 = scmp.eq.s32.totalorder %s35, 0
      %p219 = por %p217, %p218
      %p220 = scmp.ne.s32.totalorder %s206, %s207
      %p221 = scmp.eq.s32.totalorder %s36, 3
      %p222 = por %p220, %p221
      %p224 = scmp.ne.s32.totalorder %s207, %s223
      %p225 = scmp.eq.s32.totalorder %s36, 0
      %p226 = por %p224, %p225
      %s227 = ssub.s32 %s38, %s45
      %p228 = scmp.eq.s32.totalorder %s227, 0
      %s230 = sadd.s32 %s229, 1
      %s231 = scalar_select %p228, %s229, %s230
      %p234 = pneg %p228
      %p235 = scmp.eq.s32.totalorder %s30, 3
      %p236 = por %p234, %p235
      %p237 = scmp.ne.s32.totalorder %s229, %s232
      %p238 = scmp.eq.s32.totalorder %s30, 0
      %p239 = por %p237, %p238
      %p240 = scmp.ne.s32.totalorder %s229, %s232
      %p241 = scmp.eq.s32.totalorder %s35, 3
      %p242 = por %p240, %p241
      %p243 = scmp.ne.s32.totalorder %s232, %s233
      %p244 = scmp.eq.s32.totalorder %s35, 0
      %p245 = por %p243, %p244
      %p246 = scmp.ne.s32.totalorder %s232, %s233
      %p247 = scmp.eq.s32.totalorder %s36, 3
      %p248 = por %p246, %p247
      %p250 = scmp.ne.s32.totalorder %s233, %s249
      %p251 = scmp.eq.s32.totalorder %s36, 0
      %p252 = por %p250, %p251
      %s253 = ssub.s32 %s38, %s45
      %p254 = scmp.eq.s32.totalorder %s253, 0
      %s256 = sadd.s32 %s255, 1
      %s257 = scalar_select %p254, %s255, %s256
      %p260 = pneg %p254
      %p261 = scmp.eq.s32.totalorder %s30, 3
      %p262 = por %p260, %p261
      %p263 = scmp.ne.s32.totalorder %s255, %s258
      %p264 = scmp.eq.s32.totalorder %s30, 0
      %p265 = por %p263, %p264
      %p266 = scmp.ne.s32.totalorder %s255, %s258
      %p267 = scmp.eq.s32.totalorder %s35, 3
      %p268 = por %p266, %p267
      %p269 = scmp.ne.s32.totalorder %s258, %s259
      %p270 = scmp.eq.s32.totalorder %s35, 0
      %p271 = por %p269, %p270
      %p272 = scmp.ne.s32.totalorder %s258, %s259
      %p273 = scmp.eq.s32.totalorder %s36, 3
      %p274 = por %p272, %p273
      %p276 = scmp.ne.s32.totalorder %s259, %s275
      %p277 = scmp.eq.s32.totalorder %s36, 0
      %p278 = por %p276, %p277
      %s279 = ssub.s32 %s38, %s45
      %p280 = scmp.eq.s32.totalorder %s279, 0
      %s282 = sadd.s32 %s281, 1
      %s283 = scalar_select %p280, %s281, %s282
      %p286 = pneg %p280
      %p287 = scmp.eq.s32.totalorder %s30, 3
      %p288 = por %p286, %p287
      %p289 = scmp.ne.s32.totalorder %s281, %s284
      %p290 = scmp.eq.s32.totalorder %s30, 0
      %p291 = por %p289, %p290
      %p292 = scmp.ne.s32.totalorder %s281, %s284
      %p293 = scmp.eq.s32.totalorder %s35, 3
      %p294 = por %p292, %p293
      %p295 = scmp.ne.s32.totalorder %s284, %s285
      %p296 = scmp.eq.s32.totalorder %s35, 0
      %p297 = por %p295, %p296
      %p298 = scmp.ne.s32.totalorder %s284, %s285
      %p299 = scmp.eq.s32.totalorder %s36, 3
      %p300 = por %p298, %p299
      %p302 = scmp.ne.s32.totalorder %s285, %s301
      %p303 = scmp.eq.s32.totalorder %s36, 0
      %p304 = por %p302, %p303
      %s305 = ssub.s32 %s38, %s45
      %p306 = scmp.eq.s32.totalorder %s305, 0
      %s308 = sadd.s32 %s307, 1
      %s309 = scalar_select %p306, %s307, %s308
      %p312 = pneg %p306
      %p313 = scmp.eq.s32.totalorder %s30, 3
      %p314 = por %p312, %p313
      %p315 = scmp.ne.s32.totalorder %s307, %s310
      %p316 = scmp.eq.s32.totalorder %s30, 0
      %p317 = por %p315, %p316
      %p318 = scmp.ne.s32.totalorder %s307, %s310
      %p319 = scmp.eq.s32.totalorder %s35, 3
      %p320 = por %p318, %p319
      %p321 = scmp.ne.s32.totalorder %s310, %s311
      %p322 = scmp.eq.s32.totalorder %s35, 0
      %p323 = por %p321, %p322
      %p324 = scmp.ne.s32.totalorder %s310, %s311
      %p325 = scmp.eq.s32.totalorder %s36, 3
      %p326 = por %p324, %p325
      %p328 = scmp.ne.s32.totalorder %s311, %s327
      %p329 = scmp.eq.s32.totalorder %s36, 0
      %p330 = por %p328, %p329
      %s331 = ssub.s32 %s38, %s45
      %p332 = scmp.eq.s32.totalorder %s331, 0
      %s334 = sadd.s32 %s333, 1
      %s335 = scalar_select %p332, %s333, %s334
      %p338 = pneg %p332
      %p339 = scmp.eq.s32.totalorder %s30, 3
      %p340 = por %p338, %p339
      %p341 = scmp.ne.s32.totalorder %s333, %s336
      %p342 = scmp.eq.s32.totalorder %s30, 0
      %p343 = por %p341, %p342
      %p344 = scmp.ne.s32.totalorder %s333, %s336
      %p345 = scmp.eq.s32.totalorder %s35, 3
      %p346 = por %p344, %p345
      %p347 = scmp.ne.s32.totalorder %s336, %s337
      %p348 = scmp.eq.s32.totalorder %s35, 0
      %p349 = por %p347, %p348
      %p350 = scmp.ne.s32.totalorder %s336, %s337
      %p351 = scmp.eq.s32.totalorder %s36, 3
      %p352 = por %p350, %p351
      %p354 = scmp.ne.s32.totalorder %s337, %s353
      %p355 = scmp.eq.s32.totalorder %s36, 0
      %p356 = por %p354, %p355
      %s357 = ssub.s32 %s38, %s45
      %p358 = scmp.eq.s32.totalorder %s357, 0
      %s360 = sadd.s32 %s359, 1
      %s361 = scalar_select %p358, %s359, %s360
      %p364 = pneg %p358
      %p365 = scmp.eq.s32.totalorder %s30, 3
      %p366 = por %p364, %p365
      %p367 = scmp.ne.s32.totalorder %s359, %s362
      %p368 = scmp.eq.s32.totalorder %s30, 0
      %p369 = por %p367, %p368
      %p370 = scmp.ne.s32.totalorder %s359, %s362
      %p371 = scmp.eq.s32.totalorder %s35, 3
      %p372 = por %p370, %p371
      %p373 = scmp.ne.s32.totalorder %s362, %s363
      %p374 = scmp.eq.s32.totalorder %s35, 0
      %p375 = por %p373, %p374
      %p376 = scmp.ne.s32.totalorder %s362, %s363
      %p377 = scmp.eq.s32.totalorder %s36, 3
      %p378 = por %p376, %p377
      %p380 = scmp.ne.s32.totalorder %s363, %s379
      %p381 = scmp.eq.s32.totalorder %s36, 0
      %p382 = por %p380, %p381
      %s383 = ssub.s32 %s38, %s45
      %p384 = scmp.eq.s32.totalorder %s383, 0
      %s386 = sadd.s32 %s385, 1
      %s387 = scalar_select %p384, %s385, %s386
      %p390 = pneg %p384
      %p391 = scmp.eq.s32.totalorder %s30, 3
      %p392 = por %p390, %p391
      %p393 = scmp.ne.s32.totalorder %s385, %s388
      %p394 = scmp.eq.s32.totalorder %s30, 0
      %p395 = por %p393, %p394
      %p396 = scmp.ne.s32.totalorder %s385, %s388
      %p397 = scmp.eq.s32.totalorder %s35, 3
      %p398 = por %p396, %p397
      %p399 = scmp.ne.s32.totalorder %s388, %s389
      %p400 = scmp.eq.s32.totalorder %s35, 0
      %p401 = por %p399, %p400
      %p402 = scmp.ne.s32.totalorder %s388, %s389
      %p403 = scmp.eq.s32.totalorder %s36, 3
      %p404 = por %p402, %p403
      %p406 = scmp.ne.s32.totalorder %s389, %s405
      %p407 = scmp.eq.s32.totalorder %s36, 0
      %p408 = por %p406, %p407
      %s410 = sadd.s32 %s409, 1
      %p413 = scmp.eq.s32.totalorder %s30, 3
      %p414 = scmp.ne.s32.totalorder %s409, %s411
      %p415 = scmp.eq.s32.totalorder %s30, 0
      %p416 = por %p414, %p415
      %p417 = scmp.ne.s32.totalorder %s409, %s411
      %p418 = scmp.eq.s32.totalorder %s35, 3
      %p419 = por %p417, %p418
      %p420 = scmp.ne.s32.totalorder %s411, %s412
      %p421 = scmp.eq.s32.totalorder %s35, 0
      %p422 = por %p420, %p421
      %p423 = scmp.ne.s32.totalorder %s411, %s412
      %p424 = scmp.eq.s32.totalorder %s36, 3
      %p425 = por %p423, %p424
      %p427 = scmp.ne.s32.totalorder %s412, %s426
      %p428 = scmp.eq.s32.totalorder %s36, 0
      %p429 = por %p427, %p428
      %s431 = sadd.s32 %s430, 1
      %p434 = scmp.eq.s32.totalorder %s30, 3
      %p435 = scmp.ne.s32.totalorder %s430, %s432
      %p436 = scmp.eq.s32.totalorder %s30, 0
      %p437 = por %p435, %p436
      %p438 = scmp.ne.s32.totalorder %s430, %s432
      %p439 = scmp.eq.s32.totalorder %s35, 3
      %p440 = por %p438, %p439
      %p441 = scmp.ne.s32.totalorder %s432, %s433
      %p442 = scmp.eq.s32.totalorder %s35, 0
      %p443 = por %p441, %p442
      %p444 = scmp.ne.s32.totalorder %s432, %s433
      %p445 = scmp.eq.s32.totalorder %s36, 3
      %p446 = por %p444, %p445
      %p448 = scmp.ne.s32.totalorder %s433, %s447
      %p449 = scmp.eq.s32.totalorder %s36, 0
      %p450 = por %p448, %p449
      %s451 = ssub.s32 %s37, %s49
      %p452 = scmp.eq.s32.totalorder %s451, 0
      %s454 = sadd.s32 %s453, 1
      %s455 = scalar_select %p452, %s453, %s454
      %p458 = pneg %p452
      %p459 = scmp.eq.s32.totalorder %s30, 3
      %p460 = por %p458, %p459
      %p461 = scmp.ne.s32.totalorder %s453, %s456
      %p462 = scmp.eq.s32.totalorder %s30, 0
      %p463 = por %p461, %p462
      %p464 = scmp.ne.s32.totalorder %s453, %s456
      %p465 = scmp.eq.s32.totalorder %s35, 3
      %p466 = por %p464, %p465
      %p467 = scmp.ne.s32.totalorder %s456, %s457
      %p468 = scmp.eq.s32.totalorder %s35, 0
      %p469 = por %p467, %p468
      %p470 = scmp.ne.s32.totalorder %s456, %s457
      %p471 = scmp.eq.s32.totalorder %s36, 3
      %p472 = por %p470, %p471
      %p474 = scmp.ne.s32.totalorder %s457, %s473
      %p475 = scmp.eq.s32.totalorder %s36, 0
      %p476 = por %p474, %p475
      %p477 = scmp.le.s32.totalorder 1, %s30
      %p478 = scmp.lt.s32.totalorder %s30, 5
      %p479 = pnand %p477, %p478
      %p480 = pneg %p479
      // Predicated region
      $region9: #{dtrocr_forward.3} parent=5 // pred_check
        _
      $region10: #{dtrocr_forward.3} parent=5 // pred_check_branch
        %482 = sbr.rel (%p479) target = $region12
      $region11: #{dtrocr_forward.3} parent=5 // pred_region
        %s483 = ssub.s32 %s30, 1
        // Predicated region
        $region13: #{dtrocr_forward.3} parent=11 // pred_check
          %p484 = pneg %p89
        $region14: #{dtrocr_forward.3} parent=11 // pred_check_branch
          %486 = sbr.rel (%p484) target = $region16
        $region15: #{dtrocr_forward.3} parent=11 // pred_region
          %s488 = ssub.s32 384, 384
          %489 = vsyncadd [#allocation10], %s488
          %s490 = sshll.u32 [#allocation9], 4
          %s491 = int_to_ptr.vmem [resolvable:$true] %s490
          %496 = dma.hbm_to_vmem [thread:$0]  %s1, 384, %s491, [#allocation10], 128, 128, 8
        $region16: #{dtrocr_forward.3} parent=11 // pred_fallthru
          _
        // Predicated region
        $region17: #{dtrocr_forward.3} parent=11 // pred_check
          %p497 = pneg %p422
        $region18: #{dtrocr_forward.3} parent=11 // pred_check_branch
          %499 = sbr.rel (%p497) target = $region20
        $region19: #{dtrocr_forward.3} parent=11 // pred_region
          %s501 = ssub.s32 16, 16
          %502 = vsyncadd [#allocation10], %s501
          %s504 = sshll.u32 [#allocation23], 4
          %s505 = int_to_ptr.vmem [resolvable:$true] %s504
          %507 = dma.hbm_to_vmem [thread:$0]  %s14, 16, %s505, [#allocation10]
        $region20: #{dtrocr_forward.3} parent=11 // pred_fallthru
          _
        // Predicated region
        $region21: #{dtrocr_forward.3} parent=11 // pred_check
          %p508 = pneg %p443
        $region22: #{dtrocr_forward.3} parent=11 // pred_check_branch
          %510 = sbr.rel (%p508) target = $region24
        $region23: #{dtrocr_forward.3} parent=11 // pred_region
          %s512 = ssub.s32 16, 16
          %513 = vsyncadd [#allocation25], %s512
          %s515 = sshll.u32 [#allocation24], 4
          %s516 = int_to_ptr.vmem [resolvable:$true] %s515
          %518 = dma.hbm_to_vmem [thread:$0]  %s15, 16, %s516, [#allocation25]
        $region24: #{dtrocr_forward.3} parent=11 // pred_fallthru
          _
      $region12: #{dtrocr_forward.3} parent=5 // pred_fallthru
        _
      %p519 = scmp.lt.s32.totalorder %s30, 4
      // Predicated region
      $region25: #{dtrocr_forward.3} parent=5 // pred_check
        %p520 = pneg %p519
      $region26: #{dtrocr_forward.3} parent=5 // pred_check_branch
        %522 = sbr.rel (%p520) target = $region28
      $region27: #{dtrocr_forward.3} parent=5 // pred_region
        // Predicated region
        $region29: #{dtrocr_forward.3} parent=27 // pred_check
          %p523 = pneg %p62
        $region30: #{dtrocr_forward.3} parent=27 // pred_check_branch
          %525 = sbr.rel (%p523) target = $region32
        $region31: #{dtrocr_forward.3} parent=27 // pred_region
          %s526 = sand.u32 %s30, 1
          %s527 = scalar_lea.sflag [#allocation7], %s526
          %s528 = sand.u32 %s52, 1
          %s529 = smul.addr %s528, 24
          %s530 = scalar_lea.vmem [#allocation6], %s529
          %s532 = ssub.s32 384, 384
          %533 = vsyncadd %s527, %s532
          %s534 = smul.addr %s37, 3
          %s535 = smul.addr %s534, 128
          %s536 = scalar_lea.hbm %s0, %s535
          %s537 = sshll.u32 %s530, 4
          %s538 = int_to_ptr.vmem [resolvable:$true] %s537
          %543 = dma.hbm_to_vmem [thread:$0]  %s536, 384, %s538, %s527, 128, 128, 8
        $region32: #{dtrocr_forward.3} parent=27 // pred_fallthru
          _
        // Predicated region
        $region33: #{dtrocr_forward.3} parent=27 // pred_check
          %p544 = pneg %p109
        $region34: #{dtrocr_forward.3} parent=27 // pred_check_branch
          %546 = sbr.rel (%p544) target = $region36
        $region35: #{dtrocr_forward.3} parent=27 // pred_region
          %s547 = sand.u32 %s30, 1
          %s548 = scalar_lea.sflag [#allocation7], %s547
          %s549 = sand.u32 %s99, 1
          %s550 = scalar_lea.vmem [#allocation11], %s549
          %s552 = ssub.s32 16, 16
          %553 = vsyncadd %s548, %s552
          %s554 = smul.addr %s38, 16
          %s555 = scalar_lea.hbm %s2, %s554
          %s557 = sshll.u32 %s550, 4
          %s558 = int_to_ptr.vmem [resolvable:$true] %s557
          %560 = dma.hbm_to_vmem [thread:$0]  %s555, 16, %s558, %s548
        $region36: #{dtrocr_forward.3} parent=27 // pred_fallthru
          _
        // Predicated region
        $region37: #{dtrocr_forward.3} parent=27 // pred_check
          %p561 = pneg %p135
        $region38: #{dtrocr_forward.3} parent=27 // pred_check_branch
          %563 = sbr.rel (%p561) target = $region40
        $region39: #{dtrocr_forward.3} parent=27 // pred_region
          %s564 = sand.u32 %s30, 1
          %s565 = scalar_lea.sflag [#allocation7], %s564
          %s566 = sand.u32 %s125, 1
          %s567 = scalar_lea.vmem [#allocation12], %s566
          %s569 = ssub.s32 16, 16
          %570 = vsyncadd %s565, %s569
          %s571 = smul.addr %s38, 16
          %s572 = scalar_lea.hbm %s3, %s571
          %s574 = sshll.u32 %s567, 4
          %s575 = int_to_ptr.vmem [resolvable:$true] %s574
          %577 = dma.hbm_to_vmem [thread:$0]  %s572, 16, %s575, %s565
        $region40: #{dtrocr_forward.3} parent=27 // pred_fallthru
          _
        // Predicated region
        $region41: #{dtrocr_forward.3} parent=27 // pred_check
          %p578 = pneg %p161
        $region42: #{dtrocr_forward.3} parent=27 // pred_check_branch
          %580 = sbr.rel (%p578) target = $region44
        $region43: #{dtrocr_forward.3} parent=27 // pred_region
          %s581 = sand.u32 %s30, 1
          %s582 = scalar_lea.sflag [#allocation7], %s581
          %s583 = sand.u32 %s151, 1
          %s584 = smul.addr %s583, 16
          %s585 = scalar_lea.vmem [#allocation13], %s584
          %s587 = ssub.s32 256, 256
          %588 = vsyncadd %s582, %s587
          %s589 = smul.addr %s38, 4
          %s590 = smul.addr %s589, 64
          %s591 = scalar_lea.hbm %s4, %s590
          %s592 = sshll.u32 %s585, 4
          %s593 = int_to_ptr.vmem [resolvable:$true] %s592
          %598 = dma.hbm_to_vmem [thread:$0]  %s591, 256, %s593, %s582, 64, 64, 4
        $region44: #{dtrocr_forward.3} parent=27 // pred_fallthru
          _
        // Predicated region
        $region45: #{dtrocr_forward.3} parent=27 // pred_check
          %p599 = pneg %p187
        $region46: #{dtrocr_forward.3} parent=27 // pred_check_branch
          %601 = sbr.rel (%p599) target = $region48
        $region47: #{dtrocr_forward.3} parent=27 // pred_region
          %s602 = sand.u32 %s30, 1
          %s603 = scalar_lea.sflag [#allocation7], %s602
          %s604 = sand.u32 %s177, 1
          %s605 = scalar_lea.vmem [#allocation14], %s604
          %s607 = ssub.s32 16, 16
          %608 = vsyncadd %s603, %s607
          %s609 = smul.addr %s38, 16
          %s610 = scalar_lea.hbm %s5, %s609
          %s612 = sshll.u32 %s605, 4
          %s613 = int_to_ptr.vmem [resolvable:$true] %s612
          %615 = dma.hbm_to_vmem [thread:$0]  %s610, 16, %s613, %s603
        $region48: #{dtrocr_forward.3} parent=27 // pred_fallthru
          _
        // Predicated region
        $region49: #{dtrocr_forward.3} parent=27 // pred_check
          %p616 = pneg %p213
        $region50: #{dtrocr_forward.3} parent=27 // pred_check_branch
          %618 = sbr.rel (%p616) target = $region52
        $region51: #{dtrocr_forward.3} parent=27 // pred_region
          %s619 = sand.u32 %s30, 1
          %s620 = scalar_lea.sflag [#allocation7], %s619
          %s621 = sand.u32 %s203, 1
          %s622 = smul.addr %s621, 16
          %s623 = scalar_lea.vmem [#allocation15], %s622
          %s625 = ssub.s32 256, 256
          %626 = vsyncadd %s620, %s625
          %s627 = smul.addr %s38, 4
          %s628 = smul.addr %s627, 64
          %s629 = scalar_lea.hbm %s6, %s628
          %s630 = sshll.u32 %s623, 4
          %s631 = int_to_ptr.vmem [resolvable:$true] %s630
          %636 = dma.hbm_to_vmem [thread:$0]  %s629, 256, %s631, %s620, 64, 64, 4
        $region52: #{dtrocr_forward.3} parent=27 // pred_fallthru
          _
        // Predicated region
        $region53: #{dtrocr_forward.3} parent=27 // pred_check
          %p637 = pneg %p239
        $region54: #{dtrocr_forward.3} parent=27 // pred_check_branch
          %639 = sbr.rel (%p637) target = $region56
        $region55: #{dtrocr_forward.3} parent=27 // pred_region
          %s640 = sand.u32 %s30, 1
          %s641 = scalar_lea.sflag [#allocation7], %s640
          %s642 = sand.u32 %s229, 1
          %s643 = scalar_lea.vmem [#allocation16], %s642
          %s645 = ssub.s32 16, 16
          %646 = vsyncadd %s641, %s645
          %s647 = smul.addr %s38, 16
          %s648 = scalar_lea.hbm %s7, %s647
          %s650 = sshll.u32 %s643, 4
          %s651 = int_to_ptr.vmem [resolvable:$true] %s650
          %653 = dma.hbm_to_vmem [thread:$0]  %s648, 16, %s651, %s641
        $region56: #{dtrocr_forward.3} parent=27 // pred_fallthru
          _
        // Predicated region
        $region57: #{dtrocr_forward.3} parent=27 // pred_check
          %p654 = pneg %p265
        $region58: #{dtrocr_forward.3} parent=27 // pred_check_branch
          %656 = sbr.rel (%p654) target = $region60
        $region59: #{dtrocr_forward.3} parent=27 // pred_region
          %s657 = sand.u32 %s30, 1
          %s658 = scalar_lea.sflag [#allocation7], %s657
          %s659 = sand.u32 %s255, 1
          %s660 = scalar_lea.vmem [#allocation17], %s659
          %s662 = ssub.s32 16, 16
          %663 = vsyncadd %s658, %s662
          %s664 = smul.addr %s38, 16
          %s665 = scalar_lea.hbm %s8, %s664
          %s667 = sshll.u32 %s660, 4
          %s668 = int_to_ptr.vmem [resolvable:$true] %s667
          %670 = dma.hbm_to_vmem [thread:$0]  %s665, 16, %s668, %s658
        $region60: #{dtrocr_forward.3} parent=27 // pred_fallthru
          _
        // Predicated region
        $region61: #{dtrocr_forward.3} parent=27 // pred_check
          %p671 = pneg %p291
        $region62: #{dtrocr_forward.3} parent=27 // pred_check_branch
          %673 = sbr.rel (%p671) target = $region64
        $region63: #{dtrocr_forward.3} parent=27 // pred_region
          %s674 = sand.u32 %s30, 1
          %s675 = scalar_lea.sflag [#allocation7], %s674
          %s676 = sand.u32 %s281, 1
          %s677 = scalar_lea.vmem [#allocation18], %s676
          %s679 = ssub.s32 16, 16
          %680 = vsyncadd %s675, %s679
          %s681 = smul.addr %s38, 16
          %s682 = scalar_lea.hbm %s9, %s681
          %s684 = sshll.u32 %s677, 4
          %s685 = int_to_ptr.vmem [resolvable:$true] %s684
          %687 = dma.hbm_to_vmem [thread:$0]  %s682, 16, %s685, %s675
        $region64: #{dtrocr_forward.3} parent=27 // pred_fallthru
          _
        // Predicated region
        $region65: #{dtrocr_forward.3} parent=27 // pred_check
          %p688 = pneg %p317
        $region66: #{dtrocr_forward.3} parent=27 // pred_check_branch
          %690 = sbr.rel (%p688) target = $region68
        $region67: #{dtrocr_forward.3} parent=27 // pred_region
          %s691 = sand.u32 %s30, 1
          %s692 = scalar_lea.sflag [#allocation7], %s691
          %s693 = sand.u32 %s307, 1
          %s694 = smul.addr %s693, 16
          %s695 = scalar_lea.vmem [#allocation19], %s694
          %s697 = ssub.s32 256, 256
          %698 = vsyncadd %s692, %s697
          %s699 = smul.addr %s38, 4
          %s700 = smul.addr %s699, 64
          %s701 = scalar_lea.hbm %s10, %s700
          %s702 = sshll.u32 %s695, 4
          %s703 = int_to_ptr.vmem [resolvable:$true] %s702
          %708 = dma.hbm_to_vmem [thread:$0]  %s701, 256, %s703, %s692, 64, 64, 4
        $region68: #{dtrocr_forward.3} parent=27 // pred_fallthru
          _
        // Predicated region
        $region69: #{dtrocr_forward.3} parent=27 // pred_check
          %p709 = pneg %p343
        $region70: #{dtrocr_forward.3} parent=27 // pred_check_branch
          %711 = sbr.rel (%p709) target = $region72
        $region71: #{dtrocr_forward.3} parent=27 // pred_region
          %s712 = sand.u32 %s30, 1
          %s713 = scalar_lea.sflag [#allocation7], %s712
          %s714 = sand.u32 %s333, 1
          %s715 = scalar_lea.vmem [#allocation20], %s714
          %s717 = ssub.s32 16, 16
          %718 = vsyncadd %s713, %s717
          %s719 = smul.addr %s38, 16
          %s720 = scalar_lea.hbm %s11, %s719
          %s722 = sshll.u32 %s715, 4
          %s723 = int_to_ptr.vmem [resolvable:$true] %s722
          %725 = dma.hbm_to_vmem [thread:$0]  %s720, 16, %s723, %s713
        $region72: #{dtrocr_forward.3} parent=27 // pred_fallthru
          _
        // Predicated region
        $region73: #{dtrocr_forward.3} parent=27 // pred_check
          %p726 = pneg %p369
        $region74: #{dtrocr_forward.3} parent=27 // pred_check_branch
          %728 = sbr.rel (%p726) target = $region76
        $region75: #{dtrocr_forward.3} parent=27 // pred_region
          %s729 = sand.u32 %s30, 1
          %s730 = scalar_lea.sflag [#allocation7], %s729
          %s731 = sand.u32 %s359, 1
          %s732 = smul.addr %s731, 64
          %s733 = scalar_lea.vmem [#allocation21], %s732
          %s735 = ssub.s32 1024, 1024
          %736 = vsyncadd %s730, %s735
          %s737 = smul.addr %s38, 16
          %s738 = smul.addr %s737, 64
          %s739 = scalar_lea.hbm %s12, %s738
          %s740 = sshll.u32 %s733, 4
          %s741 = int_to_ptr.vmem [resolvable:$true] %s740
          %746 = dma.hbm_to_vmem [thread:$0]  %s739, 1024, %s741, %s730, 64, 64, 4
        $region76: #{dtrocr_forward.3} parent=27 // pred_fallthru
          _
        // Predicated region
        $region77: #{dtrocr_forward.3} parent=27 // pred_check
          %p747 = pneg %p395
        $region78: #{dtrocr_forward.3} parent=27 // pred_check_branch
          %749 = sbr.rel (%p747) target = $region80
        $region79: #{dtrocr_forward.3} parent=27 // pred_region
          %s750 = sand.u32 %s30, 1
          %s751 = scalar_lea.sflag [#allocation7], %s750
          %s752 = sand.u32 %s385, 1
          %s753 = scalar_lea.vmem [#allocation22], %s752
          %s755 = ssub.s32 16, 16
          %756 = vsyncadd %s751, %s755
          %s757 = smul.addr %s38, 16
          %s758 = scalar_lea.hbm %s13, %s757
          %s760 = sshll.u32 %s753, 4
          %s761 = int_to_ptr.vmem [resolvable:$true] %s760
          %763 = dma.hbm_to_vmem [thread:$0]  %s758, 16, %s761, %s751
        $region80: #{dtrocr_forward.3} parent=27 // pred_fallthru
          _
      $region28: #{dtrocr_forward.3} parent=5 // pred_fallthru
        _
      %p764 = scmp.le.s32.totalorder 1, %s30
      %p765 = scmp.lt.s32.totalorder %s30, 5
      %p766 = pnand %p764, %p765
      %p767 = pneg %p766
      // Predicated region
      $region81: #{dtrocr_forward.3} parent=5 // pred_check
        _
      $region82: #{dtrocr_forward.3} parent=5 // pred_check_branch
        %769 = sbr.rel (%p766) target = $region84
      $region83: #{dtrocr_forward.3} parent=5 // pred_region
        %s770 = ssub.s32 %s30, 1
        %s771 = sand.u32 %s35, 1
        %s772 = scalar_lea.sflag [#allocation7], %s771
        %s773 = sand.u32 %s55, 1
        %s774 = smul.addr %s773, 24
        %s775 = scalar_lea.vmem [#allocation6], %s774
        // Predicated region
        $region85: #{dtrocr_forward.3} parent=83 // pred_check
          %p776 = pneg %p68
        $region86: #{dtrocr_forward.3} parent=83 // pred_check_branch
          %778 = sbr.rel (%p776) target = $region88
        $region87: #{dtrocr_forward.3} parent=83 // pred_region
          %779 = dma.done %s772, 384
        $region88: #{dtrocr_forward.3} parent=83 // pred_fallthru
          _
        // Predicated region
        $region89: #{dtrocr_forward.3} parent=83 // pred_check
          %p780 = pneg %p89
        $region90: #{dtrocr_forward.3} parent=83 // pred_check_branch
          %782 = sbr.rel (%p780) target = $region92
        $region91: #{dtrocr_forward.3} parent=83 // pred_region
          %783 = dma.done [#allocation10], 384
        $region92: #{dtrocr_forward.3} parent=83 // pred_fallthru
          _
        %s784 = sand.u32 %s35, 1
        %s785 = scalar_lea.sflag [#allocation7], %s784
        %s786 = sand.u32 %s102, 1
        %s787 = scalar_lea.vmem [#allocation11], %s786
        // Predicated region
        $region93: #{dtrocr_forward.3} parent=83 // pred_check
          %p788 = pneg %p115
        $region94: #{dtrocr_forward.3} parent=83 // pred_check_branch
          %790 = sbr.rel (%p788) target = $region96
        $region95: #{dtrocr_forward.3} parent=83 // pred_region
          %791 = dma.done %s785, 16
        $region96: #{dtrocr_forward.3} parent=83 // pred_fallthru
          _
        %s792 = sand.u32 %s35, 1
        %s793 = scalar_lea.sflag [#allocation7], %s792
        %s794 = sand.u32 %s128, 1
        %s795 = scalar_lea.vmem [#allocation12], %s794
        // Predicated region
        $region97: #{dtrocr_forward.3} parent=83 // pred_check
          %p796 = pneg %p141
        $region98: #{dtrocr_forward.3} parent=83 // pred_check_branch
          %798 = sbr.rel (%p796) target = $region100
        $region99: #{dtrocr_forward.3} parent=83 // pred_region
          %799 = dma.done %s793, 16
        $region100: #{dtrocr_forward.3} parent=83 // pred_fallthru
          _
        %s800 = sand.u32 %s35, 1
        %s801 = scalar_lea.sflag [#allocation7], %s800
        %s802 = sand.u32 %s154, 1
        %s803 = smul.addr %s802, 16
        %s804 = scalar_lea.vmem [#allocation13], %s803
        // Predicated region
        $region101: #{dtrocr_forward.3} parent=83 // pred_check
          %p805 = pneg %p167
        $region102: #{dtrocr_forward.3} parent=83 // pred_check_branch
          %807 = sbr.rel (%p805) target = $region104
        $region103: #{dtrocr_forward.3} parent=83 // pred_region
          %808 = dma.done %s801, 256
        $region104: #{dtrocr_forward.3} parent=83 // pred_fallthru
          _
        %s809 = sand.u32 %s35, 1
        %s810 = scalar_lea.sflag [#allocation7], %s809
        %s811 = sand.u32 %s180, 1
        %s812 = scalar_lea.vmem [#allocation14], %s811
        // Predicated region
        $region105: #{dtrocr_forward.3} parent=83 // pred_check
          %p813 = pneg %p193
        $region106: #{dtrocr_forward.3} parent=83 // pred_check_branch
          %815 = sbr.rel (%p813) target = $region108
        $region107: #{dtrocr_forward.3} parent=83 // pred_region
          %816 = dma.done %s810, 16
        $region108: #{dtrocr_forward.3} parent=83 // pred_fallthru
          _
        %s817 = sand.u32 %s35, 1
        %s818 = scalar_lea.sflag [#allocation7], %s817
        %s819 = sand.u32 %s206, 1
        %s820 = smul.addr %s819, 16
        %s821 = scalar_lea.vmem [#allocation15], %s820
        // Predicated region
        $region109: #{dtrocr_forward.3} parent=83 // pred_check
          %p822 = pneg %p219
        $region110: #{dtrocr_forward.3} parent=83 // pred_check_branch
          %824 = sbr.rel (%p822) target = $region112
        $region111: #{dtrocr_forward.3} parent=83 // pred_region
          %825 = dma.done %s818, 256
        $region112: #{dtrocr_forward.3} parent=83 // pred_fallthru
          _
        %s826 = sand.u32 %s35, 1
        %s827 = scalar_lea.sflag [#allocation7], %s826
        %s828 = sand.u32 %s232, 1
        %s829 = scalar_lea.vmem [#allocation16], %s828
        // Predicated region
        $region113: #{dtrocr_forward.3} parent=83 // pred_check
          %p830 = pneg %p245
        $region114: #{dtrocr_forward.3} parent=83 // pred_check_branch
          %832 = sbr.rel (%p830) target = $region116
        $region115: #{dtrocr_forward.3} parent=83 // pred_region
          %833 = dma.done %s827, 16
        $region116: #{dtrocr_forward.3} parent=83 // pred_fallthru
          _
        %s834 = sand.u32 %s35, 1
        %s835 = scalar_lea.sflag [#allocation7], %s834
        %s836 = sand.u32 %s258, 1
        %s837 = scalar_lea.vmem [#allocation17], %s836
        // Predicated region
        $region117: #{dtrocr_forward.3} parent=83 // pred_check
          %p838 = pneg %p271
        $region118: #{dtrocr_forward.3} parent=83 // pred_check_branch
          %840 = sbr.rel (%p838) target = $region120
        $region119: #{dtrocr_forward.3} parent=83 // pred_region
          %841 = dma.done %s835, 16
        $region120: #{dtrocr_forward.3} parent=83 // pred_fallthru
          _
        %s842 = sand.u32 %s35, 1
        %s843 = scalar_lea.sflag [#allocation7], %s842
        %s844 = sand.u32 %s284, 1
        %s845 = scalar_lea.vmem [#allocation18], %s844
        // Predicated region
        $region121: #{dtrocr_forward.3} parent=83 // pred_check
          %p846 = pneg %p297
        $region122: #{dtrocr_forward.3} parent=83 // pred_check_branch
          %848 = sbr.rel (%p846) target = $region124
        $region123: #{dtrocr_forward.3} parent=83 // pred_region
          %849 = dma.done %s843, 16
        $region124: #{dtrocr_forward.3} parent=83 // pred_fallthru
          _
        %s850 = sand.u32 %s35, 1
        %s851 = scalar_lea.sflag [#allocation7], %s850
        %s852 = sand.u32 %s310, 1
        %s853 = smul.addr %s852, 16
        %s854 = scalar_lea.vmem [#allocation19], %s853
        // Predicated region
        $region125: #{dtrocr_forward.3} parent=83 // pred_check
          %p855 = pneg %p323
        $region126: #{dtrocr_forward.3} parent=83 // pred_check_branch
          %857 = sbr.rel (%p855) target = $region128
        $region127: #{dtrocr_forward.3} parent=83 // pred_region
          %858 = dma.done %s851, 256
        $region128: #{dtrocr_forward.3} parent=83 // pred_fallthru
          _
        %s859 = sand.u32 %s35, 1
        %s860 = scalar_lea.sflag [#allocation7], %s859
        %s861 = sand.u32 %s336, 1
        %s862 = scalar_lea.vmem [#allocation20], %s861
        // Predicated region
        $region129: #{dtrocr_forward.3} parent=83 // pred_check
          %p863 = pneg %p349
        $region130: #{dtrocr_forward.3} parent=83 // pred_check_branch
          %865 = sbr.rel (%p863) target = $region132
        $region131: #{dtrocr_forward.3} parent=83 // pred_region
          %866 = dma.done %s860, 16
        $region132: #{dtrocr_forward.3} parent=83 // pred_fallthru
          _
        %s867 = sand.u32 %s35, 1
        %s868 = scalar_lea.sflag [#allocation7], %s867
        %s869 = sand.u32 %s362, 1
        %s870 = smul.addr %s869, 64
        %s871 = scalar_lea.vmem [#allocation21], %s870
        // Predicated region
        $region133: #{dtrocr_forward.3} parent=83 // pred_check
          %p872 = pneg %p375
        $region134: #{dtrocr_forward.3} parent=83 // pred_check_branch
          %874 = sbr.rel (%p872) target = $region136
        $region135: #{dtrocr_forward.3} parent=83 // pred_region
          %875 = dma.done %s868, 1024
        $region136: #{dtrocr_forward.3} parent=83 // pred_fallthru
          _
        %s876 = sand.u32 %s35, 1
        %s877 = scalar_lea.sflag [#allocation7], %s876
        %s878 = sand.u32 %s388, 1
        %s879 = scalar_lea.vmem [#allocation22], %s878
        // Predicated region
        $region137: #{dtrocr_forward.3} parent=83 // pred_check
          %p880 = pneg %p401
        $region138: #{dtrocr_forward.3} parent=83 // pred_check_branch
          %882 = sbr.rel (%p880) target = $region140
        $region139: #{dtrocr_forward.3} parent=83 // pred_region
          %883 = dma.done %s877, 16
        $region140: #{dtrocr_forward.3} parent=83 // pred_fallthru
          _
        // Predicated region
        $region141: #{dtrocr_forward.3} parent=83 // pred_check
          %p884 = pneg %p422
        $region142: #{dtrocr_forward.3} parent=83 // pred_check_branch
          %886 = sbr.rel (%p884) target = $region144
        $region143: #{dtrocr_forward.3} parent=83 // pred_region
          %887 = dma.done [#allocation10], 16
        $region144: #{dtrocr_forward.3} parent=83 // pred_fallthru
          _
        // Predicated region
        $region145: #{dtrocr_forward.3} parent=83 // pred_check
          %p888 = pneg %p443
        $region146: #{dtrocr_forward.3} parent=83 // pred_check_branch
          %890 = sbr.rel (%p888) target = $region148
        $region147: #{dtrocr_forward.3} parent=83 // pred_region
          %891 = dma.done [#allocation25], 16
        $region148: #{dtrocr_forward.3} parent=83 // pred_fallthru
          _
        %s892 = sand.u32 %s35, 1
        %s893 = scalar_lea.sflag [#allocation7], %s892
        %s894 = sand.u32 %s55, 1
        %s895 = smul.addr %s894, 24
        %s896 = scalar_lea.vmem [#allocation6], %s895
        %p897 = pneg %p68
        %p898 = pneg %p65
        %p899 = pneg %p89
        %p900 = pneg %p86
        %s901 = sand.u32 %s35, 1
        %s902 = scalar_lea.sflag [#allocation7], %s901
        %s903 = sand.u32 %s102, 1
        %s904 = scalar_lea.vmem [#allocation11], %s903
        %p905 = pneg %p115
        %p906 = pneg %p112
        %s907 = sand.u32 %s35, 1
        %s908 = scalar_lea.sflag [#allocation7], %s907
        %s909 = sand.u32 %s128, 1
        %s910 = scalar_lea.vmem [#allocation12], %s909
        %p911 = pneg %p141
        %p912 = pneg %p138
        %s913 = sand.u32 %s35, 1
        %s914 = scalar_lea.sflag [#allocation7], %s913
        %s915 = sand.u32 %s154, 1
        %s916 = smul.addr %s915, 16
        %s917 = scalar_lea.vmem [#allocation13], %s916
        %p918 = pneg %p167
        %p919 = pneg %p164
        %s920 = sand.u32 %s35, 1
        %s921 = scalar_lea.sflag [#allocation7], %s920
        %s922 = sand.u32 %s180, 1
        %s923 = scalar_lea.vmem [#allocation14], %s922
        %p924 = pneg %p193
        %p925 = pneg %p190
        %s926 = sand.u32 %s35, 1
        %s927 = scalar_lea.sflag [#allocation7], %s926
        %s928 = sand.u32 %s206, 1
        %s929 = smul.addr %s928, 16
        %s930 = scalar_lea.vmem [#allocation15], %s929
        %p931 = pneg %p219
        %p932 = pneg %p216
        %s933 = sand.u32 %s35, 1
        %s934 = scalar_lea.sflag [#allocation7], %s933
        %s935 = sand.u32 %s232, 1
        %s936 = scalar_lea.vmem [#allocation16], %s935
        %p937 = pneg %p245
        %p938 = pneg %p242
        %s939 = sand.u32 %s35, 1
        %s940 = scalar_lea.sflag [#allocation7], %s939
        %s941 = sand.u32 %s258, 1
        %s942 = scalar_lea.vmem [#allocation17], %s941
        %p943 = pneg %p271
        %p944 = pneg %p268
        %s945 = sand.u32 %s35, 1
        %s946 = scalar_lea.sflag [#allocation7], %s945
        %s947 = sand.u32 %s284, 1
        %s948 = scalar_lea.vmem [#allocation18], %s947
        %p949 = pneg %p297
        %p950 = pneg %p294
        %s951 = sand.u32 %s35, 1
        %s952 = scalar_lea.sflag [#allocation7], %s951
        %s953 = sand.u32 %s310, 1
        %s954 = smul.addr %s953, 16
        %s955 = scalar_lea.vmem [#allocation19], %s954
        %p956 = pneg %p323
        %p957 = pneg %p320
        %s958 = sand.u32 %s35, 1
        %s959 = scalar_lea.sflag [#allocation7], %s958
        %s960 = sand.u32 %s336, 1
        %s961 = scalar_lea.vmem [#allocation20], %s960
        %p962 = pneg %p349
        %p963 = pneg %p346
        %s964 = sand.u32 %s35, 1
        %s965 = scalar_lea.sflag [#allocation7], %s964
        %s966 = sand.u32 %s362, 1
        %s967 = smul.addr %s966, 64
        %s968 = scalar_lea.vmem [#allocation21], %s967
        %p969 = pneg %p375
        %p970 = pneg %p372
        %s971 = sand.u32 %s35, 1
        %s972 = scalar_lea.sflag [#allocation7], %s971
        %s973 = sand.u32 %s388, 1
        %s974 = scalar_lea.vmem [#allocation22], %s973
        %p975 = pneg %p401
        %p976 = pneg %p398
        %p977 = pneg %p422
        %p978 = pneg %p419
        %p979 = pneg %p443
        %p980 = pneg %p440
        %p981 = pneg %p469
        %p982 = pneg %p466
        %s983 = sand.u32 %s456, 1
        %s984 = scalar_lea.sflag [#allocation8], %s983
        %s985 = sand.u32 %s456, 1
        %s986 = smul.addr %s985, 24
        %s987 = scalar_lea.vmem [#allocation26], %s986
        %p989 = scmp.eq.s32.totalorder %s40, 0
        // Predicated region
        $region149: #{dtrocr_forward.3} parent=83 // pred_check
          %p990 = pneg %p989
        $region150: #{dtrocr_forward.3} parent=83 // pred_check_branch
          %992 = sbr.rel (%p990) target = $region152
        $region151: #{dtrocr_forward.3} parent=83 // pred_region
          %v993 = vld [vmem:[%s775] sm:$0xff]
          %v994 = vld [vmem:[%s775 + $0x8] sm:$0xff]
          %v995 = vld [vmem:[%s775 + $0x10] sm:$0xff]
          %vm996 = vcmask 261120
          %997 = vst.msk [vmem:[#allocation2] sm:$0xff] %vm996, %v993
          %998 = vst.msk [vmem:[#allocation2 + $0x8] sm:$0xff] %vm996, %v994
          %999 = vst.msk [vmem:[#allocation2 + $0x10] sm:$0xff] %vm996, %v995
        $region152: #{dtrocr_forward.3} parent=83 // pred_fallthru
          _
        %v1000 = vld [vmem:[#allocation2] sm:$0xff]
        %v1001 = vld [vmem:[#allocation2 + $0x8] sm:$0xff]
        %v1002 = vld [vmem:[#allocation2 + $0x10] sm:$0xff]
        %v1003 = vld [vmem:[%s787] sm:$0x1]
        %v1004 = vld [vmem:[%s795] sm:$0x1]
        %vm1005 = vcmask 261120
        %v1006 = vsel %vm1005, %v1000, 0.0
        %1007 = vadd.xlane.f32.xlu0 %v1006
        %v1008 = vpop.xlane.xlu0 %1007
        %v1009 = vsel %vm1005, %v1001, 0.0
        %1010 = vadd.xlane.f32.xlu0 %v1009
        %v1011 = vpop.xlane.xlu0 %1010
        %v1012 = vsel %vm1005, %v1002, 0.0
        %1013 = vadd.xlane.f32.xlu0 %v1012
        %v1014 = vpop.xlane.xlu0 %1013
        %v1015 = vrcp.pop 32.0
        %v1016 = vmul.f32 %v1008, %v1015
        %v1017 = vmul.f32 %v1011, %v1015
        %v1018 = vmul.f32 %v1014, %v1015
        %v1019 = vsub.f32 %v1000, %v1016
        %v1020 = vsub.f32 %v1001, %v1017
        %v1021 = vsub.f32 %v1002, %v1018
        %v1022 = vmul.f32 %v1019, %v1019
        %v1023 = vmul.f32 %v1020, %v1020
        %v1024 = vmul.f32 %v1021, %v1021
        %v1025 = vsel %vm1005, %v1022, 0.0
        %1026 = vadd.xlane.f32.xlu0 %v1025
        %v1027 = vpop.xlane.xlu0 %1026
        %v1028 = vsel %vm1005, %v1023, 0.0
        %1029 = vadd.xlane.f32.xlu0 %v1028
        %v1030 = vpop.xlane.xlu0 %1029
        %v1031 = vsel %vm1005, %v1024, 0.0
        %1032 = vadd.xlane.f32.xlu0 %v1031
        %v1033 = vpop.xlane.xlu0 %1032
        %v1034 = vmul.f32 %v1027, %v1015
        %v1035 = vmul.f32 %v1030, %v1015
        %v1036 = vmul.f32 %v1033, %v1015
        %v1037 = vadd.f32 %v1034, 1e-05
        %v1038 = vadd.f32 %v1035, 1e-05
        %v1039 = vadd.f32 %v1036, 1e-05
        %v1040 = vrsqrt.pop %v1037
        %v1041 = vrsqrt.pop %v1038
        %v1042 = vrsqrt.pop %v1039
        %v1043 = vmul.f32 %v1019, %v1040
        %v1044 = vmul.f32 %v1020, %v1041
        %v1045 = vmul.f32 %v1021, %v1042
        %v1047 = vlaneseq
        %v1048 = vshrl.u32 %v1047, 7
        %v1049 = vsub.s32 0, %v1048
        %v1050 = vrot.slane %v1003, %v1049
        %v1052 = vmul.f32 %v1043, %v1050
        %v1053 = vmul.f32 %v1044, %v1050
        %v1054 = vmul.f32 %v1045, %v1050
        %v1056 = vlaneseq
        %v1057 = vshrl.u32 %v1056, 7
        %v1058 = vsub.s32 0, %v1057
        %v1059 = vrot.slane %v1004, %v1058
        %v1061 = vadd.f32 %v1052, %v1059
        %v1062 = vadd.f32 %v1053, %v1059
        %v1063 = vadd.f32 %v1054, %v1059
        %v1064 = vpack.c.bf16 %v1062, %v1061
        %v1065 = vpack.c.bf16 %v1063, %v1063
        %v1066 = vld [vmem:[%s804] sm:$0xf]
        %v1067 = vld [vmem:[%s804 + $0x4] sm:$0xf]
        %v1068 = vld [vmem:[%s804 + $0x8] sm:$0xf]
        %v1069 = vld [vmem:[%s804 + $0xc] sm:$0xf]
        %v1070 = vld [vmem:[%s812] sm:$0x1]
        %v1072 = vlaneseq
        %v1073 = vshrl.u32 %v1072, 7
        %v1074 = vsub.s32 0, %v1073
        %v1075 = vrot.slane %v1070, %v1074
        %v1081 = vunpack.c.l.b16 %v1066
        %v1082 = vunpack.c.l.b16 %v1067
        %v1083 = vunpack.c.l.b16 %v1068
        %v1084 = vunpack.c.l.b16 %v1069
        %v1085 = vpack.c.b16 %v1082, %v1081
        %v1086 = vpack.c.b16 %v1084, %v1083
        %v1090 = vsel %vm1005, %v1064, 0
        %v1093 = vsel %vm1005, %v1065, 0
        %1095 = vmatprep.subr.bf16.mxu0 0
        %1096 = vmatpush1.bf16.msra.mxu0 %v1085
        %1097 = vmatprep.subr.bf16.mxu0 0
        %1098 = vmatpush1.bf16.msra.mxu0 %v1086
        %1099 = vmatprep.subr.bf16.mxu0 0
        %1100 = vmatpush1.bf16.msra.mxu0 0
        %1101 = vmatprep.subr.bf16.mxu0 0
        %1102 = vmatpush1.bf16.msra.mxu0 0
        %1103 = vmatprep.subr.bf16.mxu0 0
        %1104 = vmatpush1.bf16.msra.mxu0 0
        %1105 = vmatprep.subr.bf16.mxu0 0
        %1106 = vmatpush1.bf16.msra.mxu0 0
        %1107 = vmatprep.subr.bf16.mxu0 0
        %1108 = vmatpush1.bf16.msra.mxu0 0
        %1109 = vmatprep.subr.bf16.mxu0 0
        %1110 = vmatpush1.bf16.msra.mxu0 0
        %1111 = vmatprep.subr.bf16.mxu0 0
        %1112 = vmatpush1.bf16.msra.mxu0 0
        %1113 = vmatprep.subr.bf16.mxu0 0
        %1114 = vmatpush1.bf16.msra.mxu0 0
        %1115 = vmatprep.subr.bf16.mxu0 0
        %1116 = vmatpush1.bf16.msra.mxu0 0
        %1117 = vmatprep.subr.bf16.mxu0 0
        %1118 = vmatpush1.bf16.msra.mxu0 0
        %1119 = vmatprep.subr.bf16.mxu0 0
        %1120 = vmatpush1.bf16.msra.mxu0 0
        %1121 = vmatprep.subr.bf16.mxu0 0
        %1122 = vmatpush1.bf16.msra.mxu0 0
        %1123 = vmatprep.subr.bf16.mxu0 0
        %1124 = vmatpush1.bf16.msra.mxu0 0
        %1125 = vmatprep.subr.bf16.mxu0 0
        %1126 = vmatpush1.bf16.msra.mxu0 0
        %1127 = vmatprep.mubr.bf16.mxu0 0
        %1128 = vmatmul.mubr.bf16.gmra.mrb[0].mxu0 %v1090
        %v1129 = vpop.f32.mrb[0].mxu0
        %v1130 = vadd.f32 %v1075, %v1129
        %v1131 = vpop.f32.mrb[0].mxu0
        %v1132 = vpop.f32.mrb[0].mxu0
        %v1133 = vadd.f32 %v1075, %v1132
        %v1134 = vpop.f32.mrb[0].mxu0
        %1135 = vmatprep.mubr.bf16.mxu0 0
        %1136 = vmatmul.mubr.bf16.gmra.mrb[0].mxu0 %v1093
        %v1137 = vpop.f32.mrb[0].mxu0
        %v1138 = vadd.f32 %v1075, %v1137
        %v1139 = vpop.f32.mrb[0].mxu0
        %v1140 = vpop.f32.mrb[0].mxu0
        %v1141 = vpop.f32.mrb[0].mxu0
        %1142 = vdwg.mxu0
        %v1143 = vmul.f32 %v1130, 0.35355338
        %v1144 = vmul.f32 %v1133, 0.35355338
        %v1145 = vmul.f32 %v1138, 0.35355338
        %v1146 = vpack.c.bf16 %v1144, %v1143
        %v1147 = vpack.c.bf16 %v1145, %v1145
        %v1150 = vunpack.c.l.b16 %v1146
        %v1151 = vunpack.c.h.b16 %v1146
        %v1152 = vunpack.c.l.b16 %v1147
        %v1153 = vpack.c.b16 %v1150, %v1150
        %v1154 = vpack.c.b16 %v1151, %v1151
        %v1155 = vpack.c.b16 %v1152, %v1152
        %vm1159 = vcmask 60416
        %1160 = vst.msk [vmem:[#allocation3] sm:$0xf] %vm1159, %v1153
        %1161 = vst.msk [vmem:[#allocation3 + $0x4] sm:$0xf] %vm1159, %v1154
        %1162 = vst.msk [vmem:[#allocation3 + $0x8] sm:$0xf] %vm1159, %v1155
        %v1163 = vpack.c.bf16 %v1133, %v1130
        %v1164 = vpack.c.bf16 %v1138, %v1138
        %v1167 = vunpack.c.l.b16 %v1163
        %v1168 = vunpack.c.h.b16 %v1163
        %v1169 = vunpack.c.l.b16 %v1164
        %v1170 = vpack.c.b16 %v1167, %v1167
        %v1171 = vpack.c.b16 %v1168, %v1168
        %v1172 = vpack.c.b16 %v1169, %v1169
        %1173 = vrot.lane.b32.xlu0 %v1170, 96
        %v1174 = vpop.permute.xlu0 %1173
        %1175 = vrot.lane.b32.xlu0 %v1171, 96
        %v1176 = vpop.permute.xlu0 %1175
        %1177 = vrot.lane.b32.xlu0 %v1172, 96
        %v1178 = vpop.permute.xlu0 %1177
        %1182 = vst.msk [vmem:[#allocation4] sm:$0xf] %vm1159, %v1174
        %1183 = vst.msk [vmem:[#allocation4 + $0x4] sm:$0xf] %vm1159, %v1176
        %1184 = vst.msk [vmem:[#allocation4 + $0x8] sm:$0xf] %vm1159, %v1178
        %1185 = vrot.lane.b32.xlu0 %v1170, 64
        %v1186 = vpop.permute.xlu0 %1185
        %1187 = vrot.lane.b32.xlu0 %v1171, 64
        %v1188 = vpop.permute.xlu0 %1187
        %1189 = vrot.lane.b32.xlu0 %v1172, 64
        %v1190 = vpop.permute.xlu0 %1189
        %1194 = vst.msk [vmem:[#allocation5] sm:$0xf] %vm1159, %v1186
        %1195 = vst.msk [vmem:[#allocation5 + $0x4] sm:$0xf] %vm1159, %v1188
        %1196 = vst.msk [vmem:[#allocation5 + $0x8] sm:$0xf] %vm1159, %v1190
        %1197 = vrot.lane.b32.xlu0 %v1153, 120
        %v1198 = vpop.permute.xlu0 %1197
        %1199 = vrot.lane.b32.xlu0 %v1154, 120
        %v1200 = vpop.permute.xlu0 %1199
        %1201 = vrot.lane.b32.xlu0 %v1155, 120
        %v1202 = vpop.permute.xlu0 %1201
        %s1206 = scalar_lea.vmem [#allocation3], 12
        %1207 = vst.msk [vmem:[%s1206] sm:$0xf] %vm1159, %v1198
        %1208 = vst.msk [vmem:[%s1206 + $0x4] sm:$0xf] %vm1159, %v1200
        %1209 = vst.msk [vmem:[%s1206 + $0x8] sm:$0xf] %vm1159, %v1202
        %1210 = vrot.lane.b32.xlu0 %v1170, 88
        %v1211 = vpop.permute.xlu0 %1210
        %1212 = vrot.lane.b32.xlu0 %v1171, 88
        %v1213 = vpop.permute.xlu0 %1212
        %1214 = vrot.lane.b32.xlu0 %v1172, 88
        %v1215 = vpop.permute.xlu0 %1214
        %s1219 = scalar_lea.vmem [#allocation4], 12
        %1220 = vst.msk [vmem:[%s1219] sm:$0xf] %vm1159, %v1211
        %1221 = vst.msk [vmem:[%s1219 + $0x4] sm:$0xf] %vm1159, %v1213
        %1222 = vst.msk [vmem:[%s1219 + $0x8] sm:$0xf] %vm1159, %v1215
        %1223 = vrot.lane.b32.xlu0 %v1170, 56
        %v1224 = vpop.permute.xlu0 %1223
        %1225 = vrot.lane.b32.xlu0 %v1171, 56
        %v1226 = vpop.permute.xlu0 %1225
        %1227 = vrot.lane.b32.xlu0 %v1172, 56
        %v1228 = vpop.permute.xlu0 %1227
        %s1232 = scalar_lea.vmem [#allocation5], 12
        %1233 = vst.msk [vmem:[%s1232] sm:$0xf] %vm1159, %v1224
        %1234 = vst.msk [vmem:[%s1232 + $0x4] sm:$0xf] %vm1159, %v1226
        %1235 = vst.msk [vmem:[%s1232 + $0x8] sm:$0xf] %vm1159, %v1228
        %1236 = vrot.lane.b32.xlu0 %v1153, 112
        %v1237 = vpop.permute.xlu0 %1236
        %1238 = vrot.lane.b32.xlu0 %v1154, 112
        %v1239 = vpop.permute.xlu0 %1238
        %1240 = vrot.lane.b32.xlu0 %v1155, 112
        %v1241 = vpop.permute.xlu0 %1240
        %s1245 = scalar_lea.vmem [#allocation3], 24
        %1246 = vst.msk [vmem:[%s1245] sm:$0xf] %vm1159, %v1237
        %1247 = vst.msk [vmem:[%s1245 + $0x4] sm:$0xf] %vm1159, %v1239
        %1248 = vst.msk [vmem:[%s1245 + $0x8] sm:$0xf] %vm1159, %v1241
        %1249 = vrot.lane.b32.xlu0 %v1170, 80
        %v1250 = vpop.permute.xlu0 %1249
        %1251 = vrot.lane.b32.xlu0 %v1171, 80
        %v1252 = vpop.permute.xlu0 %1251
        %1253 = vrot.lane.b32.xlu0 %v1172, 80
        %v1254 = vpop.permute.xlu0 %1253
        %s1258 = scalar_lea.vmem [#allocation4], 24
        %1259 = vst.msk [vmem:[%s1258] sm:$0xf] %vm1159, %v1250
        %1260 = vst.msk [vmem:[%s1258 + $0x4] sm:$0xf] %vm1159, %v1252
        %1261 = vst.msk [vmem:[%s1258 + $0x8] sm:$0xf] %vm1159, %v1254
        %1262 = vrot.lane.b32.xlu0 %v1170, 48
        %v1263 = vpop.permute.xlu0 %1262
        %1264 = vrot.lane.b32.xlu0 %v1171, 48
        %v1265 = vpop.permute.xlu0 %1264
        %1266 = vrot.lane.b32.xlu0 %v1172, 48
        %v1267 = vpop.permute.xlu0 %1266
        %s1271 = scalar_lea.vmem [#allocation5], 24
        %1272 = vst.msk [vmem:[%s1271] sm:$0xf] %vm1159, %v1263
        %1273 = vst.msk [vmem:[%s1271 + $0x4] sm:$0xf] %vm1159, %v1265
        %1274 = vst.msk [vmem:[%s1271 + $0x8] sm:$0xf] %vm1159, %v1267
        %1275 = vrot.lane.b32.xlu0 %v1153, 104
        %v1276 = vpop.permute.xlu0 %1275
        %1277 = vrot.lane.b32.xlu0 %v1154, 104
        %v1278 = vpop.permute.xlu0 %1277
        %1279 = vrot.lane.b32.xlu0 %v1155, 104
        %v1280 = vpop.permute.xlu0 %1279
        %s1284 = scalar_lea.vmem [#allocation3], 36
        %1285 = vst.msk [vmem:[%s1284] sm:$0xf] %vm1159, %v1276
        %1286 = vst.msk [vmem:[%s1284 + $0x4] sm:$0xf] %vm1159, %v1278
        %1287 = vst.msk [vmem:[%s1284 + $0x8] sm:$0xf] %vm1159, %v1280
        %1288 = vrot.lane.b32.xlu0 %v1170, 72
        %v1289 = vpop.permute.xlu0 %1288
        %1290 = vrot.lane.b32.xlu0 %v1171, 72
        %v1291 = vpop.permute.xlu0 %1290
        %1292 = vrot.lane.b32.xlu0 %v1172, 72
        %v1293 = vpop.permute.xlu0 %1292
        %s1297 = scalar_lea.vmem [#allocation4], 36
        %1298 = vst.msk [vmem:[%s1297] sm:$0xf] %vm1159, %v1289
        %1299 = vst.msk [vmem:[%s1297 + $0x4] sm:$0xf] %vm1159, %v1291
        %1300 = vst.msk [vmem:[%s1297 + $0x8] sm:$0xf] %vm1159, %v1293
        %1301 = vrot.lane.b32.xlu0 %v1170, 40
        %v1302 = vpop.permute.xlu0 %1301
        %1303 = vrot.lane.b32.xlu0 %v1171, 40
        %v1304 = vpop.permute.xlu0 %1303
        %1305 = vrot.lane.b32.xlu0 %v1172, 40
        %v1306 = vpop.permute.xlu0 %1305
        %s1310 = scalar_lea.vmem [#allocation5], 36
        %1311 = vst.msk [vmem:[%s1310] sm:$0xf] %vm1159, %v1302
        %1312 = vst.msk [vmem:[%s1310 + $0x4] sm:$0xf] %vm1159, %v1304
        %1313 = vst.msk [vmem:[%s1310 + $0x8] sm:$0xf] %vm1159, %v1306
        %v1314 = vld [vmem:[#allocation3] sm:$0xf]
        %v1315 = vld [vmem:[#allocation3 + $0x4] sm:$0xf]
        %v1316 = vld [vmem:[#allocation3 + $0x8] sm:$0xf]
        %v1317 = vld [vmem:[#allocation3 + $0xc] sm:$0xf]
        %v1318 = vld [vmem:[#allocation3 + $0x10] sm:$0xf]
        %v1319 = vld [vmem:[#allocation3 + $0x14] sm:$0xf]
        %v1320 = vld [vmem:[#allocation3 + $0x18] sm:$0xf]
        %v1321 = vld [vmem:[#allocation3 + $0x1c] sm:$0xf]
        %v1322 = vld [vmem:[#allocation3 + $0x20] sm:$0xf]
        %v1323 = vld [vmem:[#allocation3 + $0x24] sm:$0xf]
        %v1324 = vld [vmem:[#allocation3 + $0x28] sm:$0xf]
        %v1325 = vld [vmem:[#allocation3 + $0x2c] sm:$0xf]
        %v1326 = vld [vmem:[#allocation4] sm:$0xf]
        %v1327 = vld [vmem:[#allocation4 + $0x4] sm:$0xf]
        %v1328 = vld [vmem:[#allocation4 + $0x8] sm:$0xf]
        %v1329 = vld [vmem:[#allocation4 + $0xc] sm:$0xf]
        %v1330 = vld [vmem:[#allocation4 + $0x10] sm:$0xf]
        %v1331 = vld [vmem:[#allocation4 + $0x14] sm:$0xf]
        %v1332 = vld [vmem:[#allocation4 + $0x18] sm:$0xf]
        %v1333 = vld [vmem:[#allocation4 + $0x1c] sm:$0xf]
        %v1334 = vld [vmem:[#allocation4 + $0x20] sm:$0xf]
        %v1335 = vld [vmem:[#allocation4 + $0x24] sm:$0xf]
        %v1336 = vld [vmem:[#allocation4 + $0x28] sm:$0xf]
        %v1337 = vld [vmem:[#allocation4 + $0x2c] sm:$0xf]
        %v1338 = vld [vmem:[#allocation5] sm:$0xf]
        %v1339 = vld [vmem:[#allocation5 + $0x4] sm:$0xf]
        %v1340 = vld [vmem:[#allocation5 + $0x8] sm:$0xf]
        %v1341 = vld [vmem:[#allocation5 + $0xc] sm:$0xf]
        %v1342 = vld [vmem:[#allocation5 + $0x10] sm:$0xf]
        %v1343 = vld [vmem:[#allocation5 + $0x14] sm:$0xf]
        %v1344 = vld [vmem:[#allocation5 + $0x18] sm:$0xf]
        %v1345 = vld [vmem:[#allocation5 + $0x1c] sm:$0xf]
        %v1346 = vld [vmem:[#allocation5 + $0x20] sm:$0xf]
        %v1347 = vld [vmem:[#allocation5 + $0x24] sm:$0xf]
        %v1348 = vld [vmem:[#allocation5 + $0x28] sm:$0xf]
        %v1349 = vld [vmem:[#allocation5 + $0x2c] sm:$0xf]
        %v1350 = vld [vmem:[#allocation9] sm:$0xff]
        %v1351 = vld [vmem:[#allocation9 + $0x8] sm:$0xff]
        %v1352 = vld [vmem:[#allocation9 + $0x10] sm:$0xff]
        %v1356 = vunpack.c.l.b16 %v1314
        %v1357 = vunpack.c.l.b16 %v1315
        %v1358 = vunpack.c.l.b16 %v1316
        %v1359 = vpack.c.b16 %v1357, %v1356
        %v1360 = vpack.c.b16 %v1358, %v1358
        %v1364 = vunpack.c.l.b16 %v1326
        %v1365 = vunpack.c.l.b16 %v1327
        %v1366 = vunpack.c.l.b16 %v1328
        %v1367 = vpack.c.b16 %v1365, %v1364
        %v1368 = vpack.c.b16 %v1366, %v1366
        %vm1369 = vcmask 64512
        %v1371 = vsel %vm1369, %v1359, 0
        %v1374 = vsel %vm1369, %v1360, 0
        %v1377 = vsel %vm1369, %v1367, 0
        %v1380 = vsel %vm1369, %v1368, 0
        %1382 = vmatprep.subr.bf16.mxu0 0
        %1383 = vmatpush1.bf16.xpose.msra.mxu0 %v1377
        %1384 = vmatprep.subr.bf16.mxu0 0
        %1385 = vmatpush1.bf16.xpose.msra.mxu0 %v1380
        %1386 = vmatprep.subr.bf16.mxu0 0
        %1387 = vmatpush1.bf16.xpose.msra.mxu0 0
        %1388 = vmatprep.subr.bf16.mxu0 0
        %1389 = vmatpush1.bf16.xpose.msra.mxu0 0
        %1390 = vmatprep.subr.bf16.mxu0 0
        %1391 = vmatpush1.bf16.xpose.msra.mxu0 0
        %1392 = vmatprep.subr.bf16.mxu0 0
        %1393 = vmatpush1.bf16.xpose.msra.mxu0 0
        %1394 = vmatprep.subr.bf16.mxu0 0
        %1395 = vmatpush1.bf16.xpose.msra.mxu0 0
        %1396 = vmatprep.subr.bf16.mxu0 0
        %1397 = vmatpush1.bf16.xpose.msra.mxu0 0
        %1398 = vmatprep.subr.bf16.mxu0 0
        %1399 = vmatpush1.bf16.xpose.msra.mxu0 0
        %1400 = vmatprep.subr.bf16.mxu0 0
        %1401 = vmatpush1.bf16.xpose.msra.mxu0 0
        %1402 = vmatprep.subr.bf16.mxu0 0
        %1403 = vmatpush1.bf16.xpose.msra.mxu0 0
        %1404 = vmatprep.subr.bf16.mxu0 0
        %1405 = vmatpush1.bf16.xpose.msra.mxu0 0
        %1406 = vmatprep.subr.bf16.mxu0 0
        %1407 = vmatpush1.bf16.xpose.msra.mxu0 0
        %1408 = vmatprep.subr.bf16.mxu0 0
        %1409 = vmatpush1.bf16.xpose.msra.mxu0 0
        %1410 = vmatprep.subr.bf16.mxu0 0
        %1411 = vmatpush1.bf16.xpose.msra.mxu0 0
        %1412 = vmatprep.subr.bf16.mxu0 0
        %1413 = vmatpush1.bf16.xpose.msra.mxu0 0
        %1414 = vmatprep.mubr.bf16.mxu0 0
        %1415 = vmatmul.mubr.bf16.gmra.mrb[0].mxu0 %v1371
        %v1416 = vpop.f32.mrb[0].mxu0
        %v1417 = vadd.f32 %v1350, %v1416
        %v1418 = vpop.f32.mrb[0].mxu0
        %v1419 = vpop.f32.mrb[0].mxu0
        %v1420 = vadd.f32 %v1351, %v1419
        %v1421 = vpop.f32.mrb[0].mxu0
        %1422 = vmatprep.mubr.bf16.mxu0 0
        %1423 = vmatmul.mubr.bf16.gmra.mrb[0].mxu0 %v1374
        %v1424 = vpop.f32.mrb[0].mxu0
        %v1425 = vadd.f32 %v1352, %v1424
        %v1426 = vpop.f32.mrb[0].mxu0
        %v1427 = vpop.f32.mrb[0].mxu0
        %v1428 = vpop.f32.mrb[0].mxu0
        %1429 = vdwg.mxu0
        %v1433 = vunpack.c.l.b16 %v1317
        %v1434 = vunpack.c.l.b16 %v1318
        %v1435 = vunpack.c.l.b16 %v1319
        %v1436 = vpack.c.b16 %v1434, %v1433
        %v1437 = vpack.c.b16 %v1435, %v1435
        %v1441 = vunpack.c.l.b16 %v1329
        %v1442 = vunpack.c.l.b16 %v1330
        %v1443 = vunpack.c.l.b16 %v1331
        %v1444 = vpack.c.b16 %v1442, %v1441
        %v1445 = vpack.c.b16 %v1443, %v1443
        %v1447 = vsel %vm1369, %v1436, 0
        %v1450 = vsel %vm1369, %v1437, 0
        %v1453 = vsel %vm1369, %v1444, 0
        %v1456 = vsel %vm1369, %v1445, 0
        %1458 = vmatprep.subr.bf16.mxu0 0
        %1459 = vmatpush1.bf16.xpose.msra.mxu0 %v1453
        %1460 = vmatprep.subr.bf16.mxu0 0
        %1461 = vmatpush1.bf16.xpose.msra.mxu0 %v1456
        %1462 = vmatprep.subr.bf16.mxu0 0
        %1463 = vmatpush1.bf16.xpose.msra.mxu0 0
        %1464 = vmatprep.subr.bf16.mxu0 0
        %1465 = vmatpush1.bf16.xpose.msra.mxu0 0
        %1466 = vmatprep.subr.bf16.mxu0 0
        %1467 = vmatpush1.bf16.xpose.msra.mxu0 0
        %1468 = vmatprep.subr.bf16.mxu0 0
        %1469 = vmatpush1.bf16.xpose.msra.mxu0 0
        %1470 = vmatprep.subr.bf16.mxu0 0
        %1471 = vmatpush1.bf16.xpose.msra.mxu0 0
        %1472 = vmatprep.subr.bf16.mxu0 0
        %1473 = vmatpush1.bf16.xpose.msra.mxu0 0
        %1474 = vmatprep.subr.bf16.mxu0 0
        %1475 = vmatpush1.bf16.xpose.msra.mxu0 0
        %1476 = vmatprep.subr.bf16.mxu0 0
        %1477 = vmatpush1.bf16.xpose.msra.mxu0 0
        %1478 = vmatprep.subr.bf16.mxu0 0
        %1479 = vmatpush1.bf16.xpose.msra.mxu0 0
        %1480 = vmatprep.subr.bf16.mxu0 0
        %1481 = vmatpush1.bf16.xpose.msra.mxu0 0
        %1482 = vmatprep.subr.bf16.mxu0 0
        %1483 = vmatpush1.bf16.xpose.msra.mxu0 0
        %1484 = vmatprep.subr.bf16.mxu0 0
        %1485 = vmatpush1.bf16.xpose.msra.mxu0 0
        %1486 = vmatprep.subr.bf16.mxu0 0
        %1487 = vmatpush1.bf16.xpose.msra.mxu0 0
        %1488 = vmatprep.subr.bf16.mxu0 0
        %1489 = vmatpush1.bf16.xpose.msra.mxu0 0
        %1490 = vmatprep.mubr.bf16.mxu0 0
        %1491 = vmatmul.mubr.bf16.gmra.mrb[0].mxu0 %v1447
        %v1492 = vpop.f32.mrb[0].mxu0
        %v1493 = vadd.f32 %v1350, %v1492
        %v1494 = vpop.f32.mrb[0].mxu0
        %v1495 = vpop.f32.mrb[0].mxu0
        %v1496 = vadd.f32 %v1351, %v1495
        %v1497 = vpop.f32.mrb[0].mxu0
        %1498 = vmatprep.mubr.bf16.mxu0 0
        %1499 = vmatmul.mubr.bf16.gmra.mrb[0].mxu0 %v1450
        %v1500 = vpop.f32.mrb[0].mxu0
        %v1501 = vadd.f32 %v1352, %v1500
        %v1502 = vpop.f32.mrb[0].mxu0
        %v1503 = vpop.f32.mrb[0].mxu0
        %v1504 = vpop.f32.mrb[0].mxu0
        %1505 = vdwg.mxu0
        %v1509 = vunpack.c.l.b16 %v1320
        %v1510 = vunpack.c.l.b16 %v1321
        %v1511 = vunpack.c.l.b16 %v1322
        %v1512 = vpack.c.b16 %v1510, %v1509
        %v1513 = vpack.c.b16 %v1511, %v1511
        %v1517 = vunpack.c.l.b16 %v1332
        %v1518 = vunpack.c.l.b16 %v1333
        %v1519 = vunpack.c.l.b16 %v1334
        %v1520 = vpack.c.b16 %v1518, %v1517
        %v1521 = vpack.c.b16 %v1519, %v1519
        %v1523 = vsel %vm1369, %v1512, 0
        %v1526 = vsel %vm1369, %v1513, 0
        %v1529 = vsel %vm1369, %v1520, 0
        %v1532 = vsel %vm1369, %v1521, 0
        %1534 = vmatprep.subr.bf16.mxu0 0
        %1535 = vmatpush1.bf16.xpose.msra.mxu0 %v1529
        %1536 = vmatprep.subr.bf16.mxu0 0
        %1537 = vmatpush1.bf16.xpose.msra.mxu0 %v1532
        %1538 = vmatprep.subr.bf16.mxu0 0
        %1539 = vmatpush1.bf16.xpose.msra.mxu0 0
        %1540 = vmatprep.subr.bf16.mxu0 0
        %1541 = vmatpush1.bf16.xpose.msra.mxu0 0
        %1542 = vmatprep.subr.bf16.mxu0 0
        %1543 = vmatpush1.bf16.xpose.msra.mxu0 0
        %1544 = vmatprep.subr.bf16.mxu0 0
        %1545 = vmatpush1.bf16.xpose.msra.mxu0 0
        %1546 = vmatprep.subr.bf16.mxu0 0
        %1547 = vmatpush1.bf16.xpose.msra.mxu0 0
        %1548 = vmatprep.subr.bf16.mxu0 0
        %1549 = vmatpush1.bf16.xpose.msra.mxu0 0
        %1550 = vmatprep.subr.bf16.mxu0 0
        %1551 = vmatpush1.bf16.xpose.msra.mxu0 0
        %1552 = vmatprep.subr.bf16.mxu0 0
        %1553 = vmatpush1.bf16.xpose.msra.mxu0 0
        %1554 = vmatprep.subr.bf16.mxu0 0
        %1555 = vmatpush1.bf16.xpose.msra.mxu0 0
        %1556 = vmatprep.subr.bf16.mxu0 0
        %1557 = vmatpush1.bf16.xpose.msra.mxu0 0
        %1558 = vmatprep.subr.bf16.mxu0 0
        %1559 = vmatpush1.bf16.xpose.msra.mxu0 0
        %1560 = vmatprep.subr.bf16.mxu0 0
        %1561 = vmatpush1.bf16.xpose.msra.mxu0 0
        %1562 = vmatprep.subr.bf16.mxu0 0
        %1563 = vmatpush1.bf16.xpose.msra.mxu0 0
        %1564 = vmatprep.subr.bf16.mxu0 0
        %1565 = vmatpush1.bf16.xpose.msra.mxu0 0
        %1566 = vmatprep.mubr.bf16.mxu0 0
        %1567 = vmatmul.mubr.bf16.gmra.mrb[0].mxu0 %v1523
        %v1568 = vpop.f32.mrb[0].mxu0
        %v1569 = vadd.f32 %v1350, %v1568
        %v1570 = vpop.f32.mrb[0].mxu0
        %v1571 = vpop.f32.mrb[0].mxu0
        %v1572 = vadd.f32 %v1351, %v1571
        %v1573 = vpop.f32.mrb[0].mxu0
        %1574 = vmatprep.mubr.bf16.mxu0 0
        %1575 = vmatmul.mubr.bf16.gmra.mrb[0].mxu0 %v1526
        %v1576 = vpop.f32.mrb[0].mxu0
        %v1577 = vadd.f32 %v1352, %v1576
        %v1578 = vpop.f32.mrb[0].mxu0
        %v1579 = vpop.f32.mrb[0].mxu0
        %v1580 = vpop.f32.mrb[0].mxu0
        %1581 = vdwg.mxu0
        %v1585 = vunpack.c.l.b16 %v1323
        %v1586 = vunpack.c.l.b16 %v1324
        %v1587 = vunpack.c.l.b16 %v1325
        %v1588 = vpack.c.b16 %v1586, %v1585
        %v1589 = vpack.c.b16 %v1587, %v1587
        %v1593 = vunpack.c.l.b16 %v1335
        %v1594 = vunpack.c.l.b16 %v1336
        %v1595 = vunpack.c.l.b16 %v1337
        %v1596 = vpack.c.b16 %v1594, %v1593
        %v1597 = vpack.c.b16 %v1595, %v1595
        %v1599 = vsel %vm1369, %v1588, 0
        %v1602 = vsel %vm1369, %v1589, 0
        %v1605 = vsel %vm1369, %v1596, 0
        %v1608 = vsel %vm1369, %v1597, 0
        %1610 = vmatprep.subr.bf16.mxu0 0
        %1611 = vmatpush1.bf16.xpose.msra.mxu0 %v1605
        %1612 = vmatprep.subr.bf16.mxu0 0
        %1613 = vmatpush1.bf16.xpose.msra.mxu0 %v1608
        %1614 = vmatprep.subr.bf16.mxu0 0
        %1615 = vmatpush1.bf16.xpose.msra.mxu0 0
        %1616 = vmatprep.subr.bf16.mxu0 0
        %1617 = vmatpush1.bf16.xpose.msra.mxu0 0
        %1618 = vmatprep.subr.bf16.mxu0 0
        %1619 = vmatpush1.bf16.xpose.msra.mxu0 0
        %1620 = vmatprep.subr.bf16.mxu0 0
        %1621 = vmatpush1.bf16.xpose.msra.mxu0 0
        %1622 = vmatprep.subr.bf16.mxu0 0
        %1623 = vmatpush1.bf16.xpose.msra.mxu0 0
        %1624 = vmatprep.subr.bf16.mxu0 0
        %1625 = vmatpush1.bf16.xpose.msra.mxu0 0
        %1626 = vmatprep.subr.bf16.mxu0 0
        %1627 = vmatpush1.bf16.xpose.msra.mxu0 0
        %1628 = vmatprep.subr.bf16.mxu0 0
        %1629 = vmatpush1.bf16.xpose.msra.mxu0 0
        %1630 = vmatprep.subr.bf16.mxu0 0
        %1631 = vmatpush1.bf16.xpose.msra.mxu0 0
        %1632 = vmatprep.subr.bf16.mxu0 0
        %1633 = vmatpush1.bf16.xpose.msra.mxu0 0
        %1634 = vmatprep.subr.bf16.mxu0 0
        %1635 = vmatpush1.bf16.xpose.msra.mxu0 0
        %1636 = vmatprep.subr.bf16.mxu0 0
        %1637 = vmatpush1.bf16.xpose.msra.mxu0 0
        %1638 = vmatprep.subr.bf16.mxu0 0
        %1639 = vmatpush1.bf16.xpose.msra.mxu0 0
        %1640 = vmatprep.subr.bf16.mxu0 0
        %1641 = vmatpush1.bf16.xpose.msra.mxu0 0
        %1642 = vmatprep.mubr.bf16.mxu0 0
        %1643 = vmatmul.mubr.bf16.gmra.mrb[0].mxu0 %v1599
        %v1644 = vpop.f32.mrb[0].mxu0
        %v1645 = vadd.f32 %v1350, %v1644
        %v1646 = vpop.f32.mrb[0].mxu0
        %v1647 = vpop.f32.mrb[0].mxu0
        %v1648 = vadd.f32 %v1351, %v1647
        %v1649 = vpop.f32.mrb[0].mxu0
        %1650 = vmatprep.mubr.bf16.mxu0 0
        %1651 = vmatmul.mubr.bf16.gmra.mrb[0].mxu0 %v1602
        %v1652 = vpop.f32.mrb[0].mxu0
        %v1653 = vadd.f32 %v1352, %v1652
        %v1654 = vpop.f32.mrb[0].mxu0
        %v1655 = vpop.f32.mrb[0].mxu0
        %v1656 = vpop.f32.mrb[0].mxu0
        %1657 = vdwg.mxu0
        %vm1658 = vcmask 195584
        %v1659 = vsel %vm1658, %v1417, -inf
        %1660 = vmax.xlane.f32.xlu0 %v1659
        %v1661 = vpop.xlane.xlu0 %1660
        %v1662 = vsel %vm1658, %v1420, -inf
        %1663 = vmax.xlane.f32.xlu0 %v1662
        %v1664 = vpop.xlane.xlu0 %1663
        %v1665 = vsel %vm1658, %v1425, -inf
        %1666 = vmax.xlane.f32.xlu0 %v1665
        %v1667 = vpop.xlane.xlu0 %1666
        %v1668 = vsel %vm1658, %v1493, -inf
        %1669 = vmax.xlane.f32.xlu0 %v1668
        %v1670 = vpop.xlane.xlu0 %1669
        %v1671 = vsel %vm1658, %v1496, -inf
        %1672 = vmax.xlane.f32.xlu0 %v1671
        %v1673 = vpop.xlane.xlu0 %1672
        %v1674 = vsel %vm1658, %v1501, -inf
        %1675 = vmax.xlane.f32.xlu0 %v1674
        %v1676 = vpop.xlane.xlu0 %1675
        %v1677 = vsel %vm1658, %v1569, -inf
        %1678 = vmax.xlane.f32.xlu0 %v1677
        %v1679 = vpop.xlane.xlu0 %1678
        %v1680 = vsel %vm1658, %v1572, -inf
        %1681 = vmax.xlane.f32.xlu0 %v1680
        %v1682 = vpop.xlane.xlu0 %1681
        %v1683 = vsel %vm1658, %v1577, -inf
        %1684 = vmax.xlane.f32.xlu0 %v1683
        %v1685 = vpop.xlane.xlu0 %1684
        %v1686 = vsel %vm1658, %v1645, -inf
        %1687 = vmax.xlane.f32.xlu0 %v1686
        %v1688 = vpop.xlane.xlu0 %1687
        %v1689 = vsel %vm1658, %v1648, -inf
        %1690 = vmax.xlane.f32.xlu0 %v1689
        %v1691 = vpop.xlane.xlu0 %1690
        %v1692 = vsel %vm1658, %v1653, -inf
        %1693 = vmax.xlane.f32.xlu0 %v1692
        %v1694 = vpop.xlane.xlu0 %1693
        %v1695 = vsub.f32 %v1417, %v1661
        %v1696 = vsub.f32 %v1420, %v1664
        %v1697 = vsub.f32 %v1425, %v1667
        %v1698 = vsub.f32 %v1493, %v1670
        %v1699 = vsub.f32 %v1496, %v1673
        %v1700 = vsub.f32 %v1501, %v1676
        %v1701 = vsub.f32 %v1569, %v1679
        %v1702 = vsub.f32 %v1572, %v1682
        %v1703 = vsub.f32 %v1577, %v1685
        %v1704 = vsub.f32 %v1645, %v1688
        %v1705 = vsub.f32 %v1648, %v1691
        %v1706 = vsub.f32 %v1653, %v1694
        %v1707 = vmul.f32 %v1695, 1.442695
        %v1708 = vpow.pop %v1707
        %v1709 = vmul.f32 %v1696, 1.442695
        %v1710 = vpow.pop %v1709
        %v1711 = vmul.f32 %v1697, 1.442695
        %v1712 = vpow.pop %v1711
        %v1713 = vmul.f32 %v1698, 1.442695
        %v1714 = vpow.pop %v1713
        %v1715 = vmul.f32 %v1699, 1.442695
        %v1716 = vpow.pop %v1715
        %v1717 = vmul.f32 %v1700, 1.442695
        %v1718 = vpow.pop %v1717
        %v1719 = vmul.f32 %v1701, 1.442695
        %v1720 = vpow.pop %v1719
        %v1721 = vmul.f32 %v1702, 1.442695
        %v1722 = vpow.pop %v1721
        %v1723 = vmul.f32 %v1703, 1.442695
        %v1724 = vpow.pop %v1723
        %v1725 = vmul.f32 %v1704, 1.442695
        %v1726 = vpow.pop %v1725
        %v1727 = vmul.f32 %v1705, 1.442695
        %v1728 = vpow.pop %v1727
        %v1729 = vmul.f32 %v1706, 1.442695
        %v1730 = vpow.pop %v1729
        %v1731 = vsel %vm1658, %v1708, 0.0
        %1732 = vadd.xlane.f32.xlu0 %v1731
        %v1733 = vpop.xlane.xlu0 %1732
        %v1734 = vsel %vm1658, %v1710, 0.0
        %1735 = vadd.xlane.f32.xlu0 %v1734
        %v1736 = vpop.xlane.xlu0 %1735
        %v1737 = vsel %vm1658, %v1712, 0.0
        %1738 = vadd.xlane.f32.xlu0 %v1737
        %v1739 = vpop.xlane.xlu0 %1738
        %v1740 = vsel %vm1658, %v1714, 0.0
        %1741 = vadd.xlane.f32.xlu0 %v1740
        %v1742 = vpop.xlane.xlu0 %1741
        %v1743 = vsel %vm1658, %v1716, 0.0
        %1744 = vadd.xlane.f32.xlu0 %v1743
        %v1745 = vpop.xlane.xlu0 %1744
        %v1746 = vsel %vm1658, %v1718, 0.0
        %1747 = vadd.xlane.f32.xlu0 %v1746
        %v1748 = vpop.xlane.xlu0 %1747
        %v1749 = vsel %vm1658, %v1720, 0.0
        %1750 = vadd.xlane.f32.xlu0 %v1749
        %v1751 = vpop.xlane.xlu0 %1750
        %v1752 = vsel %vm1658, %v1722, 0.0
        %1753 = vadd.xlane.f32.xlu0 %v1752
        %v1754 = vpop.xlane.xlu0 %1753
        %v1755 = vsel %vm1658, %v1724, 0.0
        %1756 = vadd.xlane.f32.xlu0 %v1755
        %v1757 = vpop.xlane.xlu0 %1756
        %v1758 = vsel %vm1658, %v1726, 0.0
        %1759 = vadd.xlane.f32.xlu0 %v1758
        %v1760 = vpop.xlane.xlu0 %1759
        %v1761 = vsel %vm1658, %v1728, 0.0
        %1762 = vadd.xlane.f32.xlu0 %v1761
        %v1763 = vpop.xlane.xlu0 %1762
        %v1764 = vsel %vm1658, %v1730, 0.0
        %1765 = vadd.xlane.f32.xlu0 %v1764
        %v1766 = vpop.xlane.xlu0 %1765
        %v1767 = vrcp.pop %v1733
        %v1768 = vrcp.pop %v1736
        %v1769 = vrcp.pop %v1739
        %v1770 = vrcp.pop %v1742
        %v1771 = vrcp.pop %v1745
        %v1772 = vrcp.pop %v1748
        %v1773 = vrcp.pop %v1751
        %v1774 = vrcp.pop %v1754
        %v1775 = vrcp.pop %v1757
        %v1776 = vrcp.pop %v1760
        %v1777 = vrcp.pop %v1763
        %v1778 = vrcp.pop %v1766
        %v1779 = vmul.f32 %v1708, %v1767
        %v1780 = vmul.f32 %v1710, %v1768
        %v1781 = vmul.f32 %v1712, %v1769
        %v1782 = vmul.f32 %v1714, %v1770
        %v1783 = vmul.f32 %v1716, %v1771
        %v1784 = vmul.f32 %v1718, %v1772
        %v1785 = vmul.f32 %v1720, %v1773
        %v1786 = vmul.f32 %v1722, %v1774
        %v1787 = vmul.f32 %v1724, %v1775
        %v1788 = vmul.f32 %v1726, %v1776
        %v1789 = vmul.f32 %v1728, %v1777
        %v1790 = vmul.f32 %v1730, %v1778
        %v1791 = vpack.c.bf16 %v1780, %v1779
        %v1792 = vpack.c.bf16 %v1781, %v1781
        %v1793 = vpack.c.bf16 %v1783, %v1782
        %v1794 = vpack.c.bf16 %v1784, %v1784
        %v1795 = vpack.c.bf16 %v1786, %v1785
        %v1796 = vpack.c.bf16 %v1787, %v1787
        %v1797 = vpack.c.bf16 %v1789, %v1788
        %v1798 = vpack.c.bf16 %v1790, %v1790
        %v1802 = vunpack.c.l.b16 %v1338
        %v1803 = vunpack.c.l.b16 %v1339
        %v1804 = vunpack.c.l.b16 %v1340
        %v1805 = vpack.c.b16 %v1803, %v1802
        %v1806 = vpack.c.b16 %v1804, %v1804
        %v1809 = vsel %vm1658, %v1791, 0
        %v1812 = vsel %vm1658, %v1792, 0
        %vm1814 = vcmask 1043456
        %v1816 = vsel %vm1814, %v1806, 0
        %1818 = vmatprep.subr.bf16.mxu0 0
        %1819 = vmatpush1.bf16.msra.mxu0 %v1805
        %1820 = vmatprep.subr.bf16.mxu0 0
        %1821 = vmatpush1.bf16.msra.mxu0 %v1816
        %1822 = vmatprep.subr.bf16.mxu0 0
        %1823 = vmatpush1.bf16.msra.mxu0 0
        %1824 = vmatprep.subr.bf16.mxu0 0
        %1825 = vmatpush1.bf16.msra.mxu0 0
        %1826 = vmatprep.subr.bf16.mxu0 0
        %1827 = vmatpush1.bf16.msra.mxu0 0
        %1828 = vmatprep.subr.bf16.mxu0 0
        %1829 = vmatpush1.bf16.msra.mxu0 0
        %1830 = vmatprep.subr.bf16.mxu0 0
        %1831 = vmatpush1.bf16.msra.mxu0 0
        %1832 = vmatprep.subr.bf16.mxu0 0
        %1833 = vmatpush1.bf16.msra.mxu0 0
        %1834 = vmatprep.subr.bf16.mxu0 0
        %1835 = vmatpush1.bf16.msra.mxu0 0
        %1836 = vmatprep.subr.bf16.mxu0 0
        %1837 = vmatpush1.bf16.msra.mxu0 0
        %1838 = vmatprep.subr.bf16.mxu0 0
        %1839 = vmatpush1.bf16.msra.mxu0 0
        %1840 = vmatprep.subr.bf16.mxu0 0
        %1841 = vmatpush1.bf16.msra.mxu0 0
        %1842 = vmatprep.subr.bf16.mxu0 0
        %1843 = vmatpush1.bf16.msra.mxu0 0
        %1844 = vmatprep.subr.bf16.mxu0 0
        %1845 = vmatpush1.bf16.msra.mxu0 0
        %1846 = vmatprep.subr.bf16.mxu0 0
        %1847 = vmatpush1.bf16.msra.mxu0 0
        %1848 = vmatprep.subr.bf16.mxu0 0
        %1849 = vmatpush1.bf16.msra.mxu0 0
        %1850 = vmatprep.mubr.bf16.mxu0 0
        %1851 = vmatmul.mubr.bf16.gmra.mrb[0].mxu0 %v1809
        %v1852 = vpop.f32.mrb[0].mxu0
        %v1853 = vadd.f32 0.0, %v1852
        %v1854 = vpop.f32.mrb[0].mxu0
        %v1855 = vpop.f32.mrb[0].mxu0
        %v1856 = vadd.f32 0.0, %v1855
        %v1857 = vpop.f32.mrb[0].mxu0
        %1858 = vmatprep.mubr.bf16.mxu0 0
        %1859 = vmatmul.mubr.bf16.gmra.mrb[0].mxu0 %v1812
        %v1860 = vpop.f32.mrb[0].mxu0
        %v1861 = vadd.f32 0.0, %v1860
        %v1862 = vpop.f32.mrb[0].mxu0
        %v1863 = vpop.f32.mrb[0].mxu0
        %v1864 = vpop.f32.mrb[0].mxu0
        %1865 = vdwg.mxu0
        %v1869 = vunpack.c.l.b16 %v1341
        %v1870 = vunpack.c.l.b16 %v1342
        %v1871 = vunpack.c.l.b16 %v1343
        %v1872 = vpack.c.b16 %v1870, %v1869
        %v1873 = vpack.c.b16 %v1871, %v1871
        %v1876 = vsel %vm1658, %v1793, 0
        %v1879 = vsel %vm1658, %v1794, 0
        %v1882 = vsel %vm1814, %v1873, 0
        %1884 = vmatprep.subr.bf16.mxu0 0
        %1885 = vmatpush1.bf16.msra.mxu0 %v1872
        %1886 = vmatprep.subr.bf16.mxu0 0
        %1887 = vmatpush1.bf16.msra.mxu0 %v1882
        %1888 = vmatprep.subr.bf16.mxu0 0
        %1889 = vmatpush1.bf16.msra.mxu0 0
        %1890 = vmatprep.subr.bf16.mxu0 0
        %1891 = vmatpush1.bf16.msra.mxu0 0
        %1892 = vmatprep.subr.bf16.mxu0 0
        %1893 = vmatpush1.bf16.msra.mxu0 0
        %1894 = vmatprep.subr.bf16.mxu0 0
        %1895 = vmatpush1.bf16.msra.mxu0 0
        %1896 = vmatprep.subr.bf16.mxu0 0
        %1897 = vmatpush1.bf16.msra.mxu0 0
        %1898 = vmatprep.subr.bf16.mxu0 0
        %1899 = vmatpush1.bf16.msra.mxu0 0
        %1900 = vmatprep.subr.bf16.mxu0 0
        %1901 = vmatpush1.bf16.msra.mxu0 0
        %1902 = vmatprep.subr.bf16.mxu0 0
        %1903 = vmatpush1.bf16.msra.mxu0 0
        %1904 = vmatprep.subr.bf16.mxu0 0
        %1905 = vmatpush1.bf16.msra.mxu0 0
        %1906 = vmatprep.subr.bf16.mxu0 0
        %1907 = vmatpush1.bf16.msra.mxu0 0
        %1908 = vmatprep.subr.bf16.mxu0 0
        %1909 = vmatpush1.bf16.msra.mxu0 0
        %1910 = vmatprep.subr.bf16.mxu0 0
        %1911 = vmatpush1.bf16.msra.mxu0 0
        %1912 = vmatprep.subr.bf16.mxu0 0
        %1913 = vmatpush1.bf16.msra.mxu0 0
        %1914 = vmatprep.subr.bf16.mxu0 0
        %1915 = vmatpush1.bf16.msra.mxu0 0
        %1916 = vmatprep.mubr.bf16.mxu0 0
        %1917 = vmatmul.mubr.bf16.gmra.mrb[0].mxu0 %v1876
        %v1918 = vpop.f32.mrb[0].mxu0
        %v1919 = vadd.f32 0.0, %v1918
        %v1920 = vpop.f32.mrb[0].mxu0
        %v1921 = vpop.f32.mrb[0].mxu0
        %v1922 = vadd.f32 0.0, %v1921
        %v1923 = vpop.f32.mrb[0].mxu0
        %1924 = vmatprep.mubr.bf16.mxu0 0
        %1925 = vmatmul.mubr.bf16.gmra.mrb[0].mxu0 %v1879
        %v1926 = vpop.f32.mrb[0].mxu0
        %v1927 = vadd.f32 0.0, %v1926
        %v1928 = vpop.f32.mrb[0].mxu0
        %v1929 = vpop.f32.mrb[0].mxu0
        %v1930 = vpop.f32.mrb[0].mxu0
        %1931 = vdwg.mxu0
        %v1935 = vunpack.c.l.b16 %v1344
        %v1936 = vunpack.c.l.b16 %v1345
        %v1937 = vunpack.c.l.b16 %v1346
        %v1938 = vpack.c.b16 %v1936, %v1935
        %v1939 = vpack.c.b16 %v1937, %v1937
        %v1942 = vsel %vm1658, %v1795, 0
        %v1945 = vsel %vm1658, %v1796, 0
        %v1948 = vsel %vm1814, %v1939, 0
        %1950 = vmatprep.subr.bf16.mxu0 0
        %1951 = vmatpush1.bf16.msra.mxu0 %v1938
        %1952 = vmatprep.subr.bf16.mxu0 0
        %1953 = vmatpush1.bf16.msra.mxu0 %v1948
        %1954 = vmatprep.subr.bf16.mxu0 0
        %1955 = vmatpush1.bf16.msra.mxu0 0
        %1956 = vmatprep.subr.bf16.mxu0 0
        %1957 = vmatpush1.bf16.msra.mxu0 0
        %1958 = vmatprep.subr.bf16.mxu0 0
        %1959 = vmatpush1.bf16.msra.mxu0 0
        %1960 = vmatprep.subr.bf16.mxu0 0
        %1961 = vmatpush1.bf16.msra.mxu0 0
        %1962 = vmatprep.subr.bf16.mxu0 0
        %1963 = vmatpush1.bf16.msra.mxu0 0
        %1964 = vmatprep.subr.bf16.mxu0 0
        %1965 = vmatpush1.bf16.msra.mxu0 0
        %1966 = vmatprep.subr.bf16.mxu0 0
        %1967 = vmatpush1.bf16.msra.mxu0 0
        %1968 = vmatprep.subr.bf16.mxu0 0
        %1969 = vmatpush1.bf16.msra.mxu0 0
        %1970 = vmatprep.subr.bf16.mxu0 0
        %1971 = vmatpush1.bf16.msra.mxu0 0
        %1972 = vmatprep.subr.bf16.mxu0 0
        %1973 = vmatpush1.bf16.msra.mxu0 0
        %1974 = vmatprep.subr.bf16.mxu0 0
        %1975 = vmatpush1.bf16.msra.mxu0 0
        %1976 = vmatprep.subr.bf16.mxu0 0
        %1977 = vmatpush1.bf16.msra.mxu0 0
        %1978 = vmatprep.subr.bf16.mxu0 0
        %1979 = vmatpush1.bf16.msra.mxu0 0
        %1980 = vmatprep.subr.bf16.mxu0 0
        %1981 = vmatpush1.bf16.msra.mxu0 0
        %1982 = vmatprep.mubr.bf16.mxu0 0
        %1983 = vmatmul.mubr.bf16.gmra.mrb[0].mxu0 %v1942
        %v1984 = vpop.f32.mrb[0].mxu0
        %v1985 = vadd.f32 0.0, %v1984
        %v1986 = vpop.f32.mrb[0].mxu0
        %v1987 = vpop.f32.mrb[0].mxu0
        %v1988 = vadd.f32 0.0, %v1987
        %v1989 = vpop.f32.mrb[0].mxu0
        %1990 = vmatprep.mubr.bf16.mxu0 0
        %1991 = vmatmul.mubr.bf16.gmra.mrb[0].mxu0 %v1945
        %v1992 = vpop.f32.mrb[0].mxu0
        %v1993 = vadd.f32 0.0, %v1992
        %v1994 = vpop.f32.mrb[0].mxu0
        %v1995 = vpop.f32.mrb[0].mxu0
        %v1996 = vpop.f32.mrb[0].mxu0
        %1997 = vdwg.mxu0
        %v2001 = vunpack.c.l.b16 %v1347
        %v2002 = vunpack.c.l.b16 %v1348
        %v2003 = vunpack.c.l.b16 %v1349
        %v2004 = vpack.c.b16 %v2002, %v2001
        %v2005 = vpack.c.b16 %v2003, %v2003
        %v2008 = vsel %vm1658, %v1797, 0
        %v2011 = vsel %vm1658, %v1798, 0
        %v2014 = vsel %vm1814, %v2005, 0
        %2016 = vmatprep.subr.bf16.mxu0 0
        %2017 = vmatpush1.bf16.msra.mxu0 %v2004
        %2018 = vmatprep.subr.bf16.mxu0 0
        %2019 = vmatpush1.bf16.msra.mxu0 %v2014
        %2020 = vmatprep.subr.bf16.mxu0 0
        %2021 = vmatpush1.bf16.msra.mxu0 0
        %2022 = vmatprep.subr.bf16.mxu0 0
        %2023 = vmatpush1.bf16.msra.mxu0 0
        %2024 = vmatprep.subr.bf16.mxu0 0
        %2025 = vmatpush1.bf16.msra.mxu0 0
        %2026 = vmatprep.subr.bf16.mxu0 0
        %2027 = vmatpush1.bf16.msra.mxu0 0
        %2028 = vmatprep.subr.bf16.mxu0 0
        %2029 = vmatpush1.bf16.msra.mxu0 0
        %2030 = vmatprep.subr.bf16.mxu0 0
        %2031 = vmatpush1.bf16.msra.mxu0 0
        %2032 = vmatprep.subr.bf16.mxu0 0
        %2033 = vmatpush1.bf16.msra.mxu0 0
        %2034 = vmatprep.subr.bf16.mxu0 0
        %2035 = vmatpush1.bf16.msra.mxu0 0
        %2036 = vmatprep.subr.bf16.mxu0 0
        %2037 = vmatpush1.bf16.msra.mxu0 0
        %2038 = vmatprep.subr.bf16.mxu0 0
        %2039 = vmatpush1.bf16.msra.mxu0 0
        %2040 = vmatprep.subr.bf16.mxu0 0
        %2041 = vmatpush1.bf16.msra.mxu0 0
        %2042 = vmatprep.subr.bf16.mxu0 0
        %2043 = vmatpush1.bf16.msra.mxu0 0
        %2044 = vmatprep.subr.bf16.mxu0 0
        %2045 = vmatpush1.bf16.msra.mxu0 0
        %2046 = vmatprep.subr.bf16.mxu0 0
        %2047 = vmatpush1.bf16.msra.mxu0 0
        %2048 = vmatprep.mubr.bf16.mxu0 0
        %2049 = vmatmul.mubr.bf16.gmra.mrb[0].mxu0 %v2008
        %v2050 = vpop.f32.mrb[0].mxu0
        %v2051 = vadd.f32 0.0, %v2050
        %v2052 = vpop.f32.mrb[0].mxu0
        %v2053 = vpop.f32.mrb[0].mxu0
        %v2054 = vadd.f32 0.0, %v2053
        %v2055 = vpop.f32.mrb[0].mxu0
        %2056 = vmatprep.mubr.bf16.mxu0 0
        %2057 = vmatmul.mubr.bf16.gmra.mrb[0].mxu0 %v2011
        %v2058 = vpop.f32.mrb[0].mxu0
        %v2059 = vadd.f32 0.0, %v2058
        %v2060 = vpop.f32.mrb[0].mxu0
        %v2061 = vpop.f32.mrb[0].mxu0
        %v2062 = vpop.f32.mrb[0].mxu0
        %2063 = vdwg.mxu0
        %2067 = vrot.lane.b32.xlu0 %v1919, 8
        %v2068 = vpop.permute.xlu0 %2067
        %2069 = vrot.lane.b32.xlu0 %v1922, 8
        %v2070 = vpop.permute.xlu0 %2069
        %2071 = vrot.lane.b32.xlu0 %v1927, 8
        %v2072 = vpop.permute.xlu0 %2071
        %2079 = vrot.lane.b32.xlu0 %v1985, 16
        %v2080 = vpop.permute.xlu0 %2079
        %2081 = vrot.lane.b32.xlu0 %v1988, 16
        %v2082 = vpop.permute.xlu0 %2081
        %2083 = vrot.lane.b32.xlu0 %v1993, 16
        %v2084 = vpop.permute.xlu0 %2083
        %2091 = vrot.lane.b32.xlu0 %v2051, 24
        %v2092 = vpop.permute.xlu0 %2091
        %2093 = vrot.lane.b32.xlu0 %v2054, 24
        %v2094 = vpop.permute.xlu0 %2093
        %2095 = vrot.lane.b32.xlu0 %v2059, 24
        %v2096 = vpop.permute.xlu0 %2095
        %v2100 = vsel %vm1369, %v1853, %v2068
        %v2101 = vsel %vm1369, %v1856, %v2070
        %v2102 = vsel %vm1369, %v1861, %v2072
        %vm2103 = vcmask 130048
        %v2104 = vsel %vm2103, %v2100, %v2080
        %v2105 = vsel %vm2103, %v2101, %v2082
        %v2106 = vsel %vm2103, %v2102, %v2084
        %v2107 = vsel %vm1658, %v2104, %v2092
        %v2108 = vsel %vm1658, %v2105, %v2094
        %v2109 = vsel %vm1658, %v2106, %v2096
        %v2110 = vpack.c.bf16 %v2108, %v2107
        %v2111 = vpack.c.bf16 %v2109, %v2109
        %v2112 = vld [vmem:[%s821] sm:$0xf]
        %v2113 = vld [vmem:[%s821 + $0x4] sm:$0xf]
        %v2114 = vld [vmem:[%s821 + $0x8] sm:$0xf]
        %v2115 = vld [vmem:[%s821 + $0xc] sm:$0xf]
        %v2116 = vld [vmem:[%s829] sm:$0x1]
        %v2118 = vlaneseq
        %v2119 = vshrl.u32 %v2118, 7
        %v2120 = vsub.s32 0, %v2119
        %v2121 = vrot.slane %v2116, %v2120
        %v2127 = vunpack.c.l.b16 %v2112
        %v2128 = vunpack.c.l.b16 %v2113
        %v2129 = vunpack.c.l.b16 %v2114
        %v2130 = vunpack.c.l.b16 %v2115
        %v2131 = vpack.c.b16 %v2128, %v2127
        %v2132 = vpack.c.b16 %v2130, %v2129
        %v2136 = vsel %vm1005, %v2110, 0
        %v2139 = vsel %vm1005, %v2111, 0
        %2141 = vmatprep.subr.bf16.mxu0 0
        %2142 = vmatpush1.bf16.msra.mxu0 %v2131
        %2143 = vmatprep.subr.bf16.mxu0 0
        %2144 = vmatpush1.bf16.msra.mxu0 %v2132
        %2145 = vmatprep.subr.bf16.mxu0 0
        %2146 = vmatpush1.bf16.msra.mxu0 0
        %2147 = vmatprep.subr.bf16.mxu0 0
        %2148 = vmatpush1.bf16.msra.mxu0 0
        %2149 = vmatprep.subr.bf16.mxu0 0
        %2150 = vmatpush1.bf16.msra.mxu0 0
        %2151 = vmatprep.subr.bf16.mxu0 0
        %2152 = vmatpush1.bf16.msra.mxu0 0
        %2153 = vmatprep.subr.bf16.mxu0 0
        %2154 = vmatpush1.bf16.msra.mxu0 0
        %2155 = vmatprep.subr.bf16.mxu0 0
        %2156 = vmatpush1.bf16.msra.mxu0 0
        %2157 = vmatprep.subr.bf16.mxu0 0
        %2158 = vmatpush1.bf16.msra.mxu0 0
        %2159 = vmatprep.subr.bf16.mxu0 0
        %2160 = vmatpush1.bf16.msra.mxu0 0
        %2161 = vmatprep.subr.bf16.mxu0 0
        %2162 = vmatpush1.bf16.msra.mxu0 0
        %2163 = vmatprep.subr.bf16.mxu0 0
        %2164 = vmatpush1.bf16.msra.mxu0 0
        %2165 = vmatprep.subr.bf16.mxu0 0
        %2166 = vmatpush1.bf16.msra.mxu0 0
        %2167 = vmatprep.subr.bf16.mxu0 0
        %2168 = vmatpush1.bf16.msra.mxu0 0
        %2169 = vmatprep.subr.bf16.mxu0 0
        %2170 = vmatpush1.bf16.msra.mxu0 0
        %2171 = vmatprep.subr.bf16.mxu0 0
        %2172 = vmatpush1.bf16.msra.mxu0 0
        %2173 = vmatprep.mubr.bf16.mxu0 0
        %2174 = vmatmul.mubr.bf16.gmra.mrb[0].mxu0 %v2136
        %v2175 = vpop.f32.mrb[0].mxu0
        %v2176 = vadd.f32 %v2121, %v2175
        %v2177 = vpop.f32.mrb[0].mxu0
        %v2178 = vpop.f32.mrb[0].mxu0
        %v2179 = vadd.f32 %v2121, %v2178
        %v2180 = vpop.f32.mrb[0].mxu0
        %2181 = vmatprep.mubr.bf16.mxu0 0
        %2182 = vmatmul.mubr.bf16.gmra.mrb[0].mxu0 %v2139
        %v2183 = vpop.f32.mrb[0].mxu0
        %v2184 = vadd.f32 %v2121, %v2183
        %v2185 = vpop.f32.mrb[0].mxu0
        %v2186 = vpop.f32.mrb[0].mxu0
        %v2187 = vpop.f32.mrb[0].mxu0
        %2188 = vdwg.mxu0
        %v2189 = vadd.f32 %v1000, %v2176
        %v2190 = vadd.f32 %v1001, %v2179
        %v2191 = vadd.f32 %v1002, %v2184
        %v2192 = vld [vmem:[%s837] sm:$0x1]
        %v2193 = vld [vmem:[%s845] sm:$0x1]
        %v2194 = vsel %vm1005, %v2189, 0.0
        %2195 = vadd.xlane.f32.xlu0 %v2194
        %v2196 = vpop.xlane.xlu0 %2195
        %v2197 = vsel %vm1005, %v2190, 0.0
        %2198 = vadd.xlane.f32.xlu0 %v2197
        %v2199 = vpop.xlane.xlu0 %2198
        %v2200 = vsel %vm1005, %v2191, 0.0
        %2201 = vadd.xlane.f32.xlu0 %v2200
        %v2202 = vpop.xlane.xlu0 %2201
        %v2203 = vmul.f32 %v2196, %v1015
        %v2204 = vmul.f32 %v2199, %v1015
        %v2205 = vmul.f32 %v2202, %v1015
        %v2206 = vsub.f32 %v2189, %v2203
        %v2207 = vsub.f32 %v2190, %v2204
        %v2208 = vsub.f32 %v2191, %v2205
        %v2209 = vmul.f32 %v2206, %v2206
        %v2210 = vmul.f32 %v2207, %v2207
        %v2211 = vmul.f32 %v2208, %v2208
        %v2212 = vsel %vm1005, %v2209, 0.0
        %2213 = vadd.xlane.f32.xlu0 %v2212
        %v2214 = vpop.xlane.xlu0 %2213
        %v2215 = vsel %vm1005, %v2210, 0.0
        %2216 = vadd.xlane.f32.xlu0 %v2215
        %v2217 = vpop.xlane.xlu0 %2216
        %v2218 = vsel %vm1005, %v2211, 0.0
        %2219 = vadd.xlane.f32.xlu0 %v2218
        %v2220 = vpop.xlane.xlu0 %2219
        %v2221 = vmul.f32 %v2214, %v1015
        %v2222 = vmul.f32 %v2217, %v1015
        %v2223 = vmul.f32 %v2220, %v1015
        %v2224 = vadd.f32 %v2221, 1e-05
        %v2225 = vadd.f32 %v2222, 1e-05
        %v2226 = vadd.f32 %v2223, 1e-05
        %v2227 = vrsqrt.pop %v2224
        %v2228 = vrsqrt.pop %v2225
        %v2229 = vrsqrt.pop %v2226
        %v2230 = vmul.f32 %v2206, %v2227
        %v2231 = vmul.f32 %v2207, %v2228
        %v2232 = vmul.f32 %v2208, %v2229
        %v2234 = vlaneseq
        %v2235 = vshrl.u32 %v2234, 7
        %v2236 = vsub.s32 0, %v2235
        %v2237 = vrot.slane %v2192, %v2236
        %v2239 = vmul.f32 %v2230, %v2237
        %v2240 = vmul.f32 %v2231, %v2237
        %v2241 = vmul.f32 %v2232, %v2237
        %v2243 = vlaneseq
        %v2244 = vshrl.u32 %v2243, 7
        %v2245 = vsub.s32 0, %v2244
        %v2246 = vrot.slane %v2193, %v2245
        %v2248 = vadd.f32 %v2239, %v2246
        %v2249 = vadd.f32 %v2240, %v2246
        %v2250 = vadd.f32 %v2241, %v2246
        %v2251 = vpack.c.bf16 %v2249, %v2248
        %v2252 = vpack.c.bf16 %v2250, %v2250
        %v2253 = vld [vmem:[%s854] sm:$0xf]
        %v2254 = vld [vmem:[%s854 + $0x4] sm:$0xf]
        %v2255 = vld [vmem:[%s854 + $0x8] sm:$0xf]
        %v2256 = vld [vmem:[%s854 + $0xc] sm:$0xf]
        %v2257 = vld [vmem:[%s862] sm:$0x1]
        %v2259 = vlaneseq
        %v2260 = vshrl.u32 %v2259, 7
        %v2261 = vsub.s32 0, %v2260
        %v2262 = vrot.slane %v2257, %v2261
        %v2268 = vunpack.c.l.b16 %v2253
        %v2269 = vunpack.c.l.b16 %v2254
        %v2270 = vunpack.c.l.b16 %v2255
        %v2271 = vunpack.c.l.b16 %v2256
        %v2272 = vpack.c.b16 %v2269, %v2268
        %v2273 = vpack.c.b16 %v2271, %v2270
        %v2277 = vsel %vm1005, %v2251, 0
        %v2280 = vsel %vm1005, %v2252, 0
        %2282 = vmatprep.subr.bf16.mxu0 0
        %2283 = vmatpush1.bf16.msra.mxu0 %v2272
        %2284 = vmatprep.subr.bf16.mxu0 0
        %2285 = vmatpush1.bf16.msra.mxu0 %v2273
        %2286 = vmatprep.subr.bf16.mxu0 0
        %2287 = vmatpush1.bf16.msra.mxu0 0
        %2288 = vmatprep.subr.bf16.mxu0 0
        %2289 = vmatpush1.bf16.msra.mxu0 0
        %2290 = vmatprep.subr.bf16.mxu0 0
        %2291 = vmatpush1.bf16.msra.mxu0 0
        %2292 = vmatprep.subr.bf16.mxu0 0
        %2293 = vmatpush1.bf16.msra.mxu0 0
        %2294 = vmatprep.subr.bf16.mxu0 0
        %2295 = vmatpush1.bf16.msra.mxu0 0
        %2296 = vmatprep.subr.bf16.mxu0 0
        %2297 = vmatpush1.bf16.msra.mxu0 0
        %2298 = vmatprep.subr.bf16.mxu0 0
        %2299 = vmatpush1.bf16.msra.mxu0 0
        %2300 = vmatprep.subr.bf16.mxu0 0
        %2301 = vmatpush1.bf16.msra.mxu0 0
        %2302 = vmatprep.subr.bf16.mxu0 0
        %2303 = vmatpush1.bf16.msra.mxu0 0
        %2304 = vmatprep.subr.bf16.mxu0 0
        %2305 = vmatpush1.bf16.msra.mxu0 0
        %2306 = vmatprep.subr.bf16.mxu0 0
        %2307 = vmatpush1.bf16.msra.mxu0 0
        %2308 = vmatprep.subr.bf16.mxu0 0
        %2309 = vmatpush1.bf16.msra.mxu0 0
        %2310 = vmatprep.subr.bf16.mxu0 0
        %2311 = vmatpush1.bf16.msra.mxu0 0
        %2312 = vmatprep.subr.bf16.mxu0 0
        %2313 = vmatpush1.bf16.msra.mxu0 0
        %2314 = vmatprep.mubr.bf16.mxu0 0
        %2315 = vmatmul.mubr.bf16.gmra.mrb[0].mxu0 %v2277
        %v2316 = vpop.f32.mrb[0].mxu0
        %v2317 = vadd.f32 %v2262, %v2316
        %v2318 = vpop.f32.mrb[0].mxu0
        %v2319 = vpop.f32.mrb[0].mxu0
        %v2320 = vadd.f32 %v2262, %v2319
        %v2321 = vpop.f32.mrb[0].mxu0
        %2322 = vmatprep.mubr.bf16.mxu0 0
        %2323 = vmatmul.mubr.bf16.gmra.mrb[0].mxu0 %v2280
        %v2324 = vpop.f32.mrb[0].mxu0
        %v2325 = vadd.f32 %v2262, %v2324
        %v2326 = vpop.f32.mrb[0].mxu0
        %v2327 = vpop.f32.mrb[0].mxu0
        %v2328 = vpop.f32.mrb[0].mxu0
        %2329 = vdwg.mxu0
        %v2330 = vmul.f32 %v2317, 0.5
        %v2331 = vmul.f32 %v2320, 0.5
        %v2332 = vmul.f32 %v2325, 0.5
        %v2333 = vmul.f32 %v2317, 0.044715
        %v2334 = vmul.f32 %v2320, 0.044715
        %v2335 = vmul.f32 %v2325, 0.044715
        %v2336 = vmul.f32 %v2333, %v2317
        %v2337 = vmul.f32 %v2334, %v2320
        %v2338 = vmul.f32 %v2335, %v2325
        %v2339 = vmul.f32 %v2336, %v2317
        %v2340 = vmul.f32 %v2337, %v2320
        %v2341 = vmul.f32 %v2338, %v2325
        %v2342 = vadd.f32 %v2317, %v2339
        %v2343 = vadd.f32 %v2320, %v2340
        %v2344 = vadd.f32 %v2325, %v2341
        %v2345 = vmul.f32 %v2342, 0.7978846
        %v2346 = vmul.f32 %v2343, 0.7978846
        %v2347 = vmul.f32 %v2344, 0.7978846
        %v2348 = vtanh.pop %v2345
        %v2349 = vtanh.pop %v2346
        %v2350 = vtanh.pop %v2347
        %v2351 = vadd.f32 %v2348, 1.0
        %v2352 = vadd.f32 %v2349, 1.0
        %v2353 = vadd.f32 %v2350, 1.0
        %v2354 = vmul.f32 %v2330, %v2351
        %v2355 = vmul.f32 %v2331, %v2352
        %v2356 = vmul.f32 %v2332, %v2353
        %v2357 = vpack.c.bf16 %v2355, %v2354
        %v2358 = vpack.c.bf16 %v2356, %v2356
        %v2359 = vld [vmem:[%s871] sm:$0xf]
        %v2360 = vld [vmem:[%s871 + $0x4] sm:$0xf]
        %v2361 = vld [vmem:[%s871 + $0x8] sm:$0xf]
        %v2362 = vld [vmem:[%s871 + $0xc] sm:$0xf]
        %v2363 = vld [vmem:[%s871 + $0x10] sm:$0xf]
        %v2364 = vld [vmem:[%s871 + $0x14] sm:$0xf]
        %v2365 = vld [vmem:[%s871 + $0x18] sm:$0xf]
        %v2366 = vld [vmem:[%s871 + $0x1c] sm:$0xf]
        %v2367 = vld [vmem:[%s871 + $0x20] sm:$0xf]
        %v2368 = vld [vmem:[%s871 + $0x24] sm:$0xf]
        %v2369 = vld [vmem:[%s871 + $0x28] sm:$0xf]
        %v2370 = vld [vmem:[%s871 + $0x2c] sm:$0xf]
        %v2371 = vld [vmem:[%s871 + $0x30] sm:$0xf]
        %v2372 = vld [vmem:[%s871 + $0x34] sm:$0xf]
        %v2373 = vld [vmem:[%s871 + $0x38] sm:$0xf]
        %v2374 = vld [vmem:[%s871 + $0x3c] sm:$0xf]
        %v2391 = vunpack.c.l.b16 %v2359
        %v2392 = vunpack.c.l.b16 %v2360
        %v2393 = vunpack.c.l.b16 %v2361
        %v2394 = vunpack.c.l.b16 %v2362
        %v2395 = vunpack.c.l.b16 %v2363
        %v2396 = vunpack.c.l.b16 %v2364
        %v2397 = vunpack.c.l.b16 %v2365
        %v2398 = vunpack.c.l.b16 %v2366
        %v2399 = vunpack.c.l.b16 %v2367
        %v2400 = vunpack.c.l.b16 %v2368
        %v2401 = vunpack.c.l.b16 %v2369
        %v2402 = vunpack.c.l.b16 %v2370
        %v2403 = vunpack.c.l.b16 %v2371
        %v2404 = vunpack.c.l.b16 %v2372
        %v2405 = vunpack.c.l.b16 %v2373
        %v2406 = vunpack.c.l.b16 %v2374
        %v2407 = vpack.c.b16 %v2392, %v2391
        %v2408 = vpack.c.b16 %v2394, %v2393
        %v2409 = vpack.c.b16 %v2396, %v2395
        %v2410 = vpack.c.b16 %v2398, %v2397
        %v2411 = vpack.c.b16 %v2400, %v2399
        %v2412 = vpack.c.b16 %v2402, %v2401
        %v2413 = vpack.c.b16 %v2404, %v2403
        %v2414 = vpack.c.b16 %v2406, %v2405
        %2423 = vmatprep.subr.bf16.mxu0 0
        %2424 = vmatpush1.bf16.msra.mxu0 %v2407
        %2425 = vmatprep.subr.bf16.mxu0 0
        %2426 = vmatpush1.bf16.msra.mxu0 %v2408
        %2427 = vmatprep.subr.bf16.mxu0 0
        %2428 = vmatpush1.bf16.msra.mxu0 %v2409
        %2429 = vmatprep.subr.bf16.mxu0 0
        %2430 = vmatpush1.bf16.msra.mxu0 %v2410
        %2431 = vmatprep.subr.bf16.mxu0 0
        %2432 = vmatpush1.bf16.msra.mxu0 %v2411
        %2433 = vmatprep.subr.bf16.mxu0 0
        %2434 = vmatpush1.bf16.msra.mxu0 %v2412
        %2435 = vmatprep.subr.bf16.mxu0 0
        %2436 = vmatpush1.bf16.msra.mxu0 %v2413
        %2437 = vmatprep.subr.bf16.mxu0 0
        %2438 = vmatpush1.bf16.msra.mxu0 %v2414
        %2439 = vmatprep.subr.bf16.mxu0 0
        %2440 = vmatpush1.bf16.msra.mxu0 0
        %2441 = vmatprep.subr.bf16.mxu0 0
        %2442 = vmatpush1.bf16.msra.mxu0 0
        %2443 = vmatprep.subr.bf16.mxu0 0
        %2444 = vmatpush1.bf16.msra.mxu0 0
        %2445 = vmatprep.subr.bf16.mxu0 0
        %2446 = vmatpush1.bf16.msra.mxu0 0
        %2447 = vmatprep.subr.bf16.mxu0 0
        %2448 = vmatpush1.bf16.msra.mxu0 0
        %2449 = vmatprep.subr.bf16.mxu0 0
        %2450 = vmatpush1.bf16.msra.mxu0 0
        %2451 = vmatprep.subr.bf16.mxu0 0
        %2452 = vmatpush1.bf16.msra.mxu0 0
        %2453 = vmatprep.subr.bf16.mxu0 0
        %2454 = vmatpush1.bf16.msra.mxu0 0
        %2455 = vmatprep.mubr.bf16.mxu0 0
        %2456 = vmatmul.mubr.bf16.gmra.mrb[0].mxu0 %v2357
        %v2457 = vpop.f32.mrb[0].mxu0
        %v2458 = vadd.f32 0.0, %v2457
        %v2459 = vpop.f32.mrb[0].mxu0
        %v2460 = vpop.f32.mrb[0].mxu0
        %v2461 = vadd.f32 0.0, %v2460
        %v2462 = vpop.f32.mrb[0].mxu0
        %2463 = vmatprep.mubr.bf16.mxu0 0
        %2464 = vmatmul.mubr.bf16.gmra.mrb[0].mxu0 %v2358
        %v2465 = vpop.f32.mrb[0].mxu0
        %v2466 = vadd.f32 0.0, %v2465
        %v2467 = vpop.f32.mrb[0].mxu0
        %v2468 = vpop.f32.mrb[0].mxu0
        %v2469 = vpop.f32.mrb[0].mxu0
        %2470 = vdwg.mxu0
        %v2471 = vadd.f32 %v2189, %v2458
        %v2472 = vadd.f32 %v2190, %v2461
        %v2473 = vadd.f32 %v2191, %v2466
        %v2474 = vld [vmem:[%s879] sm:$0x1]
        %v2476 = vlaneseq
        %v2477 = vshrl.u32 %v2476, 7
        %v2478 = vsub.s32 0, %v2477
        %v2479 = vrot.slane %v2474, %v2478
        %v2481 = vadd.f32 %v2471, %v2479
        %v2482 = vadd.f32 %v2472, %v2479
        %v2483 = vadd.f32 %v2473, %v2479
        %2484 = vst.msk [vmem:[#allocation2] sm:$0xff] %vm1005, %v2481
        %2485 = vst.msk [vmem:[#allocation2 + $0x8] sm:$0xff] %vm1005, %v2482
        %2486 = vst.msk [vmem:[#allocation2 + $0x10] sm:$0xff] %vm1005, %v2483
        %p2487 = scmp.eq.s32.totalorder %s40, 1
        // Predicated region
        $region153: #{dtrocr_forward.3} parent=83 // pred_check
          %p2488 = pneg %p2487
        $region154: #{dtrocr_forward.3} parent=83 // pred_check_branch
          %2490 = sbr.rel (%p2488) target = $region156
        $region155: #{dtrocr_forward.3} parent=83 // pred_region
          %v2491 = vld [vmem:[#allocation23] sm:$0x1]
          %v2492 = vld [vmem:[#allocation24] sm:$0x1]
          %v2493 = vsel %vm1005, %v2481, 0.0
          %2494 = vadd.xlane.f32.xlu0 %v2493
          %v2495 = vpop.xlane.xlu0 %2494
          %v2496 = vsel %vm1005, %v2482, 0.0
          %2497 = vadd.xlane.f32.xlu0 %v2496
          %v2498 = vpop.xlane.xlu0 %2497
          %v2499 = vsel %vm1005, %v2483, 0.0
          %2500 = vadd.xlane.f32.xlu0 %v2499
          %v2501 = vpop.xlane.xlu0 %2500
          %v2502 = vmul.f32 %v2495, %v1015
          %v2503 = vmul.f32 %v2498, %v1015
          %v2504 = vmul.f32 %v2501, %v1015
          %v2505 = vsub.f32 %v2481, %v2502
          %v2506 = vsub.f32 %v2482, %v2503
          %v2507 = vsub.f32 %v2483, %v2504
          %v2508 = vmul.f32 %v2505, %v2505
          %v2509 = vmul.f32 %v2506, %v2506
          %v2510 = vmul.f32 %v2507, %v2507
          %v2511 = vsel %vm1005, %v2508, 0.0
          %2512 = vadd.xlane.f32.xlu0 %v2511
          %v2513 = vpop.xlane.xlu0 %2512
          %v2514 = vsel %vm1005, %v2509, 0.0
          %2515 = vadd.xlane.f32.xlu0 %v2514
          %v2516 = vpop.xlane.xlu0 %2515
          %v2517 = vsel %vm1005, %v2510, 0.0
          %2518 = vadd.xlane.f32.xlu0 %v2517
          %v2519 = vpop.xlane.xlu0 %2518
          %v2520 = vmul.f32 %v2513, %v1015
          %v2521 = vmul.f32 %v2516, %v1015
          %v2522 = vmul.f32 %v2519, %v1015
          %v2523 = vadd.f32 %v2520, 1e-05
          %v2524 = vadd.f32 %v2521, 1e-05
          %v2525 = vadd.f32 %v2522, 1e-05
          %v2526 = vrsqrt.pop %v2523
          %v2527 = vrsqrt.pop %v2524
          %v2528 = vrsqrt.pop %v2525
          %v2529 = vmul.f32 %v2505, %v2526
          %v2530 = vmul.f32 %v2506, %v2527
          %v2531 = vmul.f32 %v2507, %v2528
          %v2533 = vlaneseq
          %v2534 = vshrl.u32 %v2533, 7
          %v2535 = vsub.s32 0, %v2534
          %v2536 = vrot.slane %v2491, %v2535
          %v2538 = vmul.f32 %v2529, %v2536
          %v2539 = vmul.f32 %v2530, %v2536
          %v2540 = vmul.f32 %v2531, %v2536
          %v2542 = vlaneseq
          %v2543 = vshrl.u32 %v2542, 7
          %v2544 = vsub.s32 0, %v2543
          %v2545 = vrot.slane %v2492, %v2544
          %v2547 = vadd.f32 %v2538, %v2545
          %v2548 = vadd.f32 %v2539, %v2545
          %v2549 = vadd.f32 %v2540, %v2545
          %2550 = vst.msk [vmem:[%s987] sm:$0xff] %vm1005, %v2547
          %2551 = vst.msk [vmem:[%s987 + $0x8] sm:$0xff] %vm1005, %v2548
          %2552 = vst.msk [vmem:[%s987 + $0x10] sm:$0xff] %vm1005, %v2549
        $region156: #{dtrocr_forward.3} parent=83 // pred_fallthru
          _
        %s2553 = sand.u32 %s456, 1
        %s2554 = scalar_lea.sflag [#allocation8], %s2553
        %s2555 = sand.u32 %s456, 1
        %s2556 = smul.addr %s2555, 24
        %s2557 = scalar_lea.vmem [#allocation26], %s2556
        // Predicated region
        $region157: #{dtrocr_forward.3} parent=83 // pred_check
          %p2558 = pneg %p466
        $region158: #{dtrocr_forward.3} parent=83 // pred_check_branch
          %2560 = sbr.rel (%p2558) target = $region160
        $region159: #{dtrocr_forward.3} parent=83 // pred_region
          %s2562 = ssub.s32 384, 384
          %2563 = vsyncadd %s2554, %s2562
          %s2564 = smul.addr %s39, 3
          %s2565 = smul.addr %s2564, 128
          %s2566 = scalar_lea.hbm %s16, %s2565
          %s2567 = sshll.u32 %s2557, 4
          %s2568 = int_to_ptr.vmem [resolvable:$true] %s2567
          %2573 = dma.vmem_to_hbm [thread:$0]  %s2568, 384, %s2566, %s2554, 128, 128, 8
        $region160: #{dtrocr_forward.3} parent=83 // pred_fallthru
          _
      $region84: #{dtrocr_forward.3} parent=5 // pred_fallthru
        _
      %p2574 = scmp.le.s32.totalorder 2, %s30
      // Predicated region
      $region161: #{dtrocr_forward.3} parent=5 // pred_check
        %p2575 = pneg %p2574
      $region162: #{dtrocr_forward.3} parent=5 // pred_check_branch
        %2577 = sbr.rel (%p2575) target = $region164
      $region163: #{dtrocr_forward.3} parent=5 // pred_region
        %s2578 = ssub.s32 %s30, 2
        // Predicated region
        $region165: #{dtrocr_forward.3} parent=163 // pred_check
          %p2579 = pneg %p472
        $region166: #{dtrocr_forward.3} parent=163 // pred_check_branch
          %2581 = sbr.rel (%p2579) target = $region168
        $region167: #{dtrocr_forward.3} parent=163 // pred_region
          %s2582 = sand.u32 %s457, 1
          %s2583 = scalar_lea.sflag [#allocation8], %s2582
          %s2584 = sand.u32 %s457, 1
          %s2585 = smul.addr %s2584, 24
          %s2586 = scalar_lea.vmem [#allocation26], %s2585
          %2587 = dma.done %s2583, 384
        $region168: #{dtrocr_forward.3} parent=163 // pred_fallthru
          _
      $region164: #{dtrocr_forward.3} parent=5 // pred_fallthru
        _
    $region6: #{dtrocr_forward.3} parent=1 // loop_footer
      %s34 = sadd.s32 1, %s30
    $region7: #{dtrocr_forward.3} parent=1 // loop_footer_branch
      %29 = sbr.rel target = $region3
    $region8: #{dtrocr_forward.3} parent=1 // loop_exit
      _
    %2588 = vsyncpa [#allocation7], 1
    %s2589 = scalar_lea.sflag [#allocation7], 1
    %2590 = vsyncpa %s2589, 1
    %2591 = vsyncpa [#allocation10], 1
    %2592 = vsyncpa [#allocation25], 1
    %2593 = vsyncpa [#allocation8], 1
    %s2594 = scalar_lea.sflag [#allocation8], 1
    %2595 = vsyncpa %s2594, 1

</llo_original>
